<compile_context>
chip_gen: v6e
topology: v6e:2x2x1
jax: 0.10.0
libtpu: 0.0.40
codegen_flags: <defaults>
</compile_context>

<pallas_src>
import jax
import jax.numpy as jnp
from jax.experimental import pallas as pl
from jax.experimental.pallas import tpu as pltpu


# -----------------------------------------------------------------------------
# Hyper-parameters (small, consistent with the module's forward)
# -----------------------------------------------------------------------------
B = 2            # batch size
SEQ_PER_IMG = 1  # captions per video (so caption batch == B)
L = 8            # seq_length
V = 20           # vocab_size
V1 = V + 1       # vocab_size + 1 (embedding_vocab_plus_1 / logit output)
E = 32           # input_encoding_size
H = 32           # rnn_size
A = 32           # att_hid_size
R = 8            # number of proposals (ROIs)
G = 4            # max number of GT boxes
T = 6            # number of (temporal) conv feature slots
DV = 10          # detection (visual word) vocab size
SEG_DIM = 48     # raw segment feature dim
REG_DIM = 64     # raw region feature dim
MIN_VALUE = -100000000.0

VMEM_SPEC = pl.BlockSpec(memory_space=pltpu.MemorySpace.VMEM)


# -----------------------------------------------------------------------------
# In-kernel helpers (traced inside Pallas kernel bodies)
# -----------------------------------------------------------------------------
def _lstm_step(x_parts, h_prev, c_prev, w_ref, b_ref):
    # single fused gate matmul: [x_parts..., h_prev] @ [Wih; Whh]  (K = 128 here)
    x = jnp.concatenate(list(x_parts) + [h_prev], axis=-1)
    gates = jnp.dot(x, w_ref[...], preferred_element_type=jnp.float32) + b_ref[...]
    hdim = h_prev.shape[-1]
    i = jax.nn.sigmoid(gates[:, 0 * hdim:1 * hdim])
    f = jax.nn.sigmoid(gates[:, 1 * hdim:2 * hdim])
    g = jnp.tanh(gates[:, 2 * hdim:3 * hdim])
    o = jax.nn.sigmoid(gates[:, 3 * hdim:4 * hdim])
    c_new = f * c_prev + i * g
    return o * jnp.tanh(c_new), c_new


def _attend_scores(h, p_feats, w_ref, b_ref, v_ref):
    # additive (tanh-MLP) attention scores: (N, K)
    att_h = jnp.dot(h, w_ref[...], preferred_element_type=jnp.float32) + b_ref[...]
    dot = jnp.tanh(p_feats + att_h[:, None, :])
    return jnp.sum(dot * v_ref[...][:, None, :], axis=-1)


def _softmax_pool(scores, feats):
    m = jnp.max(scores, axis=-1, keepdims=True)
    e = jnp.exp(scores - m)
    alpha = e / jnp.sum(e, axis=-1, keepdims=True)
    return jnp.sum(alpha[:, :, None] * feats, axis=1)


def _masked_softmax_pool(scores, mask_f, feats):
    masked = jnp.where(mask_f > 0.5, MIN_VALUE, scores)
    return masked, _softmax_pool(masked, feats)


def _log_softmax_logits(h, w_ref, b_ref):
    logits = jnp.dot(h, w_ref[...], preferred_element_type=jnp.float32) + b_ref[...]
    m = jnp.max(logits, axis=-1, keepdims=True)
    z = logits - m
    return z - jnp.log(jnp.sum(jnp.exp(z), axis=-1, keepdims=True))


# -----------------------------------------------------------------------------
# Fused sequence kernels
# -----------------------------------------------------------------------------
def _decoder_seq_kernel(emb_ref, frm_ref,
                        fc_ref, conv_ref, pconv_ref, pool_ref, ppool_ref,
                        w_att_ref, b_att_ref, w_lang_ref, b_lang_ref,
                        wc_ref, bc_ref, vc_ref, wp_ref, bp_ref, vp_ref,
                        w_logit_ref, b_logit_ref,
                        logp_ref, frm_out_ref,
                        h_att, c_att, h_lang, c_lang):
    t = pl.program_id(0)

    @pl.when(t == 0)
    def _():
        h_att[...] = jnp.zeros_like(h_att)
        c_att[...] = jnp.zeros_like(c_att)
        h_lang[...] = jnp.zeros_like(h_lang)
        c_lang[...] = jnp.zeros_like(c_lang)

    word_emb = emb_ref[0]                       # (N, E)
    fc = fc_ref[...]                            # (N, H)

    # attention LSTM
    h_att_n, c_att_n = _lstm_step([h_lang[...], fc, word_emb],
                                  h_att[...], c_att[...], w_att_ref, b_att_ref)

    # temporal (conv) attention (no mask)
    conv_scores = _attend_scores(h_att_n, pconv_ref[...], wc_ref, bc_ref, vc_ref)
    att_conv = _softmax_pool(conv_scores, conv_ref[...])

    # ROI attention scores computed once, frame mask applied for the language
    # LSTM and the att2 weights (the pnt-only variant is unused downstream).
    pool_scores = _attend_scores(h_att_n, ppool_ref[...], wp_ref, bp_ref, vp_ref)
    frm_masked, weighted_pool = _masked_softmax_pool(pool_scores, frm_ref[0],
                                                     pool_ref[...])

    # language LSTM
    h_lang_n, c_lang_n = _lstm_step([att_conv, weighted_pool, h_att_n],
                                    h_lang[...], c_lang[...], w_lang_ref, b_lang_ref)

    # fused logit + log_softmax
    logp_ref[0] = _log_softmax_logits(h_lang_n, w_logit_ref, b_logit_ref)
    frm_out_ref[0] = frm_masked

    h_att[...] = h_att_n
    c_att[...] = c_att_n
    h_lang[...] = h_lang_n
    c_lang[...] = c_lang_n


def _localize_recon_seq_kernel(pemb_ref, gemb_ref, frm_ref,
                               fc_ref, conv_ref, pconv_ref, pool_ref, ppool_ref,
                               qw_ref, qb_ref,
                               lwc_ref, lbc_ref, lvc_ref, lwp_ref, lbp_ref, lvp_ref,
                               w_att_ref, b_att_ref, w_lang_ref, b_lang_ref,
                               w_logit_ref, b_logit_ref,
                               logp_ref,
                               h_att, c_att, h_lang, c_lang):
    t = pl.program_id(0)

    @pl.when(t == 0)
    def _():
        h_att[...] = jnp.zeros_like(h_att)
        c_att[...] = jnp.zeros_like(c_att)
        h_lang[...] = jnp.zeros_like(h_lang)
        c_lang[...] = jnp.zeros_like(c_lang)

    # localizer (no recurrence), driven by the predicted word
    q = jax.nn.relu(jnp.dot(pemb_ref[0], qw_ref[...],
                            preferred_element_type=jnp.float32) + qb_ref[...])
    conv_scores = _attend_scores(q, pconv_ref[...], lwc_ref, lbc_ref, lvc_ref)
    loc_conv_feat = _softmax_pool(conv_scores, conv_ref[...])
    pool_scores = _attend_scores(q, ppool_ref[...], lwp_ref, lbp_ref, lvp_ref)
    _, loc_weighted_feat = _masked_softmax_pool(pool_scores, frm_ref[0], pool_ref[...])

    # consistent decoder (shared att/lang LSTM weights), driven by the GT word
    word_emb = gemb_ref[0]
    h_att_n, c_att_n = _lstm_step([h_lang[...], fc_ref[...], word_emb],
                                  h_att[...], c_att[...], w_att_ref, b_att_ref)
    h_lang_n, c_lang_n = _lstm_step([loc_conv_feat, loc_weighted_feat, h_att_n],
                                    h_lang[...], c_lang[...], w_lang_ref, b_lang_ref)

    logp_ref[0] = _log_softmax_logits(h_lang_n, w_logit_ref, b_logit_ref)

    h_att[...] = h_att_n
    c_att[...] = c_att_n
    h_lang[...] = h_lang_n
    c_lang[...] = c_lang_n


def _grounder_kernel(xt_ref, att_ref, bias_ref, mask_ref, out_ref):
    # xt: (N, S, E), att: (N, R, E), bias/mask/out: (N, S, R); one batched matmul.
    dot = jnp.einsum('nse,nre->nsr', xt_ref[...], att_ref[...],
                     preferred_element_type=jnp.float32) + bias_ref[...]
    # mask applied AFTER the bias add (matches torch masked_fill_ ordering)
    out_ref[...] = jnp.where(mask_ref[...] > 0.5, MIN_VALUE, dot)


# -----------------------------------------------------------------------------
# pallas_call wrappers
# -----------------------------------------------------------------------------
def _step_spec(shape):
    nd = len(shape)
    return pl.BlockSpec((1,) + tuple(shape[1:]),
                        lambda t: (t,) + (0,) * (nd - 1))


def _resident_spec(shape):
    nd = len(shape)
    return pl.BlockSpec(tuple(shape), lambda t: (0,) * nd)


def fused_decoder_sequence(emb_seq, frm_seq, fc, conv, pconv, pool, ppool,
                           w_att, b_att, w_lang, b_lang,
                           wc, bc, vc, wp, bp, vp, w_logit, b_logit):
    steps, n, _ = emb_seq.shape
    r = frm_seq.shape[2]
    v1 = w_logit.shape[1]
    hdim = fc.shape[1]
    residents = (fc, conv, pconv, pool, ppool, w_att, b_att, w_lang, b_lang,
                 wc, bc, vc, wp, bp, vp, w_logit, b_logit)
    in_specs = [_step_spec(emb_seq.shape), _step_spec(frm_seq.shape)]
    in_specs += [_resident_spec(x.shape) for x in residents]
    return pl.pallas_call(
        _decoder_seq_kernel,
        out_shape=(jax.ShapeDtypeStruct((steps, n, v1), jnp.float32),
                   jax.ShapeDtypeStruct((steps, n, r), jnp.float32)),
        grid=(steps,),
        in_specs=in_specs,
        out_specs=(pl.BlockSpec((1, n, v1), lambda t: (t, 0, 0)),
                   pl.BlockSpec((1, n, r), lambda t: (t, 0, 0))),
        scratch_shapes=[pltpu.VMEM((n, hdim), jnp.float32) for _ in range(4)],
        compiler_params=pltpu.CompilerParams(dimension_semantics=("arbitrary",)),
    )(emb_seq, frm_seq, *residents)


def fused_localize_reconstruct_sequence(pred_emb_seq, gt_emb_seq, frm_seq,
                                        fc, conv, pconv, pool, ppool,
                                        qw, qb, lwc, lbc, lvc, lwp, lbp, lvp,
                                        w_att, b_att, w_lang, b_lang,
                                        w_logit, b_logit):
    steps, n, _ = pred_emb_seq.shape
    v1 = w_logit.shape[1]
    hdim = fc.shape[1]
    residents = (fc, conv, pconv, pool, ppool, qw, qb,
                 lwc, lbc, lvc, lwp, lbp, lvp,
                 w_att, b_att, w_lang, b_lang, w_logit, b_logit)
    in_specs = [_step_spec(pred_emb_seq.shape), _step_spec(gt_emb_seq.shape),
                _step_spec(frm_seq.shape)]
    in_specs += [_resident_spec(x.shape) for x in residents]
    return pl.pallas_call(
        _localize_recon_seq_kernel,
        out_shape=jax.ShapeDtypeStruct((steps, n, v1), jnp.float32),
        grid=(steps,),
        in_specs=in_specs,
        out_specs=pl.BlockSpec((1, n, v1), lambda t: (t, 0, 0)),
        scratch_shapes=[pltpu.VMEM((n, hdim), jnp.float32) for _ in range(4)],
        compiler_params=pltpu.CompilerParams(dimension_semantics=("arbitrary",)),
    )(pred_emb_seq, gt_emb_seq, frm_seq, *residents)


def pallas_grounder(xt, att_feats, mask_f, bias):
    n, s, _ = xt.shape
    r = att_feats.shape[1]
    return pl.pallas_call(
        _grounder_kernel,
        out_shape=jax.ShapeDtypeStruct((n, s, r), jnp.float32),
        in_specs=[VMEM_SPEC] * 4,
        out_specs=VMEM_SPEC,
    )(xt, att_feats, bias, mask_f)


# -----------------------------------------------------------------------------
# Parameter initialization (deterministic, synthetic)
# -----------------------------------------------------------------------------
def init_params(key):
    ks = iter(jax.random.split(key, 40))

    def p(shape, scale=0.02):
        return scale * jax.random.normal(next(ks), shape, jnp.float32)

    params = {
        "embed_table": p((V1, E)),
        "logit_w": p((H, V1)),
        "logit_b": p((1, V1)),
        "vis_embed_table": p((DV + 1, E)),
        "att_lstm": {"wih": p((2 * H + E, 4 * H)), "whh": p((H, 4 * H)), "b": p((1, 4 * H))},
        "lang_lstm": {"wih": p((3 * H, 4 * H)), "whh": p((H, 4 * H)), "b": p((1, 4 * H))},
        "attn_conv": {"w": p((H, A)), "b": p((1, A)), "v": p((1, A))},
        "attn_pool": {"w": p((H, A)), "b": p((1, A)), "v": p((1, A))},
        "loc_q_w": p((E, H)),
        "loc_q_b": p((1, H)),
        "loc_attn_conv": {"w": p((H, A)), "b": p((1, A)), "v": p((1, A))},
        "loc_attn_pool": {"w": p((H, A)), "b": p((1, A)), "v": p((1, A))},
        "ext_fc": p((SEG_DIM, H)),
        "ext_conv": p((SEG_DIM, H)),
        "ext_pconv": p((H, A)),
        "ext_pool": p((REG_DIM, H)),
        "ext_ppool": p((H, A)),
        "ext_g": p((REG_DIM, E)),
    }
    return params


# -----------------------------------------------------------------------------
# Sub-module glue
# -----------------------------------------------------------------------------
def roi_feat_extractor(params, segs_feat, region_feats, pnt_mask):
    # TODO(synk): RegionalFeatureExtractorGVD source is unavailable; shape-faithful
    # deterministic projections stand in for the real conv/ROI feature pipeline.
    conv_feats = segs_feat @ params["ext_conv"]                              # (B, T, H)
    fc_feats = 0.5 * (jnp.mean(conv_feats, axis=1)
                      + jnp.mean(segs_feat, axis=1) @ params["ext_fc"])      # (B, H)
    p_conv_feats = conv_feats @ params["ext_pconv"]                          # (B, T, A)
    pool_feats = region_feats @ params["ext_pool"]                           # (B, R, H)
    p_pool_feats = pool_feats @ params["ext_ppool"]                          # (B, R, A)
    g_pool_feats = region_feats @ params["ext_g"]                            # (B, R, E)
    cls_pred = jnp.zeros((segs_feat.shape[0], region_feats.shape[1]), jnp.float32)
    cls_loss = jnp.zeros((), jnp.float32)
    return (fc_feats, conv_feats, p_conv_feats, pool_feats, p_pool_feats,
            g_pool_feats, pnt_mask, None, cls_pred, cls_loss)


def bbox_overlaps(proposals, gt_boxes, exclude_mask):
    p = proposals[..., :4]
    g = gt_boxes[..., :4]
    x1 = jnp.maximum(p[:, :, None, 0], g[:, None, :, 0])
    y1 = jnp.maximum(p[:, :, None, 1], g[:, None, :, 1])
    x2 = jnp.minimum(p[:, :, None, 2], g[:, None, :, 2])
    y2 = jnp.minimum(p[:, :, None, 3], g[:, None, :, 3])
    iw = jnp.clip(x2 - x1 + 1.0, 0.0)
    ih = jnp.clip(y2 - y1 + 1.0, 0.0)
    inter = iw * ih
    area_p = (p[:, :, 2] - p[:, :, 0] + 1.0) * (p[:, :, 3] - p[:, :, 1] + 1.0)
    area_g = (g[:, :, 2] - g[:, :, 0] + 1.0) * (g[:, :, 3] - g[:, :, 1] + 1.0)
    union = area_p[:, :, None] + area_g[:, None, :] - inter
    iou = inter / jnp.maximum(union, 1e-8)
    return jnp.where(exclude_mask, 0.0, iou)


# -----------------------------------------------------------------------------
# Full forward (mirrors _forward_3_loops)
# -----------------------------------------------------------------------------
def _forward_impl(params, segs_feat, input_seq, gt_caption, num, proposals, gt_boxes,
                  mask_boxes, region_feats, frm_mask, sample_idx, pnt_mask):
    batch_size = segs_feat.shape[0]

    gt_cap = gt_caption[:, :SEQ_PER_IMG, :].reshape(-1, gt_caption.shape[2])
    gt_cap = jnp.concatenate([jnp.zeros((gt_cap.shape[0], 1), gt_cap.dtype), gt_cap], axis=1)
    in_seq = input_seq.reshape(-1, input_seq.shape[2], input_seq.shape[3])

    overlaps = bbox_overlaps(proposals, gt_boxes, frm_mask | pnt_mask[:, 1:, None])

    (fc_feats, conv_feats, p_conv_feats, pool_feats, p_pool_feats,
     g_pool_feats, pnt_mask_out, _, cls_pred, cls_loss) = roi_feat_extractor(
        params, segs_feat, region_feats, pnt_mask)

    # ---- per-step masks & ROI labels, vectorized over all L steps ----------
    # TODO(synk): utils.bbox_target unavailable; ROI labels via IoU >= 0.5 to any
    # un-masked GT box, gated by visual-word positions.
    mb = mask_boxes[:, 0, :, 1:L + 1]                                          # (B, G, L)
    frm_on_prop = jnp.sum(~(mb[:, None, :, :] | frm_mask[:, :, :, None]), axis=2) <= 0
    frm_on_prop = jnp.transpose(frm_on_prop, (2, 0, 1))                        # (L, B, R)
    frm_full = jnp.concatenate(
        [jnp.zeros((L, batch_size, 1), bool), frm_on_prop], axis=2) | pnt_mask_out[None]
    frm_seq_f = frm_full[:, :, 1:].astype(jnp.float32)                         # (L, N, R)

    is_vis = in_seq[:, 1:L + 1, 0] > V                                         # (N, L)
    active_gt = ~mb                                                            # (B, G, L)
    hits = jnp.any((overlaps[:, :, :, None] >= 0.5) & active_gt[:, None, :, :], axis=2)
    roi_labels = (jnp.transpose(hits, (0, 2, 1)).astype(jnp.float32)
                  * is_vis[:, :, None].astype(jnp.float32))                    # (N, L, R)

    # ---- embeddings: one gather per loop (not one per step) -----------------
    gt_words = jnp.transpose(gt_cap[:, :L])                                    # (L, N)
    gt_emb_seq = jax.nn.relu(params["embed_table"][gt_words])                  # (L, N, E)

    # fused LSTM gate weights: one [x, h] @ [Wih; Whh] matmul per LSTM (K=128)
    w_att = jnp.concatenate([params["att_lstm"]["wih"], params["att_lstm"]["whh"]], axis=0)
    w_lang = jnp.concatenate([params["lang_lstm"]["wih"], params["lang_lstm"]["whh"]], axis=0)

    # ---- loop 1: fused decoder sequence kernel ------------------------------
    lang_logp_seq, att2_seq = fused_decoder_sequence(
        gt_emb_seq, frm_seq_f, fc_feats, conv_feats, p_conv_feats, pool_feats, p_pool_feats,
        w_att, params["att_lstm"]["b"], w_lang, params["lang_lstm"]["b"],
        params["attn_conv"]["w"], params["attn_conv"]["b"], params["attn_conv"]["v"],
        params["attn_pool"]["w"], params["attn_pool"]["b"], params["attn_pool"]["v"],
        params["logit_w"], params["logit_b"])

    lang_outputs = jnp.transpose(lang_logp_seq, (1, 0, 2))                     # (N, L, V1)
    att2_weights = jnp.transpose(att2_seq, (1, 0, 2))                          # (N, L, R)

    # ---- _grounder: one batched matmul + bias + masked_fill kernel ----------
    xt_clamp = jnp.clip(in_seq[:, 1:L + 1, 0] - V, 0)                          # (N, L)
    xt_all = params["vis_embed_table"][xt_clamp]                               # (N, L, E)
    ground_mask = jnp.transpose(frm_full[:, :, 1:], (1, 0, 2)).astype(jnp.float32)
    ground_weights = pallas_grounder(xt_all, g_pool_feats, ground_mask, att2_weights)

    # ---- losses (TODO(synk): utils.LMCriterion/LanguageCriterion approximated) ----
    targets = gt_cap[:, 1:L + 1]
    tmask = (targets > 0).astype(jnp.float32)
    tgt_logp = jnp.take_along_axis(lang_outputs, targets[..., None], axis=2)[..., 0]
    lm_loss = -jnp.sum(tgt_logp * tmask) / jnp.maximum(jnp.sum(tmask), 1.0)

    vis_pos = is_vis.astype(jnp.float32)
    has_lab = (jnp.sum(roi_labels, axis=-1) > 0).astype(jnp.float32)
    valid = vis_pos * has_lab

    def attn_loss(weights):
        p = jax.nn.softmax(weights, axis=-1)
        pos = jnp.sum(p * roi_labels, axis=-1)
        return -jnp.sum(jnp.log(pos + 1e-8) * valid) / jnp.maximum(jnp.sum(valid), 1.0)

    att2_loss = attn_loss(att2_weights)
    ground_loss = attn_loss(ground_weights)

    # ---- loops 2+3 fused: localizer on predicted words + consistent decoder ----
    output_seq = jnp.argmax(lang_logp_seq, axis=2)                             # (L, N)
    pred_emb_seq = jax.nn.relu(params["embed_table"][output_seq])              # (L, N, E)

    cons_logp_seq = fused_localize_reconstruct_sequence(
        pred_emb_seq, gt_emb_seq, frm_seq_f,
        fc_feats, conv_feats, p_conv_feats, pool_feats, p_pool_feats,
        params["loc_q_w"], params["loc_q_b"],
        params["loc_attn_conv"]["w"], params["loc_attn_conv"]["b"], params["loc_attn_conv"]["v"],
        params["loc_attn_pool"]["w"], params["loc_attn_pool"]["b"], params["loc_attn_pool"]["v"],
        w_att, params["att_lstm"]["b"], w_lang, params["lang_lstm"]["b"],
        params["logit_w"], params["logit_b"])
    consistent_outputs = jnp.transpose(cons_logp_seq, (1, 0, 2))               # (N, L, V1)

    rec_logp = jnp.take_along_axis(consistent_outputs, targets[..., None], axis=2)[..., 0]
    lm_recon_loss = -jnp.sum(rec_logp * tmask) / jnp.maximum(jnp.sum(tmask), 1.0)

    return (lm_loss[None], att2_loss[None], ground_loss[None],
            cls_loss[None], lm_recon_loss[None])


forward = jax.jit(_forward_impl)


# -----------------------------------------------------------------------------
# Main
# -----------------------------------------------------------------------------
if __name__ == "__main__":
    key = jax.random.PRNGKey(0)
    kp, k1, k2, k3, k4, k5, k6, k7, k8, k9 = jax.random.split(key, 10)

    params = init_params(kp)

    segs_feat = jax.random.normal(k1, (B, T, SEG_DIM), jnp.float32)
    region_feats = jax.random.normal(k2, (B, R, REG_DIM), jnp.float32)

    gt_caption = jax.random.randint(k3, (B, SEQ_PER_IMG, L), 1, V + 1, jnp.int32)
    # input_seq: (B, seq_per_img, L+1, 4); channel 0 may hold visual words (> vocab_size)
    input_seq = jax.random.randint(k4, (B, SEQ_PER_IMG, L + 1, 4), 1, V + DV + 1, jnp.int32)

    # proposals / gt boxes with valid coords
    px1 = jax.random.uniform(k5, (B, R, 2), jnp.float32, 0.0, 50.0)
    proposals = jnp.concatenate(
        [px1, px1 + jax.random.uniform(k6, (B, R, 2), jnp.float32, 10.0, 60.0),
         jnp.zeros((B, R, 2), jnp.float32)], axis=-1)                # (B, R, 6)
    gx1 = jax.random.uniform(k7, (B, G, 2), jnp.float32, 0.0, 50.0)
    gt_boxes = jnp.concatenate(
        [gx1, gx1 + jax.random.uniform(k8, (B, G, 2), jnp.float32, 10.0, 60.0),
         jnp.zeros((B, G, 1), jnp.float32)], axis=-1)                # (B, G, 5)

    mask_boxes = jax.random.bernoulli(k9, 0.3, (B, SEQ_PER_IMG, G, L + 1))   # (B,1,G,L+1) bool
    frm_mask = jax.random.bernoulli(jax.random.PRNGKey(42), 0.2, (B, R, G))  # (B,R,G) bool
    pnt_mask = jnp.concatenate(
        [jnp.zeros((B, 1), bool),
         jax.random.bernoulli(jax.random.PRNGKey(7), 0.2, (B, R))], axis=1)  # (B, R+1)
    num = jnp.tile(jnp.array([[SEQ_PER_IMG, R, G]], jnp.int32), (B, 1))
    sample_idx = jnp.zeros((B, 2), jnp.int32)

    losses = forward(params, segs_feat, input_seq, gt_caption, num, proposals,
                     gt_boxes, mask_boxes, region_feats, frm_mask, sample_idx, pnt_mask)
    losses = jax.block_until_ready(losses)

    for loss in losses:
        assert loss.shape == (1,)
        assert bool(jnp.all(jnp.isfinite(loss)))
    print("KERNEL_OK")
</pallas_src>

<mosaic_0001>
module attributes {stable_mosaic.version = 11 : i64} {
  func.func @_decoder_seq_kernel(%arg0: i32, %arg1: memref<1x2x32xf32, #tpu.memory_space<vmem>>, %arg2: memref<1x2x8xf32, #tpu.memory_space<vmem>>, %arg3: memref<2x32xf32, #tpu.memory_space<vmem>>, %arg4: memref<2x6x32xf32, #tpu.memory_space<vmem>>, %arg5: memref<2x6x32xf32, #tpu.memory_space<vmem>>, %arg6: memref<2x8x32xf32, #tpu.memory_space<vmem>>, %arg7: memref<2x8x32xf32, #tpu.memory_space<vmem>>, %arg8: memref<128x128xf32, #tpu.memory_space<vmem>>, %arg9: memref<1x128xf32, #tpu.memory_space<vmem>>, %arg10: memref<128x128xf32, #tpu.memory_space<vmem>>, %arg11: memref<1x128xf32, #tpu.memory_space<vmem>>, %arg12: memref<32x32xf32, #tpu.memory_space<vmem>>, %arg13: memref<1x32xf32, #tpu.memory_space<vmem>>, %arg14: memref<1x32xf32, #tpu.memory_space<vmem>>, %arg15: memref<32x32xf32, #tpu.memory_space<vmem>>, %arg16: memref<1x32xf32, #tpu.memory_space<vmem>>, %arg17: memref<1x32xf32, #tpu.memory_space<vmem>>, %arg18: memref<32x21xf32, #tpu.memory_space<vmem>>, %arg19: memref<1x21xf32, #tpu.memory_space<vmem>>, %arg20: memref<1x2x21xf32, #tpu.memory_space<vmem>>, %arg21: memref<1x2x8xf32, #tpu.memory_space<vmem>>, %arg22: memref<2x32xf32, #tpu.memory_space<vmem>>, %arg23: memref<2x32xf32, #tpu.memory_space<vmem>>, %arg24: memref<2x32xf32, #tpu.memory_space<vmem>>, %arg25: memref<2x32xf32, #tpu.memory_space<vmem>>) attributes {dimension_semantics = [#tpu.dimension_semantics<arbitrary>], iteration_bounds = array<i64: 8>, scalar_prefetch = 0 : i64, scratch_operands = 4 : i64, tpu.core_type = #tpu.core_type<tc>, window_params = [{transform_indices = @transform_0, window_bounds = array<i64: 1, 2, 32>}, {transform_indices = @transform_1, window_bounds = array<i64: 1, 2, 8>}, {pipeline_mode = #tpu.pipeline_mode<synchronous>, transform_indices = @transform_2, window_bounds = array<i64: 2, 32>}, {pipeline_mode = #tpu.pipeline_mode<synchronous>, transform_indices = @transform_3, window_bounds = array<i64: 2, 6, 32>}, {pipeline_mode = #tpu.pipeline_mode<synchronous>, transform_indices = @transform_4, window_bounds = array<i64: 2, 6, 32>}, {pipeline_mode = #tpu.pipeline_mode<synchronous>, transform_indices = @transform_5, window_bounds = array<i64: 2, 8, 32>}, {pipeline_mode = #tpu.pipeline_mode<synchronous>, transform_indices = @transform_6, window_bounds = array<i64: 2, 8, 32>}, {pipeline_mode = #tpu.pipeline_mode<synchronous>, transform_indices = @transform_7, window_bounds = array<i64: 128, 128>}, {pipeline_mode = #tpu.pipeline_mode<synchronous>, transform_indices = @transform_8, window_bounds = array<i64: 1, 128>}, {pipeline_mode = #tpu.pipeline_mode<synchronous>, transform_indices = @transform_9, window_bounds = array<i64: 128, 128>}, {pipeline_mode = #tpu.pipeline_mode<synchronous>, transform_indices = @transform_10, window_bounds = array<i64: 1, 128>}, {pipeline_mode = #tpu.pipeline_mode<synchronous>, transform_indices = @transform_11, window_bounds = array<i64: 32, 32>}, {pipeline_mode = #tpu.pipeline_mode<synchronous>, transform_indices = @transform_12, window_bounds = array<i64: 1, 32>}, {pipeline_mode = #tpu.pipeline_mode<synchronous>, transform_indices = @transform_13, window_bounds = array<i64: 1, 32>}, {pipeline_mode = #tpu.pipeline_mode<synchronous>, transform_indices = @transform_14, window_bounds = array<i64: 32, 32>}, {pipeline_mode = #tpu.pipeline_mode<synchronous>, transform_indices = @transform_15, window_bounds = array<i64: 1, 32>}, {pipeline_mode = #tpu.pipeline_mode<synchronous>, transform_indices = @transform_16, window_bounds = array<i64: 1, 32>}, {pipeline_mode = #tpu.pipeline_mode<synchronous>, transform_indices = @transform_17, window_bounds = array<i64: 32, 21>}, {pipeline_mode = #tpu.pipeline_mode<synchronous>, transform_indices = @transform_18, window_bounds = array<i64: 1, 21>}, {transform_indices = @transform_19, window_bounds = array<i64: 1, 2, 21>}, {transform_indices = @transform_20, window_bounds = array<i64: 1, 2, 8>}]} {
    %c0_i32 = arith.constant 0 : i32
    %0 = arith.cmpi eq, %arg0, %c0_i32 : i32
    %1 = arith.extui %0 : i1 to i32
    %c0_i32_0 = arith.constant 0 : i32
    %2 = arith.cmpi ne, %1, %c0_i32_0 : i32
    scf.if %2 {
      %cst_90 = arith.constant 0.000000e+00 : f32
      %162 = vector.broadcast %cst_90 : f32 to vector<2x32xf32>
      %c0_91 = arith.constant 0 : index
      %c0_92 = arith.constant 0 : index
      %163 = vector.load %arg22[%c0_91, %c0_92] : memref<2x32xf32, #tpu.memory_space<vmem>>, vector<2x32xf32>
      tpu.vector_store %arg22[%c0_91, %c0_92], %162 {strides = array<i32>} : memref<2x32xf32, #tpu.memory_space<vmem>>, vector<2x32xf32>,
      %cst_93 = arith.constant 0.000000e+00 : f32
      %164 = vector.broadcast %cst_93 : f32 to vector<2x32xf32>
      %c0_94 = arith.constant 0 : index
      %c0_95 = arith.constant 0 : index
      %165 = vector.load %arg23[%c0_94, %c0_95] : memref<2x32xf32, #tpu.memory_space<vmem>>, vector<2x32xf32>
      tpu.vector_store %arg23[%c0_94, %c0_95], %164 {strides = array<i32>} : memref<2x32xf32, #tpu.memory_space<vmem>>, vector<2x32xf32>,
      %cst_96 = arith.constant 0.000000e+00 : f32
      %166 = vector.broadcast %cst_96 : f32 to vector<2x32xf32>
      %c0_97 = arith.constant 0 : index
      %c0_98 = arith.constant 0 : index
      %167 = vector.load %arg24[%c0_97, %c0_98] : memref<2x32xf32, #tpu.memory_space<vmem>>, vector<2x32xf32>
      tpu.vector_store %arg24[%c0_97, %c0_98], %166 {strides = array<i32>} : memref<2x32xf32, #tpu.memory_space<vmem>>, vector<2x32xf32>,
      %cst_99 = arith.constant 0.000000e+00 : f32
      %168 = vector.broadcast %cst_99 : f32 to vector<2x32xf32>
      %c0_100 = arith.constant 0 : index
      %c0_101 = arith.constant 0 : index
      %169 = vector.load %arg25[%c0_100, %c0_101] : memref<2x32xf32, #tpu.memory_space<vmem>>, vector<2x32xf32>
      tpu.vector_store %arg25[%c0_100, %c0_101], %168 {strides = array<i32>} : memref<2x32xf32, #tpu.memory_space<vmem>>, vector<2x32xf32>,
    } else {
    }
    %c0 = arith.constant 0 : index
    %c0_1 = arith.constant 0 : index
    %c0_2 = arith.constant 0 : index
    %3 = vector.load %arg1[%c0, %c0_1, %c0_2] : memref<1x2x32xf32, #tpu.memory_space<vmem>>, vector<1x2x32xf32>
    %4 = vector.shape_cast %3 : vector<1x2x32xf32> to vector<2x32xf32>
    %c0_3 = arith.constant 0 : index
    %c0_4 = arith.constant 0 : index
    %5 = vector.load %arg3[%c0_3, %c0_4] : memref<2x32xf32, #tpu.memory_space<vmem>>, vector<2x32xf32>
    %c0_5 = arith.constant 0 : index
    %c0_6 = arith.constant 0 : index
    %6 = vector.load %arg24[%c0_5, %c0_6] : memref<2x32xf32, #tpu.memory_space<vmem>>, vector<2x32xf32>
    %c0_7 = arith.constant 0 : index
    %c0_8 = arith.constant 0 : index
    %7 = vector.load %arg22[%c0_7, %c0_8] : memref<2x32xf32, #tpu.memory_space<vmem>>, vector<2x32xf32>
    %c0_9 = arith.constant 0 : index
    %c0_10 = arith.constant 0 : index
    %8 = vector.load %arg23[%c0_9, %c0_10] : memref<2x32xf32, #tpu.memory_space<vmem>>, vector<2x32xf32>
    %9 = tpu.concatenate %6, %5, %4, %7 in 1 : vector<2x32xf32>, vector<2x32xf32>, vector<2x32xf32>, vector<2x32xf32> -> vector<2x128xf32>
    %c0_11 = arith.constant 0 : index
    %c0_12 = arith.constant 0 : index
    %10 = vector.load %arg8[%c0_11, %c0_12] : memref<128x128xf32, #tpu.memory_space<vmem>>, vector<128x128xf32>
    %cst = arith.constant dense<0.000000e+00> : vector<2x128xf32>
    %11 = tpu.matmul %9, %10, %cst {dimension_numbers = #tpu.dot_dimension_numbers<[1], [0], [0], [1], [0, 0, 1, 1], [], []>} : vector<2x128xf32>, vector<128x128xf32>, vector<2x128xf32> -> vector<2x128xf32>
    %c0_13 = arith.constant 0 : index
    %c0_14 = arith.constant 0 : index
    %12 = vector.load %arg9[%c0_13, %c0_14] : memref<1x128xf32, #tpu.memory_space<vmem>>, vector<1x128xf32>
    %13 = vector.broadcast %12 : vector<1x128xf32> to vector<2x128xf32>
    %14 = arith.addf %11, %13 : vector<2x128xf32>
    %15 = vector.extract_strided_slice %14 {offsets = [0, 0], sizes = [2, 32], strides = [1, 1]} : vector<2x128xf32> to vector<2x32xf32>
    %16 = arith.negf %15 : vector<2x32xf32>
    %17 = math.exp %16 : vector<2x32xf32>
    %cst_15 = arith.constant 1.000000e+00 : f32
    %18 = vector.broadcast %cst_15 : f32 to vector<2x32xf32>
    %19 = arith.addf %18, %17 : vector<2x32xf32>
    %20 = arith.divf %18, %19 : vector<2x32xf32>
    %21 = vector.extract_strided_slice %14 {offsets = [0, 32], sizes = [2, 32], strides = [1, 1]} : vector<2x128xf32> to vector<2x32xf32>
    %22 = arith.negf %21 : vector<2x32xf32>
    %23 = math.exp %22 : vector<2x32xf32>
    %cst_16 = arith.constant 1.000000e+00 : f32
    %24 = vector.broadcast %cst_16 : f32 to vector<2x32xf32>
    %25 = arith.addf %24, %23 : vector<2x32xf32>
    %26 = arith.divf %24, %25 : vector<2x32xf32>
    %27 = vector.extract_strided_slice %14 {offsets = [0, 64], sizes = [2, 32], strides = [1, 1]} : vector<2x128xf32> to vector<2x32xf32>
    %28 = math.tanh %27 : vector<2x32xf32>
    %29 = vector.extract_strided_slice %14 {offsets = [0, 96], sizes = [2, 32], strides = [1, 1]} : vector<2x128xf32> to vector<2x32xf32>
    %30 = arith.negf %29 : vector<2x32xf32>
    %31 = math.exp %30 : vector<2x32xf32>
    %cst_17 = arith.constant 1.000000e+00 : f32
    %32 = vector.broadcast %cst_17 : f32 to vector<2x32xf32>
    %33 = arith.addf %32, %31 : vector<2x32xf32>
    %34 = arith.divf %32, %33 : vector<2x32xf32>
    %35 = arith.mulf %26, %8 : vector<2x32xf32>
    %36 = arith.mulf %20, %28 : vector<2x32xf32>
    %37 = arith.addf %35, %36 : vector<2x32xf32>
    %38 = math.tanh %37 : vector<2x32xf32>
    %39 = arith.mulf %34, %38 : vector<2x32xf32>
    %c0_18 = arith.constant 0 : index
    %c0_19 = arith.constant 0 : index
    %c0_20 = arith.constant 0 : index
    %40 = vector.load %arg5[%c0_18, %c0_19, %c0_20] : memref<2x6x32xf32, #tpu.memory_space<vmem>>, vector<2x6x32xf32>
    %c0_21 = arith.constant 0 : index
    %c0_22 = arith.constant 0 : index
    %41 = vector.load %arg12[%c0_21, %c0_22] : memref<32x32xf32, #tpu.memory_space<vmem>>, vector<32x32xf32>
    %cst_23 = arith.constant dense<0.000000e+00> : vector<2x32xf32>
    %42 = tpu.matmul %39, %41, %cst_23 {dimension_numbers = #tpu.dot_dimension_numbers<[1], [0], [0], [1], [0, 0, 1, 1], [], []>} : vector<2x32xf32>, vector<32x32xf32>, vector<2x32xf32> -> vector<2x32xf32>
    %c0_24 = arith.constant 0 : index
    %c0_25 = arith.constant 0 : index
    %43 = vector.load %arg13[%c0_24, %c0_25] : memref<1x32xf32, #tpu.memory_space<vmem>>, vector<1x32xf32>
    %44 = vector.broadcast %43 : vector<1x32xf32> to vector<2x32xf32>
    %45 = arith.addf %42, %44 : vector<2x32xf32>
    %46 = vector.shape_cast %45 : vector<2x32xf32> to vector<2x1x32xf32>
    %47 = vector.broadcast %46 : vector<2x1x32xf32> to vector<2x6x32xf32>
    %48 = arith.addf %40, %47 : vector<2x6x32xf32>
    %49 = math.tanh %48 : vector<2x6x32xf32>
    %c0_26 = arith.constant 0 : index
    %c0_27 = arith.constant 0 : index
    %50 = vector.load %arg14[%c0_26, %c0_27] : memref<1x32xf32, #tpu.memory_space<vmem>>, vector<1x32xf32>
    %51 = vector.shape_cast %50 : vector<1x32xf32> to vector<1x1x32xf32>
    %52 = vector.broadcast %51 : vector<1x1x32xf32> to vector<2x6x32xf32>
    %53 = arith.mulf %49, %52 : vector<2x6x32xf32>
    %cst_28 = arith.constant dense<0.000000e+00> : vector<2x6xf32>
    %54 = vector.multi_reduction <add>, %53, %cst_28 [2] : vector<2x6x32xf32> to vector<2x6xf32>
    %c0_29 = arith.constant 0 : index
    %c0_30 = arith.constant 0 : index
    %c0_31 = arith.constant 0 : index
    %55 = vector.load %arg4[%c0_29, %c0_30, %c0_31] : memref<2x6x32xf32, #tpu.memory_space<vmem>>, vector<2x6x32xf32>
    %cst_32 = arith.constant dense<0xFF800000> : vector<2xf32>
    %56 = vector.multi_reduction <maximumf>, %54, %cst_32 [1] : vector<2x6xf32> to vector<2xf32>
    %57 = vector.shape_cast %56 : vector<2xf32> to vector<2x1xf32>
    %58 = vector.broadcast %57 : vector<2x1xf32> to vector<2x6xf32>
    %59 = arith.subf %54, %58 : vector<2x6xf32>
    %60 = math.exp %59 : vector<2x6xf32>
    %cst_33 = arith.constant dense<0.000000e+00> : vector<2xf32>
    %61 = vector.multi_reduction <add>, %60, %cst_33 [1] : vector<2x6xf32> to vector<2xf32>
    %62 = vector.shape_cast %61 : vector<2xf32> to vector<2x1xf32>
    %63 = vector.broadcast %62 : vector<2x1xf32> to vector<2x6xf32>
    %64 = arith.divf %60, %63 : vector<2x6xf32>
    %65 = vector.shape_cast %64 : vector<2x6xf32> to vector<2x6x1xf32>
    %66 = vector.broadcast %65 : vector<2x6x1xf32> to vector<2x6x32xf32>
    %67 = arith.mulf %66, %55 : vector<2x6x32xf32>
    %cst_34 = arith.constant dense<0.000000e+00> : vector<2x32xf32>
    %68 = vector.multi_reduction <add>, %67, %cst_34 [1] : vector<2x6x32xf32> to vector<2x32xf32>
    %c0_35 = arith.constant 0 : index
    %c0_36 = arith.constant 0 : index
    %c0_37 = arith.constant 0 : index
    %69 = vector.load %arg7[%c0_35, %c0_36, %c0_37] : memref<2x8x32xf32, #tpu.memory_space<vmem>>, vector<2x8x32xf32>
    %c0_38 = arith.constant 0 : index
    %c0_39 = arith.constant 0 : index
    %70 = vector.load %arg15[%c0_38, %c0_39] : memref<32x32xf32, #tpu.memory_space<vmem>>, vector<32x32xf32>
    %cst_40 = arith.constant dense<0.000000e+00> : vector<2x32xf32>
    %71 = tpu.matmul %39, %70, %cst_40 {dimension_numbers = #tpu.dot_dimension_numbers<[1], [0], [0], [1], [0, 0, 1, 1], [], []>} : vector<2x32xf32>, vector<32x32xf32>, vector<2x32xf32> -> vector<2x32xf32>
    %c0_41 = arith.constant 0 : index
    %c0_42 = arith.constant 0 : index
    %72 = vector.load %arg16[%c0_41, %c0_42] : memref<1x32xf32, #tpu.memory_space<vmem>>, vector<1x32xf32>
    %73 = vector.broadcast %72 : vector<1x32xf32> to vector<2x32xf32>
    %74 = arith.addf %71, %73 : vector<2x32xf32>
    %75 = vector.shape_cast %74 : vector<2x32xf32> to vector<2x1x32xf32>
    %76 = vector.broadcast %75 : vector<2x1x32xf32> to vector<2x8x32xf32>
    %77 = arith.addf %69, %76 : vector<2x8x32xf32>
    %78 = math.tanh %77 : vector<2x8x32xf32>
    %c0_43 = arith.constant 0 : index
    %c0_44 = arith.constant 0 : index
    %79 = vector.load %arg17[%c0_43, %c0_44] : memref<1x32xf32, #tpu.memory_space<vmem>>, vector<1x32xf32>
    %80 = vector.shape_cast %79 : vector<1x32xf32> to vector<1x1x32xf32>
    %81 = vector.broadcast %80 : vector<1x1x32xf32> to vector<2x8x32xf32>
    %82 = arith.mulf %78, %81 : vector<2x8x32xf32>
    %cst_45 = arith.constant dense<0.000000e+00> : vector<2x8xf32>
    %83 = vector.multi_reduction <add>, %82, %cst_45 [2] : vector<2x8x32xf32> to vector<2x8xf32>
    %c0_46 = arith.constant 0 : index
    %c0_47 = arith.constant 0 : index
    %c0_48 = arith.constant 0 : index
    %84 = vector.load %arg2[%c0_46, %c0_47, %c0_48] : memref<1x2x8xf32, #tpu.memory_space<vmem>>, vector<1x2x8xf32>
    %85 = vector.shape_cast %84 : vector<1x2x8xf32> to vector<2x8xf32>
    %c0_49 = arith.constant 0 : index
    %c0_50 = arith.constant 0 : index
    %c0_51 = arith.constant 0 : index
    %86 = vector.load %arg6[%c0_49, %c0_50, %c0_51] : memref<2x8x32xf32, #tpu.memory_space<vmem>>, vector<2x8x32xf32>
    %cst_52 = arith.constant 5.000000e-01 : f32
    %87 = vector.broadcast %cst_52 : f32 to vector<2x8xf32>
    %88 = arith.cmpf ogt, %85, %87 : vector<2x8xf32>
    %cst_53 = arith.constant -1.000000e+08 : f32
    %89 = vector.broadcast %cst_53 : f32 to vector<2x8xf32>
    %90 = arith.select %88, %89, %83 : vector<2x8xi1>, vector<2x8xf32>
    %cst_54 = arith.constant dense<0xFF800000> : vector<2xf32>
    %91 = vector.multi_reduction <maximumf>, %90, %cst_54 [1] : vector<2x8xf32> to vector<2xf32>
    %92 = vector.shape_cast %91 : vector<2xf32> to vector<2x1xf32>
    %93 = vector.broadcast %92 : vector<2x1xf32> to vector<2x8xf32>
    %94 = arith.subf %90, %93 : vector<2x8xf32>
    %95 = math.exp %94 : vector<2x8xf32>
    %cst_55 = arith.constant dense<0.000000e+00> : vector<2xf32>
    %96 = vector.multi_reduction <add>, %95, %cst_55 [1] : vector<2x8xf32> to vector<2xf32>
    %97 = vector.shape_cast %96 : vector<2xf32> to vector<2x1xf32>
    %98 = vector.broadcast %97 : vector<2x1xf32> to vector<2x8xf32>
    %99 = arith.divf %95, %98 : vector<2x8xf32>
    %100 = vector.shape_cast %99 : vector<2x8xf32> to vector<2x8x1xf32>
    %101 = vector.broadcast %100 : vector<2x8x1xf32> to vector<2x8x32xf32>
    %102 = arith.mulf %101, %86 : vector<2x8x32xf32>
    %cst_56 = arith.constant dense<0.000000e+00> : vector<2x32xf32>
    %103 = vector.multi_reduction <add>, %102, %cst_56 [1] : vector<2x8x32xf32> to vector<2x32xf32>
    %c0_57 = arith.constant 0 : index
    %c0_58 = arith.constant 0 : index
    %104 = vector.load %arg24[%c0_57, %c0_58] : memref<2x32xf32, #tpu.memory_space<vmem>>, vector<2x32xf32>
    %c0_59 = arith.constant 0 : index
    %c0_60 = arith.constant 0 : index
    %105 = vector.load %arg25[%c0_59, %c0_60] : memref<2x32xf32, #tpu.memory_space<vmem>>, vector<2x32xf32>
    %106 = tpu.concatenate %68, %103, %39, %104 in 1 : vector<2x32xf32>, vector<2x32xf32>, vector<2x32xf32>, vector<2x32xf32> -> vector<2x128xf32>
    %c0_61 = arith.constant 0 : index
    %c0_62 = arith.constant 0 : index
    %107 = vector.load %arg10[%c0_61, %c0_62] : memref<128x128xf32, #tpu.memory_space<vmem>>, vector<128x128xf32>
    %cst_63 = arith.constant dense<0.000000e+00> : vector<2x128xf32>
    %108 = tpu.matmul %106, %107, %cst_63 {dimension_numbers = #tpu.dot_dimension_numbers<[1], [0], [0], [1], [0, 0, 1, 1], [], []>} : vector<2x128xf32>, vector<128x128xf32>, vector<2x128xf32> -> vector<2x128xf32>
    %c0_64 = arith.constant 0 : index
    %c0_65 = arith.constant 0 : index
    %109 = vector.load %arg11[%c0_64, %c0_65] : memref<1x128xf32, #tpu.memory_space<vmem>>, vector<1x128xf32>
    %110 = vector.broadcast %109 : vector<1x128xf32> to vector<2x128xf32>
    %111 = arith.addf %108, %110 : vector<2x128xf32>
    %112 = vector.extract_strided_slice %111 {offsets = [0, 0], sizes = [2, 32], strides = [1, 1]} : vector<2x128xf32> to vector<2x32xf32>
    %113 = arith.negf %112 : vector<2x32xf32>
    %114 = math.exp %113 : vector<2x32xf32>
    %cst_66 = arith.constant 1.000000e+00 : f32
    %115 = vector.broadcast %cst_66 : f32 to vector<2x32xf32>
    %116 = arith.addf %115, %114 : vector<2x32xf32>
    %117 = arith.divf %115, %116 : vector<2x32xf32>
    %118 = vector.extract_strided_slice %111 {offsets = [0, 32], sizes = [2, 32], strides = [1, 1]} : vector<2x128xf32> to vector<2x32xf32>
    %119 = arith.negf %118 : vector<2x32xf32>
    %120 = math.exp %119 : vector<2x32xf32>
    %cst_67 = arith.constant 1.000000e+00 : f32
    %121 = vector.broadcast %cst_67 : f32 to vector<2x32xf32>
    %122 = arith.addf %121, %120 : vector<2x32xf32>
    %123 = arith.divf %121, %122 : vector<2x32xf32>
    %124 = vector.extract_strided_slice %111 {offsets = [0, 64], sizes = [2, 32], strides = [1, 1]} : vector<2x128xf32> to vector<2x32xf32>
    %125 = math.tanh %124 : vector<2x32xf32>
    %126 = vector.extract_strided_slice %111 {offsets = [0, 96], sizes = [2, 32], strides = [1, 1]} : vector<2x128xf32> to vector<2x32xf32>
    %127 = arith.negf %126 : vector<2x32xf32>
    %128 = math.exp %127 : vector<2x32xf32>
    %cst_68 = arith.constant 1.000000e+00 : f32
    %129 = vector.broadcast %cst_68 : f32 to vector<2x32xf32>
    %130 = arith.addf %129, %128 : vector<2x32xf32>
    %131 = arith.divf %129, %130 : vector<2x32xf32>
    %132 = arith.mulf %123, %105 : vector<2x32xf32>
    %133 = arith.mulf %117, %125 : vector<2x32xf32>
    %134 = arith.addf %132, %133 : vector<2x32xf32>
    %135 = math.tanh %134 : vector<2x32xf32>
    %136 = arith.mulf %131, %135 : vector<2x32xf32>
    %c0_69 = arith.constant 0 : index
    %c0_70 = arith.constant 0 : index
    %137 = vector.load %arg18[%c0_69, %c0_70] : memref<32x21xf32, #tpu.memory_space<vmem>>, vector<32x21xf32>
    %cst_71 = arith.constant dense<0.000000e+00> : vector<2x21xf32>
    %138 = tpu.matmul %136, %137, %cst_71 {dimension_numbers = #tpu.dot_dimension_numbers<[1], [0], [0], [1], [0, 0, 1, 1], [], []>} : vector<2x32xf32>, vector<32x21xf32>, vector<2x21xf32> -> vector<2x21xf32>
    %c0_72 = arith.constant 0 : index
    %c0_73 = arith.constant 0 : index
    %139 = vector.load %arg19[%c0_72, %c0_73] : memref<1x21xf32, #tpu.memory_space<vmem>>, vector<1x21xf32>
    %140 = vector.broadcast %139 : vector<1x21xf32> to vector<2x21xf32>
    %141 = arith.addf %138, %140 : vector<2x21xf32>
    %cst_74 = arith.constant dense<0xFF800000> : vector<2xf32>
    %142 = vector.multi_reduction <maximumf>, %141, %cst_74 [1] : vector<2x21xf32> to vector<2xf32>
    %143 = vector.shape_cast %142 : vector<2xf32> to vector<2x1xf32>
    %144 = vector.broadcast %143 : vector<2x1xf32> to vector<2x21xf32>
    %145 = arith.subf %141, %144 : vector<2x21xf32>
    %146 = math.exp %145 : vector<2x21xf32>
    %cst_75 = arith.constant dense<0.000000e+00> : vector<2xf32>
    %147 = vector.multi_reduction <add>, %146, %cst_75 [1] : vector<2x21xf32> to vector<2xf32>
    %148 = vector.shape_cast %147 : vector<2xf32> to vector<2x1xf32>
    %149 = math.log %148 : vector<2x1xf32>
    %150 = vector.broadcast %149 : vector<2x1xf32> to vector<2x21xf32>
    %151 = arith.subf %145, %150 : vector<2x21xf32>
    %c0_76 = arith.constant 0 : index
    %c0_77 = arith.constant 0 : index
    %c0_78 = arith.constant 0 : index
    %152 = vector.load %arg20[%c0_76, %c0_77, %c0_78] : memref<1x2x21xf32, #tpu.memory_space<vmem>>, vector<1x2x21xf32>
    %153 = vector.shape_cast %152 : vector<1x2x21xf32> to vector<2x21xf32>
    %154 = vector.shape_cast %151 : vector<2x21xf32> to vector<1x2x21xf32>
    tpu.vector_store %arg20[%c0_76, %c0_77, %c0_78], %154 {strides = array<i32>} : memref<1x2x21xf32, #tpu.memory_space<vmem>>, vector<1x2x21xf32>,
    %c0_79 = arith.constant 0 : index
    %c0_80 = arith.constant 0 : index
    %c0_81 = arith.constant 0 : index
    %155 = vector.load %arg21[%c0_79, %c0_80, %c0_81] : memref<1x2x8xf32, #tpu.memory_space<vmem>>, vector<1x2x8xf32>
    %156 = vector.shape_cast %155 : vector<1x2x8xf32> to vector<2x8xf32>
    %157 = vector.shape_cast %90 : vector<2x8xf32> to vector<1x2x8xf32>
    tpu.vector_store %arg21[%c0_79, %c0_80, %c0_81], %157 {strides = array<i32>} : memref<1x2x8xf32, #tpu.memory_space<vmem>>, vector<1x2x8xf32>,
    %c0_82 = arith.constant 0 : index
    %c0_83 = arith.constant 0 : index
    %158 = vector.load %arg22[%c0_82, %c0_83] : memref<2x32xf32, #tpu.memory_space<vmem>>, vector<2x32xf32>
    tpu.vector_store %arg22[%c0_82, %c0_83], %39 {strides = array<i32>} : memref<2x32xf32, #tpu.memory_space<vmem>>, vector<2x32xf32>,
    %c0_84 = arith.constant 0 : index
    %c0_85 = arith.constant 0 : index
    %159 = vector.load %arg23[%c0_84, %c0_85] : memref<2x32xf32, #tpu.memory_space<vmem>>, vector<2x32xf32>
    tpu.vector_store %arg23[%c0_84, %c0_85], %37 {strides = array<i32>} : memref<2x32xf32, #tpu.memory_space<vmem>>, vector<2x32xf32>,
    %c0_86 = arith.constant 0 : index
    %c0_87 = arith.constant 0 : index
    %160 = vector.load %arg24[%c0_86, %c0_87] : memref<2x32xf32, #tpu.memory_space<vmem>>, vector<2x32xf32>
    tpu.vector_store %arg24[%c0_86, %c0_87], %136 {strides = array<i32>} : memref<2x32xf32, #tpu.memory_space<vmem>>, vector<2x32xf32>,
    %c0_88 = arith.constant 0 : index
    %c0_89 = arith.constant 0 : index
    %161 = vector.load %arg25[%c0_88, %c0_89] : memref<2x32xf32, #tpu.memory_space<vmem>>, vector<2x32xf32>
    tpu.vector_store %arg25[%c0_88, %c0_89], %134 {strides = array<i32>} : memref<2x32xf32, #tpu.memory_space<vmem>>, vector<2x32xf32>,
    return
  }
  func.func @transform_0(%arg0: i32) -> (i32, i32, i32) {
    %c0_i32 = arith.constant 0 : i32
    %c0_i32_0 = arith.constant 0 : i32
    %c0_i32_1 = arith.constant 0 : i32
    return %arg0, %c0_i32, %c0_i32_0 : i32, i32, i32
  }
  func.func @transform_1(%arg0: i32) -> (i32, i32, i32) {
    %c0_i32 = arith.constant 0 : i32
    %c0_i32_0 = arith.constant 0 : i32
    %c0_i32_1 = arith.constant 0 : i32
    return %arg0, %c0_i32, %c0_i32_0 : i32, i32, i32
  }
  func.func @transform_2(%arg0: i32) -> (i32, i32) {
    %c0_i32 = arith.constant 0 : i32
    %c0_i32_0 = arith.constant 0 : i32
    %c0_i32_1 = arith.constant 0 : i32
    return %c0_i32, %c0_i32_0 : i32, i32
  }
  func.func @transform_3(%arg0: i32) -> (i32, i32, i32) {
    %c0_i32 = arith.constant 0 : i32
    %c0_i32_0 = arith.constant 0 : i32
    %c0_i32_1 = arith.constant 0 : i32
    %c0_i32_2 = arith.constant 0 : i32
    return %c0_i32, %c0_i32_0, %c0_i32_1 : i32, i32, i32
  }
  func.func @transform_4(%arg0: i32) -> (i32, i32, i32) {
    %c0_i32 = arith.constant 0 : i32
    %c0_i32_0 = arith.constant 0 : i32
    %c0_i32_1 = arith.constant 0 : i32
    %c0_i32_2 = arith.constant 0 : i32
    return %c0_i32, %c0_i32_0, %c0_i32_1 : i32, i32, i32
  }
  func.func @transform_5(%arg0: i32) -> (i32, i32, i32) {
    %c0_i32 = arith.constant 0 : i32
    %c0_i32_0 = arith.constant 0 : i32
    %c0_i32_1 = arith.constant 0 : i32
    %c0_i32_2 = arith.constant 0 : i32
    return %c0_i32, %c0_i32_0, %c0_i32_1 : i32, i32, i32
  }
  func.func @transform_6(%arg0: i32) -> (i32, i32, i32) {
    %c0_i32 = arith.constant 0 : i32
    %c0_i32_0 = arith.constant 0 : i32
    %c0_i32_1 = arith.constant 0 : i32
    %c0_i32_2 = arith.constant 0 : i32
    return %c0_i32, %c0_i32_0, %c0_i32_1 : i32, i32, i32
  }
  func.func @transform_7(%arg0: i32) -> (i32, i32) {
    %c0_i32 = arith.constant 0 : i32
    %c0_i32_0 = arith.constant 0 : i32
    %c0_i32_1 = arith.constant 0 : i32
    return %c0_i32, %c0_i32_0 : i32, i32
  }
  func.func @transform_8(%arg0: i32) -> (i32, i32) {
    %c0_i32 = arith.constant 0 : i32
    %c0_i32_0 = arith.constant 0 : i32
    %c0_i32_1 = arith.constant 0 : i32
    return %c0_i32, %c0_i32_0 : i32, i32
  }
  func.func @transform_9(%arg0: i32) -> (i32, i32) {
    %c0_i32 = arith.constant 0 : i32
    %c0_i32_0 = arith.constant 0 : i32
    %c0_i32_1 = arith.constant 0 : i32
    return %c0_i32, %c0_i32_0 : i32, i32
  }
  func.func @transform_10(%arg0: i32) -> (i32, i32) {
    %c0_i32 = arith.constant 0 : i32
    %c0_i32_0 = arith.constant 0 : i32
    %c0_i32_1 = arith.constant 0 : i32
    return %c0_i32, %c0_i32_0 : i32, i32
  }
  func.func @transform_11(%arg0: i32) -> (i32, i32) {
    %c0_i32 = arith.constant 0 : i32
    %c0_i32_0 = arith.constant 0 : i32
    %c0_i32_1 = arith.constant 0 : i32
    return %c0_i32, %c0_i32_0 : i32, i32
  }
  func.func @transform_12(%arg0: i32) -> (i32, i32) {
    %c0_i32 = arith.constant 0 : i32
    %c0_i32_0 = arith.constant 0 : i32
    %c0_i32_1 = arith.constant 0 : i32
    return %c0_i32, %c0_i32_0 : i32, i32
  }
  func.func @transform_13(%arg0: i32) -> (i32, i32) {
    %c0_i32 = arith.constant 0 : i32
    %c0_i32_0 = arith.constant 0 : i32
    %c0_i32_1 = arith.constant 0 : i32
    return %c0_i32, %c0_i32_0 : i32, i32
  }
  func.func @transform_14(%arg0: i32) -> (i32, i32) {
    %c0_i32 = arith.constant 0 : i32
    %c0_i32_0 = arith.constant 0 : i32
    %c0_i32_1 = arith.constant 0 : i32
    return %c0_i32, %c0_i32_0 : i32, i32
  }
  func.func @transform_15(%arg0: i32) -> (i32, i32) {
    %c0_i32 = arith.constant 0 : i32
    %c0_i32_0 = arith.constant 0 : i32
    %c0_i32_1 = arith.constant 0 : i32
    return %c0_i32, %c0_i32_0 : i32, i32
  }
  func.func @transform_16(%arg0: i32) -> (i32, i32) {
    %c0_i32 = arith.constant 0 : i32
    %c0_i32_0 = arith.constant 0 : i32
    %c0_i32_1 = arith.constant 0 : i32
    return %c0_i32, %c0_i32_0 : i32, i32
  }
  func.func @transform_17(%arg0: i32) -> (i32, i32) {
    %c0_i32 = arith.constant 0 : i32
    %c0_i32_0 = arith.constant 0 : i32
    %c0_i32_1 = arith.constant 0 : i32
    return %c0_i32, %c0_i32_0 : i32, i32
  }
  func.func @transform_18(%arg0: i32) -> (i32, i32) {
    %c0_i32 = arith.constant 0 : i32
    %c0_i32_0 = arith.constant 0 : i32
    %c0_i32_1 = arith.constant 0 : i32
    return %c0_i32, %c0_i32_0 : i32, i32
  }
  func.func @transform_19(%arg0: i32) -> (i32, i32, i32) {
    %c0_i32 = arith.constant 0 : i32
    %c0_i32_0 = arith.constant 0 : i32
    %c0_i32_1 = arith.constant 0 : i32
    return %arg0, %c0_i32, %c0_i32_0 : i32, i32, i32
  }
  func.func @transform_20(%arg0: i32) -> (i32, i32, i32) {
    %c0_i32 = arith.constant 0 : i32
    %c0_i32_0 = arith.constant 0 : i32
    %c0_i32_1 = arith.constant 0 : i32
    return %arg0, %c0_i32, %c0_i32_0 : i32, i32, i32
  }
}

module attributes {stable_mosaic.version = 11 : i64} {
  func.func @_localize_recon_seq_kernel(%arg0: i32, %arg1: memref<1x2x32xf32, #tpu.memory_space<vmem>>, %arg2: memref<1x2x32xf32, #tpu.memory_space<vmem>>, %arg3: memref<1x2x8xf32, #tpu.memory_space<vmem>>, %arg4: memref<2x32xf32, #tpu.memory_space<vmem>>, %arg5: memref<2x6x32xf32, #tpu.memory_space<vmem>>, %arg6: memref<2x6x32xf32, #tpu.memory_space<vmem>>, %arg7: memref<2x8x32xf32, #tpu.memory_space<vmem>>, %arg8: memref<2x8x32xf32, #tpu.memory_space<vmem>>, %arg9: memref<32x32xf32, #tpu.memory_space<vmem>>, %arg10: memref<1x32xf32, #tpu.memory_space<vmem>>, %arg11: memref<32x32xf32, #tpu.memory_space<vmem>>, %arg12: memref<1x32xf32, #tpu.memory_space<vmem>>, %arg13: memref<1x32xf32, #tpu.memory_space<vmem>>, %arg14: memref<32x32xf32, #tpu.memory_space<vmem>>, %arg15: memref<1x32xf32, #tpu.memory_space<vmem>>, %arg16: memref<1x32xf32, #tpu.memory_space<vmem>>, %arg17: memref<128x128xf32, #tpu.memory_space<vmem>>, %arg18: memref<1x128xf32, #tpu.memory_space<vmem>>, %arg19: memref<128x128xf32, #tpu.memory_space<vmem>>, %arg20: memref<1x128xf32, #tpu.memory_space<vmem>>, %arg21: memref<32x21xf32, #tpu.memory_space<vmem>>, %arg22: memref<1x21xf32, #tpu.memory_space<vmem>>, %arg23: memref<1x2x21xf32, #tpu.memory_space<vmem>>, %arg24: memref<2x32xf32, #tpu.memory_space<vmem>>, %arg25: memref<2x32xf32, #tpu.memory_space<vmem>>, %arg26: memref<2x32xf32, #tpu.memory_space<vmem>>, %arg27: memref<2x32xf32, #tpu.memory_space<vmem>>) attributes {dimension_semantics = [#tpu.dimension_semantics<arbitrary>], iteration_bounds = array<i64: 8>, scalar_prefetch = 0 : i64, scratch_operands = 4 : i64, tpu.core_type = #tpu.core_type<tc>, window_params = [{transform_indices = @transform_0, window_bounds = array<i64: 1, 2, 32>}, {transform_indices = @transform_1, window_bounds = array<i64: 1, 2, 32>}, {transform_indices = @transform_2, window_bounds = array<i64: 1, 2, 8>}, {pipeline_mode = #tpu.pipeline_mode<synchronous>, transform_indices = @transform_3, window_bounds = array<i64: 2, 32>}, {pipeline_mode = #tpu.pipeline_mode<synchronous>, transform_indices = @transform_4, window_bounds = array<i64: 2, 6, 32>}, {pipeline_mode = #tpu.pipeline_mode<synchronous>, transform_indices = @transform_5, window_bounds = array<i64: 2, 6, 32>}, {pipeline_mode = #tpu.pipeline_mode<synchronous>, transform_indices = @transform_6, window_bounds = array<i64: 2, 8, 32>}, {pipeline_mode = #tpu.pipeline_mode<synchronous>, transform_indices = @transform_7, window_bounds = array<i64: 2, 8, 32>}, {pipeline_mode = #tpu.pipeline_mode<synchronous>, transform_indices = @transform_8, window_bounds = array<i64: 32, 32>}, {pipeline_mode = #tpu.pipeline_mode<synchronous>, transform_indices = @transform_9, window_bounds = array<i64: 1, 32>}, {pipeline_mode = #tpu.pipeline_mode<synchronous>, transform_indices = @transform_10, window_bounds = array<i64: 32, 32>}, {pipeline_mode = #tpu.pipeline_mode<synchronous>, transform_indices = @transform_11, window_bounds = array<i64: 1, 32>}, {pipeline_mode = #tpu.pipeline_mode<synchronous>, transform_indices = @transform_12, window_bounds = array<i64: 1, 32>}, {pipeline_mode = #tpu.pipeline_mode<synchronous>, transform_indices = @transform_13, window_bounds = array<i64: 32, 32>}, {pipeline_mode = #tpu.pipeline_mode<synchronous>, transform_indices = @transform_14, window_bounds = array<i64: 1, 32>}, {pipeline_mode = #tpu.pipeline_mode<synchronous>, transform_indices = @transform_15, window_bounds = array<i64: 1, 32>}, {pipeline_mode = #tpu.pipeline_mode<synchronous>, transform_indices = @transform_16, window_bounds = array<i64: 128, 128>}, {pipeline_mode = #tpu.pipeline_mode<synchronous>, transform_indices = @transform_17, window_bounds = array<i64: 1, 128>}, {pipeline_mode = #tpu.pipeline_mode<synchronous>, transform_indices = @transform_18, window_bounds = array<i64: 128, 128>}, {pipeline_mode = #tpu.pipeline_mode<synchronous>, transform_indices = @transform_19, window_bounds = array<i64: 1, 128>}, {pipeline_mode = #tpu.pipeline_mode<synchronous>, transform_indices = @transform_20, window_bounds = array<i64: 32, 21>}, {pipeline_mode = #tpu.pipeline_mode<synchronous>, transform_indices = @transform_21, window_bounds = array<i64: 1, 21>}, {transform_indices = @transform_22, window_bounds = array<i64: 1, 2, 21>}]} {
    %c0_i32 = arith.constant 0 : i32
    %0 = arith.cmpi eq, %arg0, %c0_i32 : i32
    %1 = arith.extui %0 : i1 to i32
    %c0_i32_0 = arith.constant 0 : i32
    %2 = arith.cmpi ne, %1, %c0_i32_0 : i32
    scf.if %2 {
      %cst_96 = arith.constant 0.000000e+00 : f32
      %168 = vector.broadcast %cst_96 : f32 to vector<2x32xf32>
      %c0_97 = arith.constant 0 : index
      %c0_98 = arith.constant 0 : index
      %169 = vector.load %arg24[%c0_97, %c0_98] : memref<2x32xf32, #tpu.memory_space<vmem>>, vector<2x32xf32>
      tpu.vector_store %arg24[%c0_97, %c0_98], %168 {strides = array<i32>} : memref<2x32xf32, #tpu.memory_space<vmem>>, vector<2x32xf32>,
      %cst_99 = arith.constant 0.000000e+00 : f32
      %170 = vector.broadcast %cst_99 : f32 to vector<2x32xf32>
      %c0_100 = arith.constant 0 : index
      %c0_101 = arith.constant 0 : index
      %171 = vector.load %arg25[%c0_100, %c0_101] : memref<2x32xf32, #tpu.memory_space<vmem>>, vector<2x32xf32>
      tpu.vector_store %arg25[%c0_100, %c0_101], %170 {strides = array<i32>} : memref<2x32xf32, #tpu.memory_space<vmem>>, vector<2x32xf32>,
      %cst_102 = arith.constant 0.000000e+00 : f32
      %172 = vector.broadcast %cst_102 : f32 to vector<2x32xf32>
      %c0_103 = arith.constant 0 : index
      %c0_104 = arith.constant 0 : index
      %173 = vector.load %arg26[%c0_103, %c0_104] : memref<2x32xf32, #tpu.memory_space<vmem>>, vector<2x32xf32>
      tpu.vector_store %arg26[%c0_103, %c0_104], %172 {strides = array<i32>} : memref<2x32xf32, #tpu.memory_space<vmem>>, vector<2x32xf32>,
      %cst_105 = arith.constant 0.000000e+00 : f32
      %174 = vector.broadcast %cst_105 : f32 to vector<2x32xf32>
      %c0_106 = arith.constant 0 : index
      %c0_107 = arith.constant 0 : index
      %175 = vector.load %arg27[%c0_106, %c0_107] : memref<2x32xf32, #tpu.memory_space<vmem>>, vector<2x32xf32>
      tpu.vector_store %arg27[%c0_106, %c0_107], %174 {strides = array<i32>} : memref<2x32xf32, #tpu.memory_space<vmem>>, vector<2x32xf32>,
    } else {
    }
    %c0 = arith.constant 0 : index
    %c0_1 = arith.constant 0 : index
    %c0_2 = arith.constant 0 : index
    %3 = vector.load %arg1[%c0, %c0_1, %c0_2] : memref<1x2x32xf32, #tpu.memory_space<vmem>>, vector<1x2x32xf32>
    %4 = vector.shape_cast %3 : vector<1x2x32xf32> to vector<2x32xf32>
    %c0_3 = arith.constant 0 : index
    %c0_4 = arith.constant 0 : index
    %5 = vector.load %arg9[%c0_3, %c0_4] : memref<32x32xf32, #tpu.memory_space<vmem>>, vector<32x32xf32>
    %cst = arith.constant dense<0.000000e+00> : vector<2x32xf32>
    %6 = tpu.matmul %4, %5, %cst {dimension_numbers = #tpu.dot_dimension_numbers<[1], [0], [0], [1], [0, 0, 1, 1], [], []>} : vector<2x32xf32>, vector<32x32xf32>, vector<2x32xf32> -> vector<2x32xf32>
    %c0_5 = arith.constant 0 : index
    %c0_6 = arith.constant 0 : index
    %7 = vector.load %arg10[%c0_5, %c0_6] : memref<1x32xf32, #tpu.memory_space<vmem>>, vector<1x32xf32>
    %8 = vector.broadcast %7 : vector<1x32xf32> to vector<2x32xf32>
    %9 = arith.addf %6, %8 : vector<2x32xf32>
    %cst_7 = arith.constant 0.000000e+00 : f32
    %10 = vector.broadcast %cst_7 : f32 to vector<2x32xf32>
    %11 = arith.maximumf %9, %10 : vector<2x32xf32>
    %c0_8 = arith.constant 0 : index
    %c0_9 = arith.constant 0 : index
    %c0_10 = arith.constant 0 : index
    %12 = vector.load %arg6[%c0_8, %c0_9, %c0_10] : memref<2x6x32xf32, #tpu.memory_space<vmem>>, vector<2x6x32xf32>
    %c0_11 = arith.constant 0 : index
    %c0_12 = arith.constant 0 : index
    %13 = vector.load %arg11[%c0_11, %c0_12] : memref<32x32xf32, #tpu.memory_space<vmem>>, vector<32x32xf32>
    %cst_13 = arith.constant dense<0.000000e+00> : vector<2x32xf32>
    %14 = tpu.matmul %11, %13, %cst_13 {dimension_numbers = #tpu.dot_dimension_numbers<[1], [0], [0], [1], [0, 0, 1, 1], [], []>} : vector<2x32xf32>, vector<32x32xf32>, vector<2x32xf32> -> vector<2x32xf32>
    %c0_14 = arith.constant 0 : index
    %c0_15 = arith.constant 0 : index
    %15 = vector.load %arg12[%c0_14, %c0_15] : memref<1x32xf32, #tpu.memory_space<vmem>>, vector<1x32xf32>
    %16 = vector.broadcast %15 : vector<1x32xf32> to vector<2x32xf32>
    %17 = arith.addf %14, %16 : vector<2x32xf32>
    %18 = vector.shape_cast %17 : vector<2x32xf32> to vector<2x1x32xf32>
    %19 = vector.broadcast %18 : vector<2x1x32xf32> to vector<2x6x32xf32>
    %20 = arith.addf %12, %19 : vector<2x6x32xf32>
    %21 = math.tanh %20 : vector<2x6x32xf32>
    %c0_16 = arith.constant 0 : index
    %c0_17 = arith.constant 0 : index
    %22 = vector.load %arg13[%c0_16, %c0_17] : memref<1x32xf32, #tpu.memory_space<vmem>>, vector<1x32xf32>
    %23 = vector.shape_cast %22 : vector<1x32xf32> to vector<1x1x32xf32>
    %24 = vector.broadcast %23 : vector<1x1x32xf32> to vector<2x6x32xf32>
    %25 = arith.mulf %21, %24 : vector<2x6x32xf32>
    %cst_18 = arith.constant dense<0.000000e+00> : vector<2x6xf32>
    %26 = vector.multi_reduction <add>, %25, %cst_18 [2] : vector<2x6x32xf32> to vector<2x6xf32>
    %c0_19 = arith.constant 0 : index
    %c0_20 = arith.constant 0 : index
    %c0_21 = arith.constant 0 : index
    %27 = vector.load %arg5[%c0_19, %c0_20, %c0_21] : memref<2x6x32xf32, #tpu.memory_space<vmem>>, vector<2x6x32xf32>
    %cst_22 = arith.constant dense<0xFF800000> : vector<2xf32>
    %28 = vector.multi_reduction <maximumf>, %26, %cst_22 [1] : vector<2x6xf32> to vector<2xf32>
    %29 = vector.shape_cast %28 : vector<2xf32> to vector<2x1xf32>
    %30 = vector.broadcast %29 : vector<2x1xf32> to vector<2x6xf32>
    %31 = arith.subf %26, %30 : vector<2x6xf32>
    %32 = math.exp %31 : vector<2x6xf32>
    %cst_23 = arith.constant dense<0.000000e+00> : vector<2xf32>
    %33 = vector.multi_reduction <add>, %32, %cst_23 [1] : vector<2x6xf32> to vector<2xf32>
    %34 = vector.shape_cast %33 : vector<2xf32> to vector<2x1xf32>
    %35 = vector.broadcast %34 : vector<2x1xf32> to vector<2x6xf32>
    %36 = arith.divf %32, %35 : vector<2x6xf32>
    %37 = vector.shape_cast %36 : vector<2x6xf32> to vector<2x6x1xf32>
    %38 = vector.broadcast %37 : vector<2x6x1xf32> to vector<2x6x32xf32>
    %39 = arith.mulf %38, %27 : vector<2x6x32xf32>
    %cst_24 = arith.constant dense<0.000000e+00> : vector<2x32xf32>
    %40 = vector.multi_reduction <add>, %39, %cst_24 [1] : vector<2x6x32xf32> to vector<2x32xf32>
    %c0_25 = arith.constant 0 : index
    %c0_26 = arith.constant 0 : index
    %c0_27 = arith.constant 0 : index
    %41 = vector.load %arg8[%c0_25, %c0_26, %c0_27] : memref<2x8x32xf32, #tpu.memory_space<vmem>>, vector<2x8x32xf32>
    %c0_28 = arith.constant 0 : index
    %c0_29 = arith.constant 0 : index
    %42 = vector.load %arg14[%c0_28, %c0_29] : memref<32x32xf32, #tpu.memory_space<vmem>>, vector<32x32xf32>
    %cst_30 = arith.constant dense<0.000000e+00> : vector<2x32xf32>
    %43 = tpu.matmul %11, %42, %cst_30 {dimension_numbers = #tpu.dot_dimension_numbers<[1], [0], [0], [1], [0, 0, 1, 1], [], []>} : vector<2x32xf32>, vector<32x32xf32>, vector<2x32xf32> -> vector<2x32xf32>
    %c0_31 = arith.constant 0 : index
    %c0_32 = arith.constant 0 : index
    %44 = vector.load %arg15[%c0_31, %c0_32] : memref<1x32xf32, #tpu.memory_space<vmem>>, vector<1x32xf32>
    %45 = vector.broadcast %44 : vector<1x32xf32> to vector<2x32xf32>
    %46 = arith.addf %43, %45 : vector<2x32xf32>
    %47 = vector.shape_cast %46 : vector<2x32xf32> to vector<2x1x32xf32>
    %48 = vector.broadcast %47 : vector<2x1x32xf32> to vector<2x8x32xf32>
    %49 = arith.addf %41, %48 : vector<2x8x32xf32>
    %50 = math.tanh %49 : vector<2x8x32xf32>
    %c0_33 = arith.constant 0 : index
    %c0_34 = arith.constant 0 : index
    %51 = vector.load %arg16[%c0_33, %c0_34] : memref<1x32xf32, #tpu.memory_space<vmem>>, vector<1x32xf32>
    %52 = vector.shape_cast %51 : vector<1x32xf32> to vector<1x1x32xf32>
    %53 = vector.broadcast %52 : vector<1x1x32xf32> to vector<2x8x32xf32>
    %54 = arith.mulf %50, %53 : vector<2x8x32xf32>
    %cst_35 = arith.constant dense<0.000000e+00> : vector<2x8xf32>
    %55 = vector.multi_reduction <add>, %54, %cst_35 [2] : vector<2x8x32xf32> to vector<2x8xf32>
    %c0_36 = arith.constant 0 : index
    %c0_37 = arith.constant 0 : index
    %c0_38 = arith.constant 0 : index
    %56 = vector.load %arg3[%c0_36, %c0_37, %c0_38] : memref<1x2x8xf32, #tpu.memory_space<vmem>>, vector<1x2x8xf32>
    %57 = vector.shape_cast %56 : vector<1x2x8xf32> to vector<2x8xf32>
    %c0_39 = arith.constant 0 : index
    %c0_40 = arith.constant 0 : index
    %c0_41 = arith.constant 0 : index
    %58 = vector.load %arg7[%c0_39, %c0_40, %c0_41] : memref<2x8x32xf32, #tpu.memory_space<vmem>>, vector<2x8x32xf32>
    %cst_42 = arith.constant 5.000000e-01 : f32
    %59 = vector.broadcast %cst_42 : f32 to vector<2x8xf32>
    %60 = arith.cmpf ogt, %57, %59 : vector<2x8xf32>
    %cst_43 = arith.constant -1.000000e+08 : f32
    %61 = vector.broadcast %cst_43 : f32 to vector<2x8xf32>
    %62 = arith.select %60, %61, %55 : vector<2x8xi1>, vector<2x8xf32>
    %cst_44 = arith.constant dense<0xFF800000> : vector<2xf32>
    %63 = vector.multi_reduction <maximumf>, %62, %cst_44 [1] : vector<2x8xf32> to vector<2xf32>
    %64 = vector.shape_cast %63 : vector<2xf32> to vector<2x1xf32>
    %65 = vector.broadcast %64 : vector<2x1xf32> to vector<2x8xf32>
    %66 = arith.subf %62, %65 : vector<2x8xf32>
    %67 = math.exp %66 : vector<2x8xf32>
    %cst_45 = arith.constant dense<0.000000e+00> : vector<2xf32>
    %68 = vector.multi_reduction <add>, %67, %cst_45 [1] : vector<2x8xf32> to vector<2xf32>
    %69 = vector.shape_cast %68 : vector<2xf32> to vector<2x1xf32>
    %70 = vector.broadcast %69 : vector<2x1xf32> to vector<2x8xf32>
    %71 = arith.divf %67, %70 : vector<2x8xf32>
    %72 = vector.shape_cast %71 : vector<2x8xf32> to vector<2x8x1xf32>
    %73 = vector.broadcast %72 : vector<2x8x1xf32> to vector<2x8x32xf32>
    %74 = arith.mulf %73, %58 : vector<2x8x32xf32>
    %cst_46 = arith.constant dense<0.000000e+00> : vector<2x32xf32>
    %75 = vector.multi_reduction <add>, %74, %cst_46 [1] : vector<2x8x32xf32> to vector<2x32xf32>
    %c0_47 = arith.constant 0 : index
    %c0_48 = arith.constant 0 : index
    %c0_49 = arith.constant 0 : index
    %76 = vector.load %arg2[%c0_47, %c0_48, %c0_49] : memref<1x2x32xf32, #tpu.memory_space<vmem>>, vector<1x2x32xf32>
    %77 = vector.shape_cast %76 : vector<1x2x32xf32> to vector<2x32xf32>
    %c0_50 = arith.constant 0 : index
    %c0_51 = arith.constant 0 : index
    %78 = vector.load %arg26[%c0_50, %c0_51] : memref<2x32xf32, #tpu.memory_space<vmem>>, vector<2x32xf32>
    %c0_52 = arith.constant 0 : index
    %c0_53 = arith.constant 0 : index
    %79 = vector.load %arg4[%c0_52, %c0_53] : memref<2x32xf32, #tpu.memory_space<vmem>>, vector<2x32xf32>
    %c0_54 = arith.constant 0 : index
    %c0_55 = arith.constant 0 : index
    %80 = vector.load %arg24[%c0_54, %c0_55] : memref<2x32xf32, #tpu.memory_space<vmem>>, vector<2x32xf32>
    %c0_56 = arith.constant 0 : index
    %c0_57 = arith.constant 0 : index
    %81 = vector.load %arg25[%c0_56, %c0_57] : memref<2x32xf32, #tpu.memory_space<vmem>>, vector<2x32xf32>
    %82 = tpu.concatenate %78, %79, %77, %80 in 1 : vector<2x32xf32>, vector<2x32xf32>, vector<2x32xf32>, vector<2x32xf32> -> vector<2x128xf32>
    %c0_58 = arith.constant 0 : index
    %c0_59 = arith.constant 0 : index
    %83 = vector.load %arg17[%c0_58, %c0_59] : memref<128x128xf32, #tpu.memory_space<vmem>>, vector<128x128xf32>
    %cst_60 = arith.constant dense<0.000000e+00> : vector<2x128xf32>
    %84 = tpu.matmul %82, %83, %cst_60 {dimension_numbers = #tpu.dot_dimension_numbers<[1], [0], [0], [1], [0, 0, 1, 1], [], []>} : vector<2x128xf32>, vector<128x128xf32>, vector<2x128xf32> -> vector<2x128xf32>
    %c0_61 = arith.constant 0 : index
    %c0_62 = arith.constant 0 : index
    %85 = vector.load %arg18[%c0_61, %c0_62] : memref<1x128xf32, #tpu.memory_space<vmem>>, vector<1x128xf32>
    %86 = vector.broadcast %85 : vector<1x128xf32> to vector<2x128xf32>
    %87 = arith.addf %84, %86 : vector<2x128xf32>
    %88 = vector.extract_strided_slice %87 {offsets = [0, 0], sizes = [2, 32], strides = [1, 1]} : vector<2x128xf32> to vector<2x32xf32>
    %89 = arith.negf %88 : vector<2x32xf32>
    %90 = math.exp %89 : vector<2x32xf32>
    %cst_63 = arith.constant 1.000000e+00 : f32
    %91 = vector.broadcast %cst_63 : f32 to vector<2x32xf32>
    %92 = arith.addf %91, %90 : vector<2x32xf32>
    %93 = arith.divf %91, %92 : vector<2x32xf32>
    %94 = vector.extract_strided_slice %87 {offsets = [0, 32], sizes = [2, 32], strides = [1, 1]} : vector<2x128xf32> to vector<2x32xf32>
    %95 = arith.negf %94 : vector<2x32xf32>
    %96 = math.exp %95 : vector<2x32xf32>
    %cst_64 = arith.constant 1.000000e+00 : f32
    %97 = vector.broadcast %cst_64 : f32 to vector<2x32xf32>
    %98 = arith.addf %97, %96 : vector<2x32xf32>
    %99 = arith.divf %97, %98 : vector<2x32xf32>
    %100 = vector.extract_strided_slice %87 {offsets = [0, 64], sizes = [2, 32], strides = [1, 1]} : vector<2x128xf32> to vector<2x32xf32>
    %101 = math.tanh %100 : vector<2x32xf32>
    %102 = vector.extract_strided_slice %87 {offsets = [0, 96], sizes = [2, 32], strides = [1, 1]} : vector<2x128xf32> to vector<2x32xf32>
    %103 = arith.negf %102 : vector<2x32xf32>
    %104 = math.exp %103 : vector<2x32xf32>
    %cst_65 = arith.constant 1.000000e+00 : f32
    %105 = vector.broadcast %cst_65 : f32 to vector<2x32xf32>
    %106 = arith.addf %105, %104 : vector<2x32xf32>
    %107 = arith.divf %105, %106 : vector<2x32xf32>
    %108 = arith.mulf %99, %81 : vector<2x32xf32>
    %109 = arith.mulf %93, %101 : vector<2x32xf32>
    %110 = arith.addf %108, %109 : vector<2x32xf32>
    %111 = math.tanh %110 : vector<2x32xf32>
    %112 = arith.mulf %107, %111 : vector<2x32xf32>
    %c0_66 = arith.constant 0 : index
    %c0_67 = arith.constant 0 : index
    %113 = vector.load %arg26[%c0_66, %c0_67] : memref<2x32xf32, #tpu.memory_space<vmem>>, vector<2x32xf32>
    %c0_68 = arith.constant 0 : index
    %c0_69 = arith.constant 0 : index
    %114 = vector.load %arg27[%c0_68, %c0_69] : memref<2x32xf32, #tpu.memory_space<vmem>>, vector<2x32xf32>
    %115 = tpu.concatenate %40, %75, %112, %113 in 1 : vector<2x32xf32>, vector<2x32xf32>, vector<2x32xf32>, vector<2x32xf32> -> vector<2x128xf32>
    %c0_70 = arith.constant 0 : index
    %c0_71 = arith.constant 0 : index
    %116 = vector.load %arg19[%c0_70, %c0_71] : memref<128x128xf32, #tpu.memory_space<vmem>>, vector<128x128xf32>
    %cst_72 = arith.constant dense<0.000000e+00> : vector<2x128xf32>
    %117 = tpu.matmul %115, %116, %cst_72 {dimension_numbers = #tpu.dot_dimension_numbers<[1], [0], [0], [1], [0, 0, 1, 1], [], []>} : vector<2x128xf32>, vector<128x128xf32>, vector<2x128xf32> -> vector<2x128xf32>
    %c0_73 = arith.constant 0 : index
    %c0_74 = arith.constant 0 : index
    %118 = vector.load %arg20[%c0_73, %c0_74] : memref<1x128xf32, #tpu.memory_space<vmem>>, vector<1x128xf32>
    %119 = vector.broadcast %118 : vector<1x128xf32> to vector<2x128xf32>
    %120 = arith.addf %117, %119 : vector<2x128xf32>
    %121 = vector.extract_strided_slice %120 {offsets = [0, 0], sizes = [2, 32], strides = [1, 1]} : vector<2x128xf32> to vector<2x32xf32>
    %122 = arith.negf %121 : vector<2x32xf32>
    %123 = math.exp %122 : vector<2x32xf32>
    %cst_75 = arith.constant 1.000000e+00 : f32
    %124 = vector.broadcast %cst_75 : f32 to vector<2x32xf32>
    %125 = arith.addf %124, %123 : vector<2x32xf32>
    %126 = arith.divf %124, %125 : vector<2x32xf32>
    %127 = vector.extract_strided_slice %120 {offsets = [0, 32], sizes = [2, 32], strides = [1, 1]} : vector<2x128xf32> to vector<2x32xf32>
    %128 = arith.negf %127 : vector<2x32xf32>
    %129 = math.exp %128 : vector<2x32xf32>
    %cst_76 = arith.constant 1.000000e+00 : f32
    %130 = vector.broadcast %cst_76 : f32 to vector<2x32xf32>
    %131 = arith.addf %130, %129 : vector<2x32xf32>
    %132 = arith.divf %130, %131 : vector<2x32xf32>
    %133 = vector.extract_strided_slice %120 {offsets = [0, 64], sizes = [2, 32], strides = [1, 1]} : vector<2x128xf32> to vector<2x32xf32>
    %134 = math.tanh %133 : vector<2x32xf32>
    %135 = vector.extract_strided_slice %120 {offsets = [0, 96], sizes = [2, 32], strides = [1, 1]} : vector<2x128xf32> to vector<2x32xf32>
    %136 = arith.negf %135 : vector<2x32xf32>
    %137 = math.exp %136 : vector<2x32xf32>
    %cst_77 = arith.constant 1.000000e+00 : f32
    %138 = vector.broadcast %cst_77 : f32 to vector<2x32xf32>
    %139 = arith.addf %138, %137 : vector<2x32xf32>
    %140 = arith.divf %138, %139 : vector<2x32xf32>
    %141 = arith.mulf %132, %114 : vector<2x32xf32>
    %142 = arith.mulf %126, %134 : vector<2x32xf32>
    %143 = arith.addf %141, %142 : vector<2x32xf32>
    %144 = math.tanh %143 : vector<2x32xf32>
    %145 = arith.mulf %140, %144 : vector<2x32xf32>
    %c0_78 = arith.constant 0 : index
    %c0_79 = arith.constant 0 : index
    %146 = vector.load %arg21[%c0_78, %c0_79] : memref<32x21xf32, #tpu.memory_space<vmem>>, vector<32x21xf32>
    %cst_80 = arith.constant dense<0.000000e+00> : vector<2x21xf32>
    %147 = tpu.matmul %145, %146, %cst_80 {dimension_numbers = #tpu.dot_dimension_numbers<[1], [0], [0], [1], [0, 0, 1, 1], [], []>} : vector<2x32xf32>, vector<32x21xf32>, vector<2x21xf32> -> vector<2x21xf32>
    %c0_81 = arith.constant 0 : index
    %c0_82 = arith.constant 0 : index
    %148 = vector.load %arg22[%c0_81, %c0_82] : memref<1x21xf32, #tpu.memory_space<vmem>>, vector<1x21xf32>
    %149 = vector.broadcast %148 : vector<1x21xf32> to vector<2x21xf32>
    %150 = arith.addf %147, %149 : vector<2x21xf32>
    %cst_83 = arith.constant dense<0xFF800000> : vector<2xf32>
    %151 = vector.multi_reduction <maximumf>, %150, %cst_83 [1] : vector<2x21xf32> to vector<2xf32>
    %152 = vector.shape_cast %151 : vector<2xf32> to vector<2x1xf32>
    %153 = vector.broadcast %152 : vector<2x1xf32> to vector<2x21xf32>
    %154 = arith.subf %150, %153 : vector<2x21xf32>
    %155 = math.exp %154 : vector<2x21xf32>
    %cst_84 = arith.constant dense<0.000000e+00> : vector<2xf32>
    %156 = vector.multi_reduction <add>, %155, %cst_84 [1] : vector<2x21xf32> to vector<2xf32>
    %157 = vector.shape_cast %156 : vector<2xf32> to vector<2x1xf32>
    %158 = math.log %157 : vector<2x1xf32>
    %159 = vector.broadcast %158 : vector<2x1xf32> to vector<2x21xf32>
    %160 = arith.subf %154, %159 : vector<2x21xf32>
    %c0_85 = arith.constant 0 : index
    %c0_86 = arith.constant 0 : index
    %c0_87 = arith.constant 0 : index
    %161 = vector.load %arg23[%c0_85, %c0_86, %c0_87] : memref<1x2x21xf32, #tpu.memory_space<vmem>>, vector<1x2x21xf32>
    %162 = vector.shape_cast %161 : vector<1x2x21xf32> to vector<2x21xf32>
    %163 = vector.shape_cast %160 : vector<2x21xf32> to vector<1x2x21xf32>
    tpu.vector_store %arg23[%c0_85, %c0_86, %c0_87], %163 {strides = array<i32>} : memref<1x2x21xf32, #tpu.memory_space<vmem>>, vector<1x2x21xf32>,
    %c0_88 = arith.constant 0 : index
    %c0_89 = arith.constant 0 : index
    %164 = vector.load %arg24[%c0_88, %c0_89] : memref<2x32xf32, #tpu.memory_space<vmem>>, vector<2x32xf32>
    tpu.vector_store %arg24[%c0_88, %c0_89], %112 {strides = array<i32>} : memref<2x32xf32, #tpu.memory_space<vmem>>, vector<2x32xf32>,
    %c0_90 = arith.constant 0 : index
    %c0_91 = arith.constant 0 : index
    %165 = vector.load %arg25[%c0_90, %c0_91] : memref<2x32xf32, #tpu.memory_space<vmem>>, vector<2x32xf32>
    tpu.vector_store %arg25[%c0_90, %c0_91], %110 {strides = array<i32>} : memref<2x32xf32, #tpu.memory_space<vmem>>, vector<2x32xf32>,
    %c0_92 = arith.constant 0 : index
    %c0_93 = arith.constant 0 : index
    %166 = vector.load %arg26[%c0_92, %c0_93] : memref<2x32xf32, #tpu.memory_space<vmem>>, vector<2x32xf32>
    tpu.vector_store %arg26[%c0_92, %c0_93], %145 {strides = array<i32>} : memref<2x32xf32, #tpu.memory_space<vmem>>, vector<2x32xf32>,
    %c0_94 = arith.constant 0 : index
    %c0_95 = arith.constant 0 : index
    %167 = vector.load %arg27[%c0_94, %c0_95] : memref<2x32xf32, #tpu.memory_space<vmem>>, vector<2x32xf32>
    tpu.vector_store %arg27[%c0_94, %c0_95], %143 {strides = array<i32>} : memref<2x32xf32, #tpu.memory_space<vmem>>, vector<2x32xf32>,
    return
  }
  func.func @transform_0(%arg0: i32) -> (i32, i32, i32) {
    %c0_i32 = arith.constant 0 : i32
    %c0_i32_0 = arith.constant 0 : i32
    %c0_i32_1 = arith.constant 0 : i32
    return %arg0, %c0_i32, %c0_i32_0 : i32, i32, i32
  }
  func.func @transform_1(%arg0: i32) -> (i32, i32, i32) {
    %c0_i32 = arith.constant 0 : i32
    %c0_i32_0 = arith.constant 0 : i32
    %c0_i32_1 = arith.constant 0 : i32
    return %arg0, %c0_i32, %c0_i32_0 : i32, i32, i32
  }
  func.func @transform_2(%arg0: i32) -> (i32, i32, i32) {
    %c0_i32 = arith.constant 0 : i32
    %c0_i32_0 = arith.constant 0 : i32
    %c0_i32_1 = arith.constant 0 : i32
    return %arg0, %c0_i32, %c0_i32_0 : i32, i32, i32
  }
  func.func @transform_3(%arg0: i32) -> (i32, i32) {
    %c0_i32 = arith.constant 0 : i32
    %c0_i32_0 = arith.constant 0 : i32
    %c0_i32_1 = arith.constant 0 : i32
    return %c0_i32, %c0_i32_0 : i32, i32
  }
  func.func @transform_4(%arg0: i32) -> (i32, i32, i32) {
    %c0_i32 = arith.constant 0 : i32
    %c0_i32_0 = arith.constant 0 : i32
    %c0_i32_1 = arith.constant 0 : i32
    %c0_i32_2 = arith.constant 0 : i32
    return %c0_i32, %c0_i32_0, %c0_i32_1 : i32, i32, i32
  }
  func.func @transform_5(%arg0: i32) -> (i32, i32, i32) {
    %c0_i32 = arith.constant 0 : i32
    %c0_i32_0 = arith.constant 0 : i32
    %c0_i32_1 = arith.constant 0 : i32
    %c0_i32_2 = arith.constant 0 : i32
    return %c0_i32, %c0_i32_0, %c0_i32_1 : i32, i32, i32
  }
  func.func @transform_6(%arg0: i32) -> (i32, i32, i32) {
    %c0_i32 = arith.constant 0 : i32
    %c0_i32_0 = arith.constant 0 : i32
    %c0_i32_1 = arith.constant 0 : i32
    %c0_i32_2 = arith.constant 0 : i32
    return %c0_i32, %c0_i32_0, %c0_i32_1 : i32, i32, i32
  }
  func.func @transform_7(%arg0: i32) -> (i32, i32, i32) {
    %c0_i32 = arith.constant 0 : i32
    %c0_i32_0 = arith.constant 0 : i32
    %c0_i32_1 = arith.constant 0 : i32
    %c0_i32_2 = arith.constant 0 : i32
    return %c0_i32, %c0_i32_0, %c0_i32_1 : i32, i32, i32
  }
  func.func @transform_8(%arg0: i32) -> (i32, i32) {
    %c0_i32 = arith.constant 0 : i32
    %c0_i32_0 = arith.constant 0 : i32
    %c0_i32_1 = arith.constant 0 : i32
    return %c0_i32, %c0_i32_0 : i32, i32
  }
  func.func @transform_9(%arg0: i32) -> (i32, i32) {
    %c0_i32 = arith.constant 0 : i32
    %c0_i32_0 = arith.constant 0 : i32
    %c0_i32_1 = arith.constant 0 : i32
    return %c0_i32, %c0_i32_0 : i32, i32
  }
  func.func @transform_10(%arg0: i32) -> (i32, i32) {
    %c0_i32 = arith.constant 0 : i32
    %c0_i32_0 = arith.constant 0 : i32
    %c0_i32_1 = arith.constant 0 : i32
    return %c0_i32, %c0_i32_0 : i32, i32
  }
  func.func @transform_11(%arg0: i32) -> (i32, i32) {
    %c0_i32 = arith.constant 0 : i32
    %c0_i32_0 = arith.constant 0 : i32
    %c0_i32_1 = arith.constant 0 : i32
    return %c0_i32, %c0_i32_0 : i32, i32
  }
  func.func @transform_12(%arg0: i32) -> (i32, i32) {
    %c0_i32 = arith.constant 0 : i32
    %c0_i32_0 = arith.constant 0 : i32
    %c0_i32_1 = arith.constant 0 : i32
    return %c0_i32, %c0_i32_0 : i32, i32
  }
  func.func @transform_13(%arg0: i32) -> (i32, i32) {
    %c0_i32 = arith.constant 0 : i32
    %c0_i32_0 = arith.constant 0 : i32
    %c0_i32_1 = arith.constant 0 : i32
    return %c0_i32, %c0_i32_0 : i32, i32
  }
  func.func @transform_14(%arg0: i32) -> (i32, i32) {
    %c0_i32 = arith.constant 0 : i32
    %c0_i32_0 = arith.constant 0 : i32
    %c0_i32_1 = arith.constant 0 : i32
    return %c0_i32, %c0_i32_0 : i32, i32
  }
  func.func @transform_15(%arg0: i32) -> (i32, i32) {
    %c0_i32 = arith.constant 0 : i32
    %c0_i32_0 = arith.constant 0 : i32
    %c0_i32_1 = arith.constant 0 : i32
    return %c0_i32, %c0_i32_0 : i32, i32
  }
  func.func @transform_16(%arg0: i32) -> (i32, i32) {
    %c0_i32 = arith.constant 0 : i32
    %c0_i32_0 = arith.constant 0 : i32
    %c0_i32_1 = arith.constant 0 : i32
    return %c0_i32, %c0_i32_0 : i32, i32
  }
  func.func @transform_17(%arg0: i32) -> (i32, i32) {
    %c0_i32 = arith.constant 0 : i32
    %c0_i32_0 = arith.constant 0 : i32
    %c0_i32_1 = arith.constant 0 : i32
    return %c0_i32, %c0_i32_0 : i32, i32
  }
  func.func @transform_18(%arg0: i32) -> (i32, i32) {
    %c0_i32 = arith.constant 0 : i32
    %c0_i32_0 = arith.constant 0 : i32
    %c0_i32_1 = arith.constant 0 : i32
    return %c0_i32, %c0_i32_0 : i32, i32
  }
  func.func @transform_19(%arg0: i32) -> (i32, i32) {
    %c0_i32 = arith.constant 0 : i32
    %c0_i32_0 = arith.constant 0 : i32
    %c0_i32_1 = arith.constant 0 : i32
    return %c0_i32, %c0_i32_0 : i32, i32
  }
  func.func @transform_20(%arg0: i32) -> (i32, i32) {
    %c0_i32 = arith.constant 0 : i32
    %c0_i32_0 = arith.constant 0 : i32
    %c0_i32_1 = arith.constant 0 : i32
    return %c0_i32, %c0_i32_0 : i32, i32
  }
  func.func @transform_21(%arg0: i32) -> (i32, i32) {
    %c0_i32 = arith.constant 0 : i32
    %c0_i32_0 = arith.constant 0 : i32
    %c0_i32_1 = arith.constant 0 : i32
    return %c0_i32, %c0_i32_0 : i32, i32
  }
  func.func @transform_22(%arg0: i32) -> (i32, i32, i32) {
    %c0_i32 = arith.constant 0 : i32
    %c0_i32_0 = arith.constant 0 : i32
    %c0_i32_1 = arith.constant 0 : i32
    return %arg0, %c0_i32, %c0_i32_0 : i32, i32, i32
  }
}

module attributes {stable_mosaic.version = 11 : i64} {
  func.func @_grounder_kernel(%arg0: memref<2x8x32xf32, #tpu.memory_space<vmem>>, %arg1: memref<2x8x32xf32, #tpu.memory_space<vmem>>, %arg2: memref<2x8x8xf32, #tpu.memory_space<vmem>>, %arg3: memref<2x8x8xf32, #tpu.memory_space<vmem>>, %arg4: memref<2x8x8xf32, #tpu.memory_space<vmem>>) attributes {dimension_semantics = [], scalar_prefetch = 0 : i64, scratch_operands = 0 : i64, tpu.core_type = #tpu.core_type<tc>} {
    %c0 = arith.constant 0 : index
    %c0_0 = arith.constant 0 : index
    %c0_1 = arith.constant 0 : index
    %0 = vector.load %arg0[%c0, %c0_0, %c0_1] : memref<2x8x32xf32, #tpu.memory_space<vmem>>, vector<2x8x32xf32>
    %c0_2 = arith.constant 0 : index
    %c0_3 = arith.constant 0 : index
    %c0_4 = arith.constant 0 : index
    %1 = vector.load %arg1[%c0_2, %c0_3, %c0_4] : memref<2x8x32xf32, #tpu.memory_space<vmem>>, vector<2x8x32xf32>
    "tpu.trace_start"() <{level = 10 : i32, message = "nse,nre->nsr"}> : () -> ()
    %cst = arith.constant dense<0.000000e+00> : vector<2x8x8xf32>
    %2 = tpu.matmul %0, %1, %cst {dimension_numbers = #tpu.dot_dimension_numbers<[2], [2], [1], [1], [0, 0, 0, 1, 1, 1], [0], [0]>} : vector<2x8x32xf32>, vector<2x8x32xf32>, vector<2x8x8xf32> -> vector<2x8x8xf32>
    "tpu.trace_stop"() : () -> ()
    %c0_5 = arith.constant 0 : index
    %c0_6 = arith.constant 0 : index
    %c0_7 = arith.constant 0 : index
    %3 = vector.load %arg2[%c0_5, %c0_6, %c0_7] : memref<2x8x8xf32, #tpu.memory_space<vmem>>, vector<2x8x8xf32>
    %4 = arith.addf %2, %3 : vector<2x8x8xf32>
    %c0_8 = arith.constant 0 : index
    %c0_9 = arith.constant 0 : index
    %c0_10 = arith.constant 0 : index
    %5 = vector.load %arg3[%c0_8, %c0_9, %c0_10] : memref<2x8x8xf32, #tpu.memory_space<vmem>>, vector<2x8x8xf32>
    %cst_11 = arith.constant 5.000000e-01 : f32
    %6 = vector.broadcast %cst_11 : f32 to vector<2x8x8xf32>
    %7 = arith.cmpf ogt, %5, %6 : vector<2x8x8xf32>
    %cst_12 = arith.constant -1.000000e+08 : f32
    %8 = vector.broadcast %cst_12 : f32 to vector<2x8x8xf32>
    %9 = arith.select %7, %8, %4 : vector<2x8x8xi1>, vector<2x8x8xf32>
    %c0_13 = arith.constant 0 : index
    %c0_14 = arith.constant 0 : index
    %c0_15 = arith.constant 0 : index
    %10 = vector.load %arg4[%c0_13, %c0_14, %c0_15] : memref<2x8x8xf32, #tpu.memory_space<vmem>>, vector<2x8x8xf32>
    tpu.vector_store %arg4[%c0_13, %c0_14, %c0_15], %9 {strides = array<i32>} : memref<2x8x8xf32, #tpu.memory_space<vmem>>, vector<2x8x8xf32>,
    return
  }
}

</mosaic_0001>

<llo_original>
// kernel: _forward_impl.3
$region0: #{_forward_impl.3}
  #allocation0 [shape = 'u32[]', space=smem, size = 0x4, offset = 0x4, fixed_abs, tag = 'smem constant byte address 0x4 - core index']
  #allocation1 [shape = 'u32[144,128]{1,0:T(1,128)}', space=vmem, size = 0x12000, scoped, tag = 'internal scratch']
  #allocation2 [shape = 'f32[2,32]{1,0:T(2,128)}', space=vmem, size = 0x400, scoped, tag = 'scratch operand']
  #allocation3 [shape = 'f32[2,32]{1,0:T(2,128)}', space=vmem, size = 0x400, scoped, tag = 'scratch operand']
  #allocation4 [shape = 'f32[2,32]{1,0:T(2,128)}', space=vmem, size = 0x400, scoped, tag = 'scratch operand']
  #allocation5 [shape = 'f32[2,32]{1,0:T(2,128)}', space=vmem, size = 0x400, scoped, tag = 'scratch operand']
  %s0 = inlined_call_operand.vmem [shape: f32[8,2,32], index: 0, kind: input, shape index: {}]
  %s1 = inlined_call_operand.vmem [shape: f32[8,2,8], index: 1, kind: input, shape index: {}]
  %s2 = inlined_call_operand.vmem [shape: f32[2,32], index: 2, kind: input, shape index: {}]
  %s3 = inlined_call_operand.vmem [shape: f32[2,6,32], index: 3, kind: input, shape index: {}]
  %s4 = inlined_call_operand.vmem [shape: f32[2,6,32], index: 4, kind: input, shape index: {}]
  %s5 = inlined_call_operand.vmem [shape: f32[2,8,32], index: 5, kind: input, shape index: {}]
  %s6 = inlined_call_operand.vmem [shape: f32[2,8,32], index: 6, kind: input, shape index: {}]
  %s7 = inlined_call_operand.vmem [shape: f32[128,128], index: 7, kind: input, shape index: {}]
  %s8 = inlined_call_operand.vmem [shape: f32[1,128], index: 8, kind: input, shape index: {}]
  %s9 = inlined_call_operand.vmem [shape: f32[128,128], index: 9, kind: input, shape index: {}]
  %s10 = inlined_call_operand.vmem [shape: f32[1,128], index: 10, kind: input, shape index: {}]
  %s11 = inlined_call_operand.vmem [shape: f32[32,32], index: 11, kind: input, shape index: {}]
  %s12 = inlined_call_operand.vmem [shape: f32[1,32], index: 12, kind: input, shape index: {}]
  %s13 = inlined_call_operand.vmem [shape: f32[1,32], index: 13, kind: input, shape index: {}]
  %s14 = inlined_call_operand.vmem [shape: f32[32,32], index: 14, kind: input, shape index: {}]
  %s15 = inlined_call_operand.vmem [shape: f32[1,32], index: 15, kind: input, shape index: {}]
  %s16 = inlined_call_operand.vmem [shape: f32[1,32], index: 16, kind: input, shape index: {}]
  %s17 = inlined_call_operand.vmem [shape: f32[32,21], index: 17, kind: input, shape index: {}]
  %s18 = inlined_call_operand.vmem [shape: f32[1,21], index: 18, kind: input, shape index: {}]
  %s19 = inlined_call_operand.vmem [shape: f32[8,2,21], index: 19, kind: output, shape index: {0}]
  %s20 = inlined_call_operand.vmem [shape: f32[8,2,8], index: 20, kind: output, shape index: {1}]
  %21 = xla_tuple %s19, %s20
  %s22 = sld [smem:[#allocation0]]
  $region121: #{_forward_impl.3} parent=0
    _
  %s24 = ssub.s32 1, %s22
  %s25 = scalar_select 0, %s24, %s22
  loop: start=0, step=1, limit=10
  $region2: #{_forward_impl.3} parent=0 // loop_pre_header
    _
  $region3: #{_forward_impl.3} parent=0 // loop_header
    %s27 = sphi 0, %s31
    %p28 = scmp.ge.s32.totalorder %s27, 10
    %s37 = sphi 0, %s39
    %s40 = sphi 0, %s37
    %s41 = sphi 0, %s40
    %s57 = sphi 0, %s41
    %s63 = sphi 0, %s65
    %s66 = sphi 0, %s63
    %s67 = sphi 0, %s66
    %s83 = sphi 0, %s67
    %s87 = sphi 0, %s87
    %s89 = sphi 0, %s87
    %s90 = sphi 0, %s89
    %s104 = sphi 0, %s90
    %s108 = sphi 0, %s108
    %s110 = sphi 0, %s108
    %s111 = sphi 0, %s110
    %s125 = sphi 0, %s111
    %s129 = sphi 0, %s129
    %s131 = sphi 0, %s129
    %s132 = sphi 0, %s131
    %s146 = sphi 0, %s132
    %s150 = sphi 0, %s150
    %s152 = sphi 0, %s150
    %s153 = sphi 0, %s152
    %s167 = sphi 0, %s153
    %s171 = sphi 0, %s171
    %s173 = sphi 0, %s171
    %s174 = sphi 0, %s173
    %s188 = sphi 0, %s174
    %s192 = sphi 0, %s192
    %s194 = sphi 0, %s192
    %s195 = sphi 0, %s194
    %s209 = sphi 0, %s195
    %s213 = sphi 0, %s213
    %s215 = sphi 0, %s213
    %s216 = sphi 0, %s215
    %s230 = sphi 0, %s216
    %s234 = sphi 0, %s234
    %s236 = sphi 0, %s234
    %s237 = sphi 0, %s236
    %s251 = sphi 0, %s237
    %s255 = sphi 0, %s255
    %s257 = sphi 0, %s255
    %s258 = sphi 0, %s257
    %s272 = sphi 0, %s258
    %s276 = sphi 0, %s276
    %s278 = sphi 0, %s276
    %s279 = sphi 0, %s278
    %s293 = sphi 0, %s279
    %s297 = sphi 0, %s297
    %s299 = sphi 0, %s297
    %s300 = sphi 0, %s299
    %s314 = sphi 0, %s300
    %s318 = sphi 0, %s318
    %s320 = sphi 0, %s318
    %s321 = sphi 0, %s320
    %s335 = sphi 0, %s321
    %s339 = sphi 0, %s339
    %s341 = sphi 0, %s339
    %s342 = sphi 0, %s341
    %s356 = sphi 0, %s342
    %s360 = sphi 0, %s360
    %s362 = sphi 0, %s360
    %s363 = sphi 0, %s362
    %s377 = sphi 0, %s363
    %s381 = sphi 0, %s381
    %s383 = sphi 0, %s381
    %s384 = sphi 0, %s383
    %s398 = sphi 0, %s384
    %s402 = sphi 0, %s402
    %s404 = sphi 0, %s402
    %s405 = sphi 0, %s404
    %s419 = sphi 0, %s405
    %s423 = sphi 0, %s423
    %s425 = sphi 0, %s423
    %s426 = sphi 0, %s425
    %s440 = sphi 0, %s426
    %s446 = sphi 0, %s448
    %s449 = sphi 0, %s446
    %s450 = sphi 0, %s449
    %s466 = sphi 0, %s450
    %s472 = sphi 0, %s474
    %s475 = sphi 0, %s472
    %s476 = sphi 0, %s475
    %s492 = sphi 0, %s476
  $region4: #{_forward_impl.3} parent=0 // loop_header_branch
    %30 = sbr.rel (%p28) target = $region8
  $region5: #{_forward_impl.3} parent=0 // loop_body
    %s32 = ssub.s32 %s27, 1
    %s33 = ssub.s32 %s27, 2
    %s34 = sadd.s32 %s27, 1
    %s35 = ssub.s32 %s27, %s34
    %p36 = scmp.eq.s32.totalorder %s35, 0
    %s38 = sadd.s32 %s37, 1
    %s39 = scalar_select %p36, %s37, %s38
    %p42 = pneg %p36
    %p43 = scmp.eq.s32.totalorder %s27, 7
    %p44 = por %p42, %p43
    %p45 = scmp.ne.s32.totalorder %s37, %s40
    %p46 = scmp.eq.s32.totalorder %s27, 0
    %p47 = por %p45, %p46
    %p48 = scmp.ne.s32.totalorder %s37, %s40
    %p49 = scmp.eq.s32.totalorder %s32, 7
    %p50 = por %p48, %p49
    %p51 = scmp.ne.s32.totalorder %s40, %s41
    %p52 = scmp.eq.s32.totalorder %s32, 0
    %p53 = por %p51, %p52
    %p54 = scmp.ne.s32.totalorder %s40, %s41
    %p55 = scmp.eq.s32.totalorder %s33, 7
    %p56 = por %p54, %p55
    %p58 = scmp.ne.s32.totalorder %s41, %s57
    %p59 = scmp.eq.s32.totalorder %s33, 0
    %p60 = por %p58, %p59
    %s61 = ssub.s32 %s27, %s34
    %p62 = scmp.eq.s32.totalorder %s61, 0
    %s64 = sadd.s32 %s63, 1
    %s65 = scalar_select %p62, %s63, %s64
    %p68 = pneg %p62
    %p69 = scmp.eq.s32.totalorder %s27, 7
    %p70 = por %p68, %p69
    %p71 = scmp.ne.s32.totalorder %s63, %s66
    %p72 = scmp.eq.s32.totalorder %s27, 0
    %p73 = por %p71, %p72
    %p74 = scmp.ne.s32.totalorder %s63, %s66
    %p75 = scmp.eq.s32.totalorder %s32, 7
    %p76 = por %p74, %p75
    %p77 = scmp.ne.s32.totalorder %s66, %s67
    %p78 = scmp.eq.s32.totalorder %s32, 0
    %p79 = por %p77, %p78
    %p80 = scmp.ne.s32.totalorder %s66, %s67
    %p81 = scmp.eq.s32.totalorder %s33, 7
    %p82 = por %p80, %p81
    %p84 = scmp.ne.s32.totalorder %s67, %s83
    %p85 = scmp.eq.s32.totalorder %s33, 0
    %p86 = por %p84, %p85
    %s88 = sadd.s32 %s87, 1
    %p91 = scmp.eq.s32.totalorder %s27, 7
    %p92 = scmp.ne.s32.totalorder %s87, %s89
    %p93 = scmp.eq.s32.totalorder %s27, 0
    %p94 = por %p92, %p93
    %p95 = scmp.ne.s32.totalorder %s87, %s89
    %p96 = scmp.eq.s32.totalorder %s32, 7
    %p97 = por %p95, %p96
    %p98 = scmp.ne.s32.totalorder %s89, %s90
    %p99 = scmp.eq.s32.totalorder %s32, 0
    %p100 = por %p98, %p99
    %p101 = scmp.ne.s32.totalorder %s89, %s90
    %p102 = scmp.eq.s32.totalorder %s33, 7
    %p103 = por %p101, %p102
    %p105 = scmp.ne.s32.totalorder %s90, %s104
    %p106 = scmp.eq.s32.totalorder %s33, 0
    %p107 = por %p105, %p106
    %s109 = sadd.s32 %s108, 1
    %p112 = scmp.eq.s32.totalorder %s27, 7
    %p113 = scmp.ne.s32.totalorder %s108, %s110
    %p114 = scmp.eq.s32.totalorder %s27, 0
    %p115 = por %p113, %p114
    %p116 = scmp.ne.s32.totalorder %s108, %s110
    %p117 = scmp.eq.s32.totalorder %s32, 7
    %p118 = por %p116, %p117
    %p119 = scmp.ne.s32.totalorder %s110, %s111
    %p120 = scmp.eq.s32.totalorder %s32, 0
    %p121 = por %p119, %p120
    %p122 = scmp.ne.s32.totalorder %s110, %s111
    %p123 = scmp.eq.s32.totalorder %s33, 7
    %p124 = por %p122, %p123
    %p126 = scmp.ne.s32.totalorder %s111, %s125
    %p127 = scmp.eq.s32.totalorder %s33, 0
    %p128 = por %p126, %p127
    %s130 = sadd.s32 %s129, 1
    %p133 = scmp.eq.s32.totalorder %s27, 7
    %p134 = scmp.ne.s32.totalorder %s129, %s131
    %p135 = scmp.eq.s32.totalorder %s27, 0
    %p136 = por %p134, %p135
    %p137 = scmp.ne.s32.totalorder %s129, %s131
    %p138 = scmp.eq.s32.totalorder %s32, 7
    %p139 = por %p137, %p138
    %p140 = scmp.ne.s32.totalorder %s131, %s132
    %p141 = scmp.eq.s32.totalorder %s32, 0
    %p142 = por %p140, %p141
    %p143 = scmp.ne.s32.totalorder %s131, %s132
    %p144 = scmp.eq.s32.totalorder %s33, 7
    %p145 = por %p143, %p144
    %p147 = scmp.ne.s32.totalorder %s132, %s146
    %p148 = scmp.eq.s32.totalorder %s33, 0
    %p149 = por %p147, %p148
    %s151 = sadd.s32 %s150, 1
    %p154 = scmp.eq.s32.totalorder %s27, 7
    %p155 = scmp.ne.s32.totalorder %s150, %s152
    %p156 = scmp.eq.s32.totalorder %s27, 0
    %p157 = por %p155, %p156
    %p158 = scmp.ne.s32.totalorder %s150, %s152
    %p159 = scmp.eq.s32.totalorder %s32, 7
    %p160 = por %p158, %p159
    %p161 = scmp.ne.s32.totalorder %s152, %s153
    %p162 = scmp.eq.s32.totalorder %s32, 0
    %p163 = por %p161, %p162
    %p164 = scmp.ne.s32.totalorder %s152, %s153
    %p165 = scmp.eq.s32.totalorder %s33, 7
    %p166 = por %p164, %p165
    %p168 = scmp.ne.s32.totalorder %s153, %s167
    %p169 = scmp.eq.s32.totalorder %s33, 0
    %p170 = por %p168, %p169
    %s172 = sadd.s32 %s171, 1
    %p175 = scmp.eq.s32.totalorder %s27, 7
    %p176 = scmp.ne.s32.totalorder %s171, %s173
    %p177 = scmp.eq.s32.totalorder %s27, 0
    %p178 = por %p176, %p177
    %p179 = scmp.ne.s32.totalorder %s171, %s173
    %p180 = scmp.eq.s32.totalorder %s32, 7
    %p181 = por %p179, %p180
    %p182 = scmp.ne.s32.totalorder %s173, %s174
    %p183 = scmp.eq.s32.totalorder %s32, 0
    %p184 = por %p182, %p183
    %p185 = scmp.ne.s32.totalorder %s173, %s174
    %p186 = scmp.eq.s32.totalorder %s33, 7
    %p187 = por %p185, %p186
    %p189 = scmp.ne.s32.totalorder %s174, %s188
    %p190 = scmp.eq.s32.totalorder %s33, 0
    %p191 = por %p189, %p190
    %s193 = sadd.s32 %s192, 1
    %p196 = scmp.eq.s32.totalorder %s27, 7
    %p197 = scmp.ne.s32.totalorder %s192, %s194
    %p198 = scmp.eq.s32.totalorder %s27, 0
    %p199 = por %p197, %p198
    %p200 = scmp.ne.s32.totalorder %s192, %s194
    %p201 = scmp.eq.s32.totalorder %s32, 7
    %p202 = por %p200, %p201
    %p203 = scmp.ne.s32.totalorder %s194, %s195
    %p204 = scmp.eq.s32.totalorder %s32, 0
    %p205 = por %p203, %p204
    %p206 = scmp.ne.s32.totalorder %s194, %s195
    %p207 = scmp.eq.s32.totalorder %s33, 7
    %p208 = por %p206, %p207
    %p210 = scmp.ne.s32.totalorder %s195, %s209
    %p211 = scmp.eq.s32.totalorder %s33, 0
    %p212 = por %p210, %p211
    %s214 = sadd.s32 %s213, 1
    %p217 = scmp.eq.s32.totalorder %s27, 7
    %p218 = scmp.ne.s32.totalorder %s213, %s215
    %p219 = scmp.eq.s32.totalorder %s27, 0
    %p220 = por %p218, %p219
    %p221 = scmp.ne.s32.totalorder %s213, %s215
    %p222 = scmp.eq.s32.totalorder %s32, 7
    %p223 = por %p221, %p222
    %p224 = scmp.ne.s32.totalorder %s215, %s216
    %p225 = scmp.eq.s32.totalorder %s32, 0
    %p226 = por %p224, %p225
    %p227 = scmp.ne.s32.totalorder %s215, %s216
    %p228 = scmp.eq.s32.totalorder %s33, 7
    %p229 = por %p227, %p228
    %p231 = scmp.ne.s32.totalorder %s216, %s230
    %p232 = scmp.eq.s32.totalorder %s33, 0
    %p233 = por %p231, %p232
    %s235 = sadd.s32 %s234, 1
    %p238 = scmp.eq.s32.totalorder %s27, 7
    %p239 = scmp.ne.s32.totalorder %s234, %s236
    %p240 = scmp.eq.s32.totalorder %s27, 0
    %p241 = por %p239, %p240
    %p242 = scmp.ne.s32.totalorder %s234, %s236
    %p243 = scmp.eq.s32.totalorder %s32, 7
    %p244 = por %p242, %p243
    %p245 = scmp.ne.s32.totalorder %s236, %s237
    %p246 = scmp.eq.s32.totalorder %s32, 0
    %p247 = por %p245, %p246
    %p248 = scmp.ne.s32.totalorder %s236, %s237
    %p249 = scmp.eq.s32.totalorder %s33, 7
    %p250 = por %p248, %p249
    %p252 = scmp.ne.s32.totalorder %s237, %s251
    %p253 = scmp.eq.s32.totalorder %s33, 0
    %p254 = por %p252, %p253
    %s256 = sadd.s32 %s255, 1
    %p259 = scmp.eq.s32.totalorder %s27, 7
    %p260 = scmp.ne.s32.totalorder %s255, %s257
    %p261 = scmp.eq.s32.totalorder %s27, 0
    %p262 = por %p260, %p261
    %p263 = scmp.ne.s32.totalorder %s255, %s257
    %p264 = scmp.eq.s32.totalorder %s32, 7
    %p265 = por %p263, %p264
    %p266 = scmp.ne.s32.totalorder %s257, %s258
    %p267 = scmp.eq.s32.totalorder %s32, 0
    %p268 = por %p266, %p267
    %p269 = scmp.ne.s32.totalorder %s257, %s258
    %p270 = scmp.eq.s32.totalorder %s33, 7
    %p271 = por %p269, %p270
    %p273 = scmp.ne.s32.totalorder %s258, %s272
    %p274 = scmp.eq.s32.totalorder %s33, 0
    %p275 = por %p273, %p274
    %s277 = sadd.s32 %s276, 1
    %p280 = scmp.eq.s32.totalorder %s27, 7
    %p281 = scmp.ne.s32.totalorder %s276, %s278
    %p282 = scmp.eq.s32.totalorder %s27, 0
    %p283 = por %p281, %p282
    %p284 = scmp.ne.s32.totalorder %s276, %s278
    %p285 = scmp.eq.s32.totalorder %s32, 7
    %p286 = por %p284, %p285
    %p287 = scmp.ne.s32.totalorder %s278, %s279
    %p288 = scmp.eq.s32.totalorder %s32, 0
    %p289 = por %p287, %p288
    %p290 = scmp.ne.s32.totalorder %s278, %s279
    %p291 = scmp.eq.s32.totalorder %s33, 7
    %p292 = por %p290, %p291
    %p294 = scmp.ne.s32.totalorder %s279, %s293
    %p295 = scmp.eq.s32.totalorder %s33, 0
    %p296 = por %p294, %p295
    %s298 = sadd.s32 %s297, 1
    %p301 = scmp.eq.s32.totalorder %s27, 7
    %p302 = scmp.ne.s32.totalorder %s297, %s299
    %p303 = scmp.eq.s32.totalorder %s27, 0
    %p304 = por %p302, %p303
    %p305 = scmp.ne.s32.totalorder %s297, %s299
    %p306 = scmp.eq.s32.totalorder %s32, 7
    %p307 = por %p305, %p306
    %p308 = scmp.ne.s32.totalorder %s299, %s300
    %p309 = scmp.eq.s32.totalorder %s32, 0
    %p310 = por %p308, %p309
    %p311 = scmp.ne.s32.totalorder %s299, %s300
    %p312 = scmp.eq.s32.totalorder %s33, 7
    %p313 = por %p311, %p312
    %p315 = scmp.ne.s32.totalorder %s300, %s314
    %p316 = scmp.eq.s32.totalorder %s33, 0
    %p317 = por %p315, %p316
    %s319 = sadd.s32 %s318, 1
    %p322 = scmp.eq.s32.totalorder %s27, 7
    %p323 = scmp.ne.s32.totalorder %s318, %s320
    %p324 = scmp.eq.s32.totalorder %s27, 0
    %p325 = por %p323, %p324
    %p326 = scmp.ne.s32.totalorder %s318, %s320
    %p327 = scmp.eq.s32.totalorder %s32, 7
    %p328 = por %p326, %p327
    %p329 = scmp.ne.s32.totalorder %s320, %s321
    %p330 = scmp.eq.s32.totalorder %s32, 0
    %p331 = por %p329, %p330
    %p332 = scmp.ne.s32.totalorder %s320, %s321
    %p333 = scmp.eq.s32.totalorder %s33, 7
    %p334 = por %p332, %p333
    %p336 = scmp.ne.s32.totalorder %s321, %s335
    %p337 = scmp.eq.s32.totalorder %s33, 0
    %p338 = por %p336, %p337
    %s340 = sadd.s32 %s339, 1
    %p343 = scmp.eq.s32.totalorder %s27, 7
    %p344 = scmp.ne.s32.totalorder %s339, %s341
    %p345 = scmp.eq.s32.totalorder %s27, 0
    %p346 = por %p344, %p345
    %p347 = scmp.ne.s32.totalorder %s339, %s341
    %p348 = scmp.eq.s32.totalorder %s32, 7
    %p349 = por %p347, %p348
    %p350 = scmp.ne.s32.totalorder %s341, %s342
    %p351 = scmp.eq.s32.totalorder %s32, 0
    %p352 = por %p350, %p351
    %p353 = scmp.ne.s32.totalorder %s341, %s342
    %p354 = scmp.eq.s32.totalorder %s33, 7
    %p355 = por %p353, %p354
    %p357 = scmp.ne.s32.totalorder %s342, %s356
    %p358 = scmp.eq.s32.totalorder %s33, 0
    %p359 = por %p357, %p358
    %s361 = sadd.s32 %s360, 1
    %p364 = scmp.eq.s32.totalorder %s27, 7
    %p365 = scmp.ne.s32.totalorder %s360, %s362
    %p366 = scmp.eq.s32.totalorder %s27, 0
    %p367 = por %p365, %p366
    %p368 = scmp.ne.s32.totalorder %s360, %s362
    %p369 = scmp.eq.s32.totalorder %s32, 7
    %p370 = por %p368, %p369
    %p371 = scmp.ne.s32.totalorder %s362, %s363
    %p372 = scmp.eq.s32.totalorder %s32, 0
    %p373 = por %p371, %p372
    %p374 = scmp.ne.s32.totalorder %s362, %s363
    %p375 = scmp.eq.s32.totalorder %s33, 7
    %p376 = por %p374, %p375
    %p378 = scmp.ne.s32.totalorder %s363, %s377
    %p379 = scmp.eq.s32.totalorder %s33, 0
    %p380 = por %p378, %p379
    %s382 = sadd.s32 %s381, 1
    %p385 = scmp.eq.s32.totalorder %s27, 7
    %p386 = scmp.ne.s32.totalorder %s381, %s383
    %p387 = scmp.eq.s32.totalorder %s27, 0
    %p388 = por %p386, %p387
    %p389 = scmp.ne.s32.totalorder %s381, %s383
    %p390 = scmp.eq.s32.totalorder %s32, 7
    %p391 = por %p389, %p390
    %p392 = scmp.ne.s32.totalorder %s383, %s384
    %p393 = scmp.eq.s32.totalorder %s32, 0
    %p394 = por %p392, %p393
    %p395 = scmp.ne.s32.totalorder %s383, %s384
    %p396 = scmp.eq.s32.totalorder %s33, 7
    %p397 = por %p395, %p396
    %p399 = scmp.ne.s32.totalorder %s384, %s398
    %p400 = scmp.eq.s32.totalorder %s33, 0
    %p401 = por %p399, %p400
    %s403 = sadd.s32 %s402, 1
    %p406 = scmp.eq.s32.totalorder %s27, 7
    %p407 = scmp.ne.s32.totalorder %s402, %s404
    %p408 = scmp.eq.s32.totalorder %s27, 0
    %p409 = por %p407, %p408
    %p410 = scmp.ne.s32.totalorder %s402, %s404
    %p411 = scmp.eq.s32.totalorder %s32, 7
    %p412 = por %p410, %p411
    %p413 = scmp.ne.s32.totalorder %s404, %s405
    %p414 = scmp.eq.s32.totalorder %s32, 0
    %p415 = por %p413, %p414
    %p416 = scmp.ne.s32.totalorder %s404, %s405
    %p417 = scmp.eq.s32.totalorder %s33, 7
    %p418 = por %p416, %p417
    %p420 = scmp.ne.s32.totalorder %s405, %s419
    %p421 = scmp.eq.s32.totalorder %s33, 0
    %p422 = por %p420, %p421
    %s424 = sadd.s32 %s423, 1
    %p427 = scmp.eq.s32.totalorder %s27, 7
    %p428 = scmp.ne.s32.totalorder %s423, %s425
    %p429 = scmp.eq.s32.totalorder %s27, 0
    %p430 = por %p428, %p429
    %p431 = scmp.ne.s32.totalorder %s423, %s425
    %p432 = scmp.eq.s32.totalorder %s32, 7
    %p433 = por %p431, %p432
    %p434 = scmp.ne.s32.totalorder %s425, %s426
    %p435 = scmp.eq.s32.totalorder %s32, 0
    %p436 = por %p434, %p435
    %p437 = scmp.ne.s32.totalorder %s425, %s426
    %p438 = scmp.eq.s32.totalorder %s33, 7
    %p439 = por %p437, %p438
    %p441 = scmp.ne.s32.totalorder %s426, %s440
    %p442 = scmp.eq.s32.totalorder %s33, 0
    %p443 = por %p441, %p442
    %s444 = ssub.s32 %s27, %s34
    %p445 = scmp.eq.s32.totalorder %s444, 0
    %s447 = sadd.s32 %s446, 1
    %s448 = scalar_select %p445, %s446, %s447
    %p451 = pneg %p445
    %p452 = scmp.eq.s32.totalorder %s27, 7
    %p453 = por %p451, %p452
    %p454 = scmp.ne.s32.totalorder %s446, %s449
    %p455 = scmp.eq.s32.totalorder %s27, 0
    %p456 = por %p454, %p455
    %p457 = scmp.ne.s32.totalorder %s446, %s449
    %p458 = scmp.eq.s32.totalorder %s32, 7
    %p459 = por %p457, %p458
    %p460 = scmp.ne.s32.totalorder %s449, %s450
    %p461 = scmp.eq.s32.totalorder %s32, 0
    %p462 = por %p460, %p461
    %p463 = scmp.ne.s32.totalorder %s449, %s450
    %p464 = scmp.eq.s32.totalorder %s33, 7
    %p465 = por %p463, %p464
    %p467 = scmp.ne.s32.totalorder %s450, %s466
    %p468 = scmp.eq.s32.totalorder %s33, 0
    %p469 = por %p467, %p468
    %s470 = ssub.s32 %s27, %s34
    %p471 = scmp.eq.s32.totalorder %s470, 0
    %s473 = sadd.s32 %s472, 1
    %s474 = scalar_select %p471, %s472, %s473
    %p477 = pneg %p471
    %p478 = scmp.eq.s32.totalorder %s27, 7
    %p479 = por %p477, %p478
    %p480 = scmp.ne.s32.totalorder %s472, %s475
    %p481 = scmp.eq.s32.totalorder %s27, 0
    %p482 = por %p480, %p481
    %p483 = scmp.ne.s32.totalorder %s472, %s475
    %p484 = scmp.eq.s32.totalorder %s32, 7
    %p485 = por %p483, %p484
    %p486 = scmp.ne.s32.totalorder %s475, %s476
    %p487 = scmp.eq.s32.totalorder %s32, 0
    %p488 = por %p486, %p487
    %p489 = scmp.ne.s32.totalorder %s475, %s476
    %p490 = scmp.eq.s32.totalorder %s33, 7
    %p491 = por %p489, %p490
    %p493 = scmp.ne.s32.totalorder %s476, %s492
    %p494 = scmp.eq.s32.totalorder %s33, 0
    %p495 = por %p493, %p494
    %p496 = scmp.le.s32.totalorder 1, %s27
    %p497 = scmp.lt.s32.totalorder %s27, 9
    %p498 = pnand %p496, %p497
    %p499 = pneg %p498
    // Predicated region
    $region9: #{_forward_impl.3} parent=5 // pred_check
      _
    $region10: #{_forward_impl.3} parent=5 // pred_check_branch
      %501 = sbr.rel (%p498) target = $region12
    $region11: #{_forward_impl.3} parent=5 // pred_region
      %s502 = ssub.s32 %s27, 1
      // Predicated region
      $region13: #{_forward_impl.3} parent=11 // pred_check
        %p503 = pneg %p100
      $region14: #{_forward_impl.3} parent=11 // pred_check_branch
        %505 = sbr.rel (%p503) target = $region16
      $region15: #{_forward_impl.3} parent=11 // pred_region
        _
      $region16: #{_forward_impl.3} parent=11 // pred_fallthru
        _
      // Predicated region
      $region17: #{_forward_impl.3} parent=11 // pred_check
        %p506 = pneg %p121
      $region18: #{_forward_impl.3} parent=11 // pred_check_branch
        %508 = sbr.rel (%p506) target = $region20
      $region19: #{_forward_impl.3} parent=11 // pred_region
        _
      $region20: #{_forward_impl.3} parent=11 // pred_fallthru
        _
      // Predicated region
      $region21: #{_forward_impl.3} parent=11 // pred_check
        %p509 = pneg %p142
      $region22: #{_forward_impl.3} parent=11 // pred_check_branch
        %511 = sbr.rel (%p509) target = $region24
      $region23: #{_forward_impl.3} parent=11 // pred_region
        _
      $region24: #{_forward_impl.3} parent=11 // pred_fallthru
        _
      // Predicated region
      $region25: #{_forward_impl.3} parent=11 // pred_check
        %p512 = pneg %p163
      $region26: #{_forward_impl.3} parent=11 // pred_check_branch
        %514 = sbr.rel (%p512) target = $region28
      $region27: #{_forward_impl.3} parent=11 // pred_region
        _
      $region28: #{_forward_impl.3} parent=11 // pred_fallthru
        _
      // Predicated region
      $region29: #{_forward_impl.3} parent=11 // pred_check
        %p515 = pneg %p184
      $region30: #{_forward_impl.3} parent=11 // pred_check_branch
        %517 = sbr.rel (%p515) target = $region32
      $region31: #{_forward_impl.3} parent=11 // pred_region
        _
      $region32: #{_forward_impl.3} parent=11 // pred_fallthru
        _
      // Predicated region
      $region33: #{_forward_impl.3} parent=11 // pred_check
        %p518 = pneg %p205
      $region34: #{_forward_impl.3} parent=11 // pred_check_branch
        %520 = sbr.rel (%p518) target = $region36
      $region35: #{_forward_impl.3} parent=11 // pred_region
        _
      $region36: #{_forward_impl.3} parent=11 // pred_fallthru
        _
      // Predicated region
      $region37: #{_forward_impl.3} parent=11 // pred_check
        %p521 = pneg %p226
      $region38: #{_forward_impl.3} parent=11 // pred_check_branch
        %523 = sbr.rel (%p521) target = $region40
      $region39: #{_forward_impl.3} parent=11 // pred_region
        _
      $region40: #{_forward_impl.3} parent=11 // pred_fallthru
        _
      // Predicated region
      $region41: #{_forward_impl.3} parent=11 // pred_check
        %p524 = pneg %p247
      $region42: #{_forward_impl.3} parent=11 // pred_check_branch
        %526 = sbr.rel (%p524) target = $region44
      $region43: #{_forward_impl.3} parent=11 // pred_region
        _
      $region44: #{_forward_impl.3} parent=11 // pred_fallthru
        _
      // Predicated region
      $region45: #{_forward_impl.3} parent=11 // pred_check
        %p527 = pneg %p268
      $region46: #{_forward_impl.3} parent=11 // pred_check_branch
        %529 = sbr.rel (%p527) target = $region48
      $region47: #{_forward_impl.3} parent=11 // pred_region
        _
      $region48: #{_forward_impl.3} parent=11 // pred_fallthru
        _
      // Predicated region
      $region49: #{_forward_impl.3} parent=11 // pred_check
        %p530 = pneg %p289
      $region50: #{_forward_impl.3} parent=11 // pred_check_branch
        %532 = sbr.rel (%p530) target = $region52
      $region51: #{_forward_impl.3} parent=11 // pred_region
        _
      $region52: #{_forward_impl.3} parent=11 // pred_fallthru
        _
      // Predicated region
      $region53: #{_forward_impl.3} parent=11 // pred_check
        %p533 = pneg %p310
      $region54: #{_forward_impl.3} parent=11 // pred_check_branch
        %535 = sbr.rel (%p533) target = $region56
      $region55: #{_forward_impl.3} parent=11 // pred_region
        _
      $region56: #{_forward_impl.3} parent=11 // pred_fallthru
        _
      // Predicated region
      $region57: #{_forward_impl.3} parent=11 // pred_check
        %p536 = pneg %p331
      $region58: #{_forward_impl.3} parent=11 // pred_check_branch
        %538 = sbr.rel (%p536) target = $region60
      $region59: #{_forward_impl.3} parent=11 // pred_region
        _
      $region60: #{_forward_impl.3} parent=11 // pred_fallthru
        _
      // Predicated region
      $region61: #{_forward_impl.3} parent=11 // pred_check
        %p539 = pneg %p352
      $region62: #{_forward_impl.3} parent=11 // pred_check_branch
        %541 = sbr.rel (%p539) target = $region64
      $region63: #{_forward_impl.3} parent=11 // pred_region
        _
      $region64: #{_forward_impl.3} parent=11 // pred_fallthru
        _
      // Predicated region
      $region65: #{_forward_impl.3} parent=11 // pred_check
        %p542 = pneg %p373
      $region66: #{_forward_impl.3} parent=11 // pred_check_branch
        %544 = sbr.rel (%p542) target = $region68
      $region67: #{_forward_impl.3} parent=11 // pred_region
        _
      $region68: #{_forward_impl.3} parent=11 // pred_fallthru
        _
      // Predicated region
      $region69: #{_forward_impl.3} parent=11 // pred_check
        %p545 = pneg %p394
      $region70: #{_forward_impl.3} parent=11 // pred_check_branch
        %547 = sbr.rel (%p545) target = $region72
      $region71: #{_forward_impl.3} parent=11 // pred_region
        _
      $region72: #{_forward_impl.3} parent=11 // pred_fallthru
        _
      // Predicated region
      $region73: #{_forward_impl.3} parent=11 // pred_check
        %p548 = pneg %p415
      $region74: #{_forward_impl.3} parent=11 // pred_check_branch
        %550 = sbr.rel (%p548) target = $region76
      $region75: #{_forward_impl.3} parent=11 // pred_region
        _
      $region76: #{_forward_impl.3} parent=11 // pred_fallthru
        _
      // Predicated region
      $region77: #{_forward_impl.3} parent=11 // pred_check
        %p551 = pneg %p436
      $region78: #{_forward_impl.3} parent=11 // pred_check_branch
        %553 = sbr.rel (%p551) target = $region80
      $region79: #{_forward_impl.3} parent=11 // pred_region
        _
      $region80: #{_forward_impl.3} parent=11 // pred_fallthru
        _
    $region12: #{_forward_impl.3} parent=5 // pred_fallthru
      _
    %p554 = scmp.lt.s32.totalorder %s27, 8
    // Predicated region
    $region81: #{_forward_impl.3} parent=5 // pred_check
      %p555 = pneg %p554
    $region82: #{_forward_impl.3} parent=5 // pred_check_branch
      %557 = sbr.rel (%p555) target = $region84
    $region83: #{_forward_impl.3} parent=5 // pred_region
      // Predicated region
      $region85: #{_forward_impl.3} parent=83 // pred_check
        %p558 = pneg %p47
      $region86: #{_forward_impl.3} parent=83 // pred_check_branch
        %560 = sbr.rel (%p558) target = $region88
      $region87: #{_forward_impl.3} parent=83 // pred_region
        %p561 = scmp.lt.s32.totalorder %s27, 7
        %s562 = scalar_select %p561, %s27, 7
        %s563 = smul.addr %s562, 2
        %s564 = scalar_lea.vmem %s0, %s563
      $region88: #{_forward_impl.3} parent=83 // pred_fallthru
        _
      // Predicated region
      $region89: #{_forward_impl.3} parent=83 // pred_check
        %p565 = pneg %p73
      $region90: #{_forward_impl.3} parent=83 // pred_check_branch
        %567 = sbr.rel (%p565) target = $region92
      $region91: #{_forward_impl.3} parent=83 // pred_region
        %p568 = scmp.lt.s32.totalorder %s27, 7
        %s569 = scalar_select %p568, %s27, 7
        %s570 = smul.addr %s569, 2
        %s571 = scalar_lea.vmem %s1, %s570
      $region92: #{_forward_impl.3} parent=83 // pred_fallthru
        _
    $region84: #{_forward_impl.3} parent=5 // pred_fallthru
      _
    %p572 = scmp.le.s32.totalorder 1, %s27
    %p573 = scmp.lt.s32.totalorder %s27, 9
    %p574 = pnand %p572, %p573
    %p575 = pneg %p574
    // Predicated region
    $region93: #{_forward_impl.3} parent=5 // pred_check
      _
    $region94: #{_forward_impl.3} parent=5 // pred_check_branch
      %577 = sbr.rel (%p574) target = $region96
    $region95: #{_forward_impl.3} parent=5 // pred_region
      %s578 = ssub.s32 %s27, 1
      %p579 = scmp.lt.s32.totalorder %s32, 7
      %s580 = scalar_select %p579, %s32, 7
      %s581 = smul.addr %s580, 2
      %s582 = scalar_lea.vmem %s0, %s581
      %p583 = pneg %p53
      %p584 = pneg %p50
      %p585 = scmp.lt.s32.totalorder %s32, 7
      %s586 = scalar_select %p585, %s32, 7
      %s587 = smul.addr %s586, 2
      %s588 = scalar_lea.vmem %s1, %s587
      %p589 = pneg %p79
      %p590 = pneg %p76
      %p591 = pneg %p100
      %p592 = pneg %p97
      %p593 = pneg %p121
      %p594 = pneg %p118
      %p595 = pneg %p142
      %p596 = pneg %p139
      %p597 = pneg %p163
      %p598 = pneg %p160
      %p599 = pneg %p184
      %p600 = pneg %p181
      %p601 = pneg %p205
      %p602 = pneg %p202
      %p603 = pneg %p226
      %p604 = pneg %p223
      %p605 = pneg %p247
      %p606 = pneg %p244
      %p607 = pneg %p268
      %p608 = pneg %p265
      %p609 = pneg %p289
      %p610 = pneg %p286
      %p611 = pneg %p310
      %p612 = pneg %p307
      %p613 = pneg %p331
      %p614 = pneg %p328
      %p615 = pneg %p352
      %p616 = pneg %p349
      %p617 = pneg %p373
      %p618 = pneg %p370
      %p619 = pneg %p394
      %p620 = pneg %p391
      %p621 = pneg %p415
      %p622 = pneg %p412
      %p623 = pneg %p436
      %p624 = pneg %p433
      %p625 = pneg %p462
      %p626 = pneg %p459
      %p627 = scmp.lt.s32.totalorder %s32, 7
      %s628 = scalar_select %p627, %s32, 7
      %s629 = smul.addr %s628, 2
      %s630 = scalar_lea.vmem %s19, %s629
      %p631 = pneg %p488
      %p632 = pneg %p485
      %p633 = scmp.lt.s32.totalorder %s32, 7
      %s634 = scalar_select %p633, %s32, 7
      %s635 = smul.addr %s634, 2
      %s636 = scalar_lea.vmem %s20, %s635
      %p637 = scmp.lt.s32.totalorder %s32, 7
      %s638 = scalar_select %p637, %s32, 7
      %s639 = smul.addr %s638, 2
      %s640 = scalar_lea.vmem %s0, %s639
      %p641 = scmp.lt.s32.totalorder %s32, 7
      %s642 = scalar_select %p641, %s32, 7
      %s643 = smul.addr %s642, 2
      %s644 = scalar_lea.vmem %s1, %s643
      %p645 = scmp.lt.s32.totalorder %s32, 7
      %s646 = scalar_select %p645, %s32, 7
      %s647 = smul.addr %s646, 2
      %s648 = scalar_lea.vmem %s19, %s647
      %p649 = scmp.lt.s32.totalorder %s32, 7
      %s650 = scalar_select %p649, %s32, 7
      %s651 = smul.addr %s650, 2
      %s652 = scalar_lea.vmem %s20, %s651
      %p653 = scmp.eq.s32.totalorder %s32, 0
      // Predicated region
      $region97: #{_forward_impl.3} parent=95 // pred_check
        %p654 = pneg %p653
      $region98: #{_forward_impl.3} parent=95 // pred_check_branch
        %656 = sbr.rel (%p654) target = $region100
      $region99: #{_forward_impl.3} parent=95 // pred_region
        %vm657 = vcmask 254976
        %658 = vst.msk [vmem:[#allocation2] sm:$0x3] %vm657, 0.0
        %659 = vst.msk [vmem:[#allocation3] sm:$0x3] %vm657, 0.0
        %660 = vst.msk [vmem:[#allocation4] sm:$0x3] %vm657, 0.0
        %661 = vst.msk [vmem:[#allocation5] sm:$0x3] %vm657, 0.0
      $region100: #{_forward_impl.3} parent=95 // pred_fallthru
        _
      %v662 = vld [vmem:[%s640] sm:$0x3]
      %v663 = vld [vmem:[%s2] sm:$0x3]
      %v664 = vld [vmem:[#allocation4] sm:$0x3]
      %v665 = vld [vmem:[#allocation2] sm:$0x3]
      %v666 = vld [vmem:[#allocation3] sm:$0x3]
      %668 = vrot.lane.b32.xlu0 %v663, 32
      %v669 = vpop.permute.xlu0 %668
      %672 = vrot.lane.b32.xlu0 %v662, 64
      %v673 = vpop.permute.xlu0 %672
      %676 = vrot.lane.b32.xlu0 %v665, 96
      %v677 = vpop.permute.xlu0 %676
      %vm679 = vcmask 261120
      %v680 = vsel %vm679, %v664, %v669
      %vm681 = vcmask 523264
      %v682 = vsel %vm681, %v680, %v673
      %vm683 = vcmask 785408
      %v684 = vsel %vm683, %v682, %v677
      %v685 = vld [vmem:[%s7] sm:$0xff]
      %v686 = vld [vmem:[%s7 + $0x8] sm:$0xff]
      %v687 = vld [vmem:[%s7 + $0x10] sm:$0xff]
      %v688 = vld [vmem:[%s7 + $0x18] sm:$0xff]
      %v689 = vld [vmem:[%s7 + $0x20] sm:$0xff]
      %v690 = vld [vmem:[%s7 + $0x28] sm:$0xff]
      %v691 = vld [vmem:[%s7 + $0x30] sm:$0xff]
      %v692 = vld [vmem:[%s7 + $0x38] sm:$0xff]
      %v693 = vld [vmem:[%s7 + $0x40] sm:$0xff]
      %v694 = vld [vmem:[%s7 + $0x48] sm:$0xff]
      %v695 = vld [vmem:[%s7 + $0x50] sm:$0xff]
      %v696 = vld [vmem:[%s7 + $0x58] sm:$0xff]
      %v697 = vld [vmem:[%s7 + $0x60] sm:$0xff]
      %v698 = vld [vmem:[%s7 + $0x68] sm:$0xff]
      %v699 = vld [vmem:[%s7 + $0x70] sm:$0xff]
      %v700 = vld [vmem:[%s7 + $0x78] sm:$0xff]
      %v701 = vld [vmem:[%s8] sm:$0x1]
      %v703 = vlaneseq
      %v704 = vshrl.u32 %v703, 7
      %v705 = vsub.s32 0, %v704
      %v706 = vrot.slane %v701, %v705
      %708 = vmatprep.subr.mxu0 0.0
      %709 = vmatpush1.msra.mxu0 %v700
      %710 = vmatprep.subr.mxu0 0.0
      %711 = vmatpush1.msra.mxu0 %v699
      %712 = vmatprep.subr.mxu0 0.0
      %713 = vmatpush1.msra.mxu0 %v698
      %714 = vmatprep.subr.mxu0 0.0
      %715 = vmatpush1.msra.mxu0 %v697
      %716 = vmatprep.subr.mxu0 0.0
      %717 = vmatpush1.msra.mxu0 %v696
      %718 = vmatprep.subr.mxu0 0.0
      %719 = vmatpush1.msra.mxu0 %v695
      %720 = vmatprep.subr.mxu0 0.0
      %721 = vmatpush1.msra.mxu0 %v694
      %722 = vmatprep.subr.mxu0 0.0
      %723 = vmatpush1.msra.mxu0 %v693
      %724 = vmatprep.subr.mxu0 0.0
      %725 = vmatpush1.msra.mxu0 %v692
      %726 = vmatprep.subr.mxu0 0.0
      %727 = vmatpush1.msra.mxu0 %v691
      %728 = vmatprep.subr.mxu0 0.0
      %729 = vmatpush1.msra.mxu0 %v690
      %730 = vmatprep.subr.mxu0 0.0
      %731 = vmatpush1.msra.mxu0 %v689
      %732 = vmatprep.subr.mxu0 0.0
      %733 = vmatpush1.msra.mxu0 %v688
      %734 = vmatprep.subr.mxu0 0.0
      %735 = vmatpush1.msra.mxu0 %v687
      %736 = vmatprep.subr.mxu0 0.0
      %737 = vmatpush1.msra.mxu0 %v686
      %738 = vmatprep.subr.mxu0 0.0
      %739 = vmatpush1.msra.mxu0 %v685
      %740 = vmatprep.subr.mxu0 0.0
      %741 = vmatpush2.msra.mxu0 0.0
      %742 = vmatprep.subr.mxu0 0.0
      %743 = vmatpush2.msra.mxu0 0.0
      %744 = vmatprep.subr.mxu0 0.0
      %745 = vmatpush2.msra.mxu0 0.0
      %746 = vmatprep.subr.mxu0 0.0
      %747 = vmatpush2.msra.mxu0 0.0
      %748 = vmatprep.subr.mxu0 0.0
      %749 = vmatpush2.msra.mxu0 0.0
      %750 = vmatprep.subr.mxu0 0.0
      %751 = vmatpush2.msra.mxu0 0.0
      %752 = vmatprep.subr.mxu0 0.0
      %753 = vmatpush2.msra.mxu0 0.0
      %754 = vmatprep.subr.mxu0 0.0
      %755 = vmatpush2.msra.mxu0 0.0
      %756 = vmatprep.subr.mxu0 0.0
      %757 = vmatpush2.msra.mxu0 0.0
      %758 = vmatprep.subr.mxu0 0.0
      %759 = vmatpush2.msra.mxu0 0.0
      %760 = vmatprep.subr.mxu0 0.0
      %761 = vmatpush2.msra.mxu0 0.0
      %762 = vmatprep.subr.mxu0 0.0
      %763 = vmatpush2.msra.mxu0 0.0
      %764 = vmatprep.subr.mxu0 0.0
      %765 = vmatpush2.msra.mxu0 0.0
      %766 = vmatprep.subr.mxu0 0.0
      %767 = vmatpush2.msra.mxu0 0.0
      %768 = vmatprep.subr.mxu0 0.0
      %769 = vmatpush2.msra.mxu0 0.0
      %770 = vmatprep.subr.mxu0 0.0
      %771 = vmatpush2.msra.mxu0 0.0
      %772 = vmatprep.mubr.f32.mxu0 0.0
      %773 = vmatmul.mubr.f32.gmra.mxu0 %v684
      %v774 = vpop.f32.mrf.mxu0
      %v775 = vadd.f32 %v706, %v774
      %v776 = vpop.f32.mrf.mxu0
      %777 = vdwg.mxu0
      %v778 = vxor.u32 %v775, 2147483648
      %v779 = vmul.f32 %v778, 1.442695
      %v780 = vpow.pop %v779
      %v781 = vadd.f32 %v780, 1.0
      %v782 = vrcp.pop %v781
      %v783 = vmul.f32 1.0, %v782
      %v784 = vtanh.pop %v775
      %786 = vrot.lane.b32.xlu0 %v666, 32
      %v787 = vpop.permute.xlu0 %786
      %v789 = vmul.f32 %v783, %v787
      %791 = vrot.lane.b32.xlu0 %v784, 64
      %v792 = vpop.permute.xlu0 %791
      %v794 = vmul.f32 %v783, %v792
      %796 = vrot.lane.b32.xlu0 %v794, 32
      %v797 = vpop.permute.xlu0 %796
      %v799 = vadd.f32 %v789, %v797
      %v800 = vtanh.pop %v799
      %802 = vrot.lane.b32.xlu0 %v800, 64
      %v803 = vpop.permute.xlu0 %802
      %v805 = vmul.f32 %v783, %v803
      %v806 = vld [vmem:[%s4] sm:$0x3f]
      %v807 = vld [vmem:[%s4 + $0x8] sm:$0x3f]
      %v808 = vld [vmem:[%s11] sm:$0xff]
      %v809 = vld [vmem:[%s11 + $0x8] sm:$0xff]
      %v810 = vld [vmem:[%s11 + $0x10] sm:$0xff]
      %v811 = vld [vmem:[%s11 + $0x18] sm:$0xff]
      %v812 = vld [vmem:[%s12] sm:$0x1]
      %v814 = vlaneseq
      %v815 = vshrl.u32 %v814, 7
      %v816 = vsub.s32 0, %v815
      %v817 = vrot.slane %v812, %v816
      %820 = vrot.lane.b32.xlu0 %v805, 32
      %v821 = vpop.permute.xlu0 %820
      %v822 = vsel %vm679, %v821, 0
      %824 = vmatprep.subr.mxu0 0.0
      %825 = vmatpush1.msra.mxu0 0.0
      %826 = vmatprep.subr.mxu0 0.0
      %827 = vmatpush1.msra.mxu0 0.0
      %828 = vmatprep.subr.mxu0 0.0
      %829 = vmatpush1.msra.mxu0 0.0
      %830 = vmatprep.subr.mxu0 0.0
      %831 = vmatpush1.msra.mxu0 0.0
      %832 = vmatprep.subr.mxu0 0.0
      %833 = vmatpush1.msra.mxu0 0.0
      %834 = vmatprep.subr.mxu0 0.0
      %835 = vmatpush1.msra.mxu0 0.0
      %836 = vmatprep.subr.mxu0 0.0
      %837 = vmatpush1.msra.mxu0 0.0
      %838 = vmatprep.subr.mxu0 0.0
      %839 = vmatpush1.msra.mxu0 0.0
      %840 = vmatprep.subr.mxu0 0.0
      %841 = vmatpush1.msra.mxu0 0.0
      %842 = vmatprep.subr.mxu0 0.0
      %843 = vmatpush1.msra.mxu0 0.0
      %844 = vmatprep.subr.mxu0 0.0
      %845 = vmatpush1.msra.mxu0 0.0
      %846 = vmatprep.subr.mxu0 0.0
      %847 = vmatpush1.msra.mxu0 0.0
      %848 = vmatprep.subr.mxu0 0.0
      %849 = vmatpush1.msra.mxu0 %v811
      %850 = vmatprep.subr.mxu0 0.0
      %851 = vmatpush1.msra.mxu0 %v810
      %852 = vmatprep.subr.mxu0 0.0
      %853 = vmatpush1.msra.mxu0 %v809
      %854 = vmatprep.subr.mxu0 0.0
      %855 = vmatpush1.msra.mxu0 %v808
      %856 = vmatprep.subr.mxu0 0.0
      %857 = vmatpush2.msra.mxu0 0.0
      %858 = vmatprep.subr.mxu0 0.0
      %859 = vmatpush2.msra.mxu0 0.0
      %860 = vmatprep.subr.mxu0 0.0
      %861 = vmatpush2.msra.mxu0 0.0
      %862 = vmatprep.subr.mxu0 0.0
      %863 = vmatpush2.msra.mxu0 0.0
      %864 = vmatprep.subr.mxu0 0.0
      %865 = vmatpush2.msra.mxu0 0.0
      %866 = vmatprep.subr.mxu0 0.0
      %867 = vmatpush2.msra.mxu0 0.0
      %868 = vmatprep.subr.mxu0 0.0
      %869 = vmatpush2.msra.mxu0 0.0
      %870 = vmatprep.subr.mxu0 0.0
      %871 = vmatpush2.msra.mxu0 0.0
      %872 = vmatprep.subr.mxu0 0.0
      %873 = vmatpush2.msra.mxu0 0.0
      %874 = vmatprep.subr.mxu0 0.0
      %875 = vmatpush2.msra.mxu0 0.0
      %876 = vmatprep.subr.mxu0 0.0
      %877 = vmatpush2.msra.mxu0 0.0
      %878 = vmatprep.subr.mxu0 0.0
      %879 = vmatpush2.msra.mxu0 0.0
      %880 = vmatprep.subr.mxu0 0.0
      %881 = vmatpush2.msra.mxu0 0.0
      %882 = vmatprep.subr.mxu0 0.0
      %883 = vmatpush2.msra.mxu0 0.0
      %884 = vmatprep.subr.mxu0 0.0
      %885 = vmatpush2.msra.mxu0 0.0
      %886 = vmatprep.subr.mxu0 0.0
      %887 = vmatpush2.msra.mxu0 0.0
      %888 = vmatprep.mubr.f32.mxu0 0.0
      %889 = vmatmul.mubr.f32.gmra.mxu0 %v822
      %v890 = vpop.f32.mrf.mxu0
      %v891 = vadd.f32 %v817, %v890
      %v892 = vpop.f32.mrf.mxu0
      %893 = vdwg.mxu0
      %v896 = vunpack.c.l.s4 1966171168
      %v897 = vunpack.c.0.s8 %v896
      %v898 = vlaneseq
      %v899 = vshrl.u32 %v898, 7
      %v900 = vsub.s32 %v897, %v899
      %v901 = vrot.slane %v891, %v900
      %v902 = vcombine.high %v901, %v901
      %v904 = vunpack.c.l.s4 1966171168
      %v905 = vunpack.c.0.s8 %v904
      %v906 = vlaneseq
      %v907 = vshrl.u32 %v906, 7
      %v908 = vsub.s32 %v905, %v907
      %v909 = vrot.slane %v901, %v908
      %v911 = vunpack.c.l.s4 1966171168
      %v912 = vunpack.c.0.s8 %v911
      %v913 = vlaneseq
      %v914 = vshrl.u32 %v913, 7
      %v915 = vsub.s32 %v912, %v914
      %v916 = vrot.slane %v902, %v915
      %v917 = vlaneseq
      %v918 = vshrl.u32 %v917, 7
      %v919 = vsub.s32 0, %v918
      %v920 = vrot.slane %v909, %v919
      %v921 = vlaneseq
      %v922 = vshrl.u32 %v921, 7
      %v923 = vsub.s32 0, %v922
      %v924 = vrot.slane %v916, %v923
      %v927 = vadd.f32 %v806, %v920
      %v928 = vadd.f32 %v807, %v924
      %v929 = vtanh.pop %v927
      %v930 = vtanh.pop %v928
      %v931 = vld [vmem:[%s13] sm:$0x1]
      %v933 = vlaneseq
      %v934 = vshrl.u32 %v933, 7
      %v935 = vsub.s32 0, %v934
      %v936 = vrot.slane %v931, %v935
      %v938 = vmul.f32 %v929, %v936
      %v939 = vmul.f32 %v930, %v936
      %vm940 = vcmask 259072
      %v941 = vsel %vm940, %v938, 0.0
      %942 = vadd.xlane.f32.xlu0 %v941
      %v943 = vpop.xlane.xlu0 %942
      %v944 = vsel %vm940, %v939, 0.0
      %945 = vadd.xlane.f32.xlu0 %v944
      %v946 = vpop.xlane.xlu0 %945
      %v947 = vld [vmem:[%s3] sm:$0x3f]
      %v948 = vld [vmem:[%s3 + $0x8] sm:$0x3f]
      %v951 = vlaneseq
      %v952 = vand.u32 %v951, 127
      %v953 = vlaneseq
      %v954 = vshrl.u32 %v953, 7
      %v955 = vsub.s32 %v952, %v954
      %v956 = vrot.slane %v943, %v955
      %v957 = vlaneseq
      %v958 = vshrl.u32 %v957, 7
      %v959 = vsub.s32 %v952, %v958
      %v960 = vrot.slane %v946, %v959
      %vm961 = vcmask 1041409
      %v962 = vsel %vm961, %v960, %v956
      %vm964 = vcmask 41984
      %v965 = vsel %vm964, %v962, -inf
      %966 = vmax.xlane.f32.xlu0 %v965
      %v967 = vpop.xlane.xlu0 %966
      %v969 = vlaneseq
      %v970 = vshrl.u32 %v969, 7
      %v971 = vsub.s32 0, %v970
      %v972 = vrot.slane %v967, %v971
      %v973 = vlaneseq
      %v974 = vshrl.u32 %v973, 7
      %v975 = vsub.s32 1, %v974
      %v976 = vrot.slane %v967, %v975
      %v979 = vsub.f32 %v943, %v972
      %v980 = vsub.f32 %v946, %v976
      %v981 = vmul.f32 %v979, 1.442695
      %v982 = vpow.pop %v981
      %v983 = vmul.f32 %v980, 1.442695
      %v984 = vpow.pop %v983
      %987 = vset.pattern.permute.xlu0 0
      %988 = vperm.xlu0 %987, %v982
      %v989 = vpop.permute.xlu0 %988
      %990 = vset.pattern.permute.xlu0 0
      %991 = vperm.xlu0 %990, %v984
      %v992 = vpop.permute.xlu0 %991
      %v993 = vlaneseq
      %v994 = vshrl.u32 %v993, 7
      %v995 = vsub.s32 %v952, %v994
      %v996 = vrot.slane %v989, %v995
      %v997 = vlaneseq
      %v998 = vshrl.u32 %v997, 7
      %v999 = vsub.s32 %v952, %v998
      %v1000 = vrot.slane %v992, %v999
      %v1001 = vsel %vm961, %v1000, %v996
      %v1003 = vsel %vm964, %v1001, 0.0
      %1004 = vadd.xlane.f32.xlu0 %v1003
      %v1005 = vpop.xlane.xlu0 %1004
      %v1007 = vlaneseq
      %v1008 = vshrl.u32 %v1007, 7
      %v1009 = vsub.s32 0, %v1008
      %v1010 = vrot.slane %v1005, %v1009
      %v1011 = vlaneseq
      %v1012 = vshrl.u32 %v1011, 7
      %v1013 = vsub.s32 1, %v1012
      %v1014 = vrot.slane %v1005, %v1013
      %v1017 = vrcp.pop %v1010
      %v1018 = vmul.f32 %v982, %v1017
      %v1019 = vrcp.pop %v1014
      %v1020 = vmul.f32 %v984, %v1019
      %1022 = vset.pattern.permute.xlu0 0
      %1023 = vperm.xlu0 %1022, %v1018
      %v1024 = vpop.permute.xlu0 %1023
      %1027 = vset.pattern.permute.xlu0 0
      %1028 = vperm.xlu0 %1027, %v1020
      %v1029 = vpop.permute.xlu0 %1028
      %v1031 = vmul.f32 %v1024, %v947
      %v1032 = vmul.f32 %v1029, %v948
      %v1033 = vsel %vm940, %v1031, 0.0
      %v1034 = vrot.slane %v1033, 4
      %v1035 = vadd.f32 %v1033, %v1034
      %v1036 = vrot.slane %v1035, 2
      %v1037 = vadd.f32 %v1035, %v1036
      %v1038 = vrot.slane %v1037, 1
      %v1039 = vadd.f32 %v1037, %v1038
      %v1040 = vsel %vm940, %v1032, 0.0
      %v1041 = vrot.slane %v1040, 4
      %v1042 = vadd.f32 %v1040, %v1041
      %v1043 = vrot.slane %v1042, 2
      %v1044 = vadd.f32 %v1042, %v1043
      %v1045 = vrot.slane %v1044, 1
      %v1046 = vadd.f32 %v1044, %v1045
      %v1047 = vld [vmem:[%s6] sm:$0xff]
      %v1048 = vld [vmem:[%s6 + $0x8] sm:$0xff]
      %v1049 = vld [vmem:[%s14] sm:$0xff]
      %v1050 = vld [vmem:[%s14 + $0x8] sm:$0xff]
      %v1051 = vld [vmem:[%s14 + $0x10] sm:$0xff]
      %v1052 = vld [vmem:[%s14 + $0x18] sm:$0xff]
      %v1053 = vld [vmem:[%s15] sm:$0x1]
      %v1055 = vlaneseq
      %v1056 = vshrl.u32 %v1055, 7
      %v1057 = vsub.s32 0, %v1056
      %v1058 = vrot.slane %v1053, %v1057
      %1060 = vmatprep.subr.mxu0 0.0
      %1061 = vmatpush1.msra.mxu0 0.0
      %1062 = vmatprep.subr.mxu0 0.0
      %1063 = vmatpush1.msra.mxu0 0.0
      %1064 = vmatprep.subr.mxu0 0.0
      %1065 = vmatpush1.msra.mxu0 0.0
      %1066 = vmatprep.subr.mxu0 0.0
      %1067 = vmatpush1.msra.mxu0 0.0
      %1068 = vmatprep.subr.mxu0 0.0
      %1069 = vmatpush1.msra.mxu0 0.0
      %1070 = vmatprep.subr.mxu0 0.0
      %1071 = vmatpush1.msra.mxu0 0.0
      %1072 = vmatprep.subr.mxu0 0.0
      %1073 = vmatpush1.msra.mxu0 0.0
      %1074 = vmatprep.subr.mxu0 0.0
      %1075 = vmatpush1.msra.mxu0 0.0
      %1076 = vmatprep.subr.mxu0 0.0
      %1077 = vmatpush1.msra.mxu0 0.0
      %1078 = vmatprep.subr.mxu0 0.0
      %1079 = vmatpush1.msra.mxu0 0.0
      %1080 = vmatprep.subr.mxu0 0.0
      %1081 = vmatpush1.msra.mxu0 0.0
      %1082 = vmatprep.subr.mxu0 0.0
      %1083 = vmatpush1.msra.mxu0 0.0
      %1084 = vmatprep.subr.mxu0 0.0
      %1085 = vmatpush1.msra.mxu0 %v1052
      %1086 = vmatprep.subr.mxu0 0.0
      %1087 = vmatpush1.msra.mxu0 %v1051
      %1088 = vmatprep.subr.mxu0 0.0
      %1089 = vmatpush1.msra.mxu0 %v1050
      %1090 = vmatprep.subr.mxu0 0.0
      %1091 = vmatpush1.msra.mxu0 %v1049
      %1092 = vmatprep.subr.mxu0 0.0
      %1093 = vmatpush2.msra.mxu0 0.0
      %1094 = vmatprep.subr.mxu0 0.0
      %1095 = vmatpush2.msra.mxu0 0.0
      %1096 = vmatprep.subr.mxu0 0.0
      %1097 = vmatpush2.msra.mxu0 0.0
      %1098 = vmatprep.subr.mxu0 0.0
      %1099 = vmatpush2.msra.mxu0 0.0
      %1100 = vmatprep.subr.mxu0 0.0
      %1101 = vmatpush2.msra.mxu0 0.0
      %1102 = vmatprep.subr.mxu0 0.0
      %1103 = vmatpush2.msra.mxu0 0.0
      %1104 = vmatprep.subr.mxu0 0.0
      %1105 = vmatpush2.msra.mxu0 0.0
      %1106 = vmatprep.subr.mxu0 0.0
      %1107 = vmatpush2.msra.mxu0 0.0
      %1108 = vmatprep.subr.mxu0 0.0
      %1109 = vmatpush2.msra.mxu0 0.0
      %1110 = vmatprep.subr.mxu0 0.0
      %1111 = vmatpush2.msra.mxu0 0.0
      %1112 = vmatprep.subr.mxu0 0.0
      %1113 = vmatpush2.msra.mxu0 0.0
      %1114 = vmatprep.subr.mxu0 0.0
      %1115 = vmatpush2.msra.mxu0 0.0
      %1116 = vmatprep.subr.mxu0 0.0
      %1117 = vmatpush2.msra.mxu0 0.0
      %1118 = vmatprep.subr.mxu0 0.0
      %1119 = vmatpush2.msra.mxu0 0.0
      %1120 = vmatprep.subr.mxu0 0.0
      %1121 = vmatpush2.msra.mxu0 0.0
      %1122 = vmatprep.subr.mxu0 0.0
      %1123 = vmatpush2.msra.mxu0 0.0
      %1124 = vmatprep.mubr.f32.mxu0 0.0
      %1125 = vmatmul.mubr.f32.gmra.mxu0 %v822
      %v1126 = vpop.f32.mrf.mxu0
      %v1127 = vadd.f32 %v1058, %v1126
      %v1128 = vpop.f32.mrf.mxu0
      %1129 = vdwg.mxu0
      %v1132 = vunpack.c.l.s4 1966171168
      %v1133 = vunpack.c.0.s8 %v1132
      %v1134 = vlaneseq
      %v1135 = vshrl.u32 %v1134, 7
      %v1136 = vsub.s32 %v1133, %v1135
      %v1137 = vrot.slane %v1127, %v1136
      %v1138 = vcombine.high %v1137, %v1137
      %v1140 = vunpack.c.l.s4 1966171168
      %v1141 = vunpack.c.0.s8 %v1140
      %v1142 = vlaneseq
      %v1143 = vshrl.u32 %v1142, 7
      %v1144 = vsub.s32 %v1141, %v1143
      %v1145 = vrot.slane %v1137, %v1144
      %v1147 = vunpack.c.l.s4 1966171168
      %v1148 = vunpack.c.0.s8 %v1147
      %v1149 = vlaneseq
      %v1150 = vshrl.u32 %v1149, 7
      %v1151 = vsub.s32 %v1148, %v1150
      %v1152 = vrot.slane %v1138, %v1151
      %v1153 = vlaneseq
      %v1154 = vshrl.u32 %v1153, 7
      %v1155 = vsub.s32 0, %v1154
      %v1156 = vrot.slane %v1145, %v1155
      %v1157 = vlaneseq
      %v1158 = vshrl.u32 %v1157, 7
      %v1159 = vsub.s32 0, %v1158
      %v1160 = vrot.slane %v1152, %v1159
      %v1163 = vadd.f32 %v1047, %v1156
      %v1164 = vadd.f32 %v1048, %v1160
      %v1165 = vtanh.pop %v1163
      %v1166 = vtanh.pop %v1164
      %v1167 = vld [vmem:[%s16] sm:$0x1]
      %v1169 = vlaneseq
      %v1170 = vshrl.u32 %v1169, 7
      %v1171 = vsub.s32 0, %v1170
      %v1172 = vrot.slane %v1167, %v1171
      %v1174 = vmul.f32 %v1165, %v1172
      %v1175 = vmul.f32 %v1166, %v1172
      %v1176 = vsel %vm679, %v1174, 0.0
      %1177 = vadd.xlane.f32.xlu0 %v1176
      %v1178 = vpop.xlane.xlu0 %1177
      %v1179 = vsel %vm679, %v1175, 0.0
      %1180 = vadd.xlane.f32.xlu0 %v1179
      %v1181 = vpop.xlane.xlu0 %1180
      %v1182 = vld [vmem:[%s644] sm:$0x3]
      %v1183 = vld [vmem:[%s5] sm:$0xff]
      %v1184 = vld [vmem:[%s5 + $0x8] sm:$0xff]
      %vm1185 = vcmp.gt.f32.partialorder %v1182, 0.5
      %v1188 = vlaneseq
      %v1189 = vshrl.u32 %v1188, 7
      %v1190 = vsub.s32 %v952, %v1189
      %v1191 = vrot.slane %v1178, %v1190
      %v1192 = vlaneseq
      %v1193 = vshrl.u32 %v1192, 7
      %v1194 = vsub.s32 %v952, %v1193
      %v1195 = vrot.slane %v1181, %v1194
      %v1196 = vsel %vm961, %v1195, %v1191
      %v1198 = vsel %vm1185, -1e+08, %v1196
      %vm1199 = vcmask 58368
      %v1200 = vsel %vm1199, %v1198, -inf
      %1201 = vmax.xlane.f32.xlu0 %v1200
      %v1202 = vpop.xlane.xlu0 %1201
      %v1203 = vsub.f32 %v1198, %v1202
      %v1204 = vmul.f32 %v1203, 1.442695
      %v1205 = vpow.pop %v1204
      %v1206 = vsel %vm1199, %v1205, 0.0
      %1207 = vadd.xlane.f32.xlu0 %v1206
      %v1208 = vpop.xlane.xlu0 %1207
      %v1209 = vrcp.pop %v1208
      %v1210 = vmul.f32 %v1205, %v1209
      %v1211 = vlaneseq
      %v1212 = vshrl.u32 %v1211, 7
      %v1213 = vsub.s32 0, %v1212
      %v1214 = vrot.slane %v1210, %v1213
      %1216 = vbcast.lane.b32.xlu0 %v1214, 256
      %v1217 = vpop.permute.xlu0 %1216
      %v1218 = vlaneseq
      %v1219 = vshrl.u32 %v1218, 7
      %v1220 = vsub.s32 1, %v1219
      %v1221 = vrot.slane %v1210, %v1220
      %1223 = vbcast.lane.b32.xlu0 %v1221, 256
      %v1224 = vpop.permute.xlu0 %1223
      %v1225 = vmul.f32 %v1217, %v1183
      %v1226 = vmul.f32 %v1224, %v1184
      %v1227 = vsel %vm679, %v1225, 0.0
      %v1228 = vrot.slane %v1227, 4
      %v1229 = vadd.f32 %v1227, %v1228
      %v1230 = vrot.slane %v1229, 2
      %v1231 = vadd.f32 %v1229, %v1230
      %v1232 = vrot.slane %v1231, 1
      %v1233 = vadd.f32 %v1231, %v1232
      %v1234 = vsel %vm679, %v1226, 0.0
      %v1235 = vrot.slane %v1234, 4
      %v1236 = vadd.f32 %v1234, %v1235
      %v1237 = vrot.slane %v1236, 2
      %v1238 = vadd.f32 %v1236, %v1237
      %v1239 = vrot.slane %v1238, 1
      %v1240 = vadd.f32 %v1238, %v1239
      %v1241 = vld [vmem:[#allocation5] sm:$0x3]
      %v1244 = vsel %vm961, %v1046, %v1039
      %v1248 = vsel %vm961, %v1240, %v1233
      %1249 = vrot.lane.b32.xlu0 %v1248, 32
      %v1250 = vpop.permute.xlu0 %1249
      %1252 = vrot.lane.b32.xlu0 %v805, 96
      %v1253 = vpop.permute.xlu0 %1252
      %1256 = vrot.lane.b32.xlu0 %v664, 96
      %v1257 = vpop.permute.xlu0 %1256
      %v1259 = vsel %vm679, %v1244, %v1250
      %v1260 = vsel %vm681, %v1259, %v1253
      %v1261 = vsel %vm683, %v1260, %v1257
      %v1262 = vld [vmem:[%s9] sm:$0xff]
      %v1263 = vld [vmem:[%s9 + $0x8] sm:$0xff]
      %v1264 = vld [vmem:[%s9 + $0x10] sm:$0xff]
      %v1265 = vld [vmem:[%s9 + $0x18] sm:$0xff]
      %v1266 = vld [vmem:[%s9 + $0x20] sm:$0xff]
      %v1267 = vld [vmem:[%s9 + $0x28] sm:$0xff]
      %v1268 = vld [vmem:[%s9 + $0x30] sm:$0xff]
      %v1269 = vld [vmem:[%s9 + $0x38] sm:$0xff]
      %v1270 = vld [vmem:[%s9 + $0x40] sm:$0xff]
      %v1271 = vld [vmem:[%s9 + $0x48] sm:$0xff]
      %v1272 = vld [vmem:[%s9 + $0x50] sm:$0xff]
      %v1273 = vld [vmem:[%s9 + $0x58] sm:$0xff]
      %v1274 = vld [vmem:[%s9 + $0x60] sm:$0xff]
      %v1275 = vld [vmem:[%s9 + $0x68] sm:$0xff]
      %v1276 = vld [vmem:[%s9 + $0x70] sm:$0xff]
      %v1277 = vld [vmem:[%s9 + $0x78] sm:$0xff]
      %v1278 = vld [vmem:[%s10] sm:$0x1]
      %v1280 = vlaneseq
      %v1281 = vshrl.u32 %v1280, 7
      %v1282 = vsub.s32 0, %v1281
      %v1283 = vrot.slane %v1278, %v1282
      %1285 = vmatprep.subr.mxu0 0.0
      %1286 = vmatpush1.msra.mxu0 %v1277
      %1287 = vmatprep.subr.mxu0 0.0
      %1288 = vmatpush1.msra.mxu0 %v1276
      %1289 = vmatprep.subr.mxu0 0.0
      %1290 = vmatpush1.msra.mxu0 %v1275
      %1291 = vmatprep.subr.mxu0 0.0
      %1292 = vmatpush1.msra.mxu0 %v1274
      %1293 = vmatprep.subr.mxu0 0.0
      %1294 = vmatpush1.msra.mxu0 %v1273
      %1295 = vmatprep.subr.mxu0 0.0
      %1296 = vmatpush1.msra.mxu0 %v1272
      %1297 = vmatprep.subr.mxu0 0.0
      %1298 = vmatpush1.msra.mxu0 %v1271
      %1299 = vmatprep.subr.mxu0 0.0
      %1300 = vmatpush1.msra.mxu0 %v1270
      %1301 = vmatprep.subr.mxu0 0.0
      %1302 = vmatpush1.msra.mxu0 %v1269
      %1303 = vmatprep.subr.mxu0 0.0
      %1304 = vmatpush1.msra.mxu0 %v1268
      %1305 = vmatprep.subr.mxu0 0.0
      %1306 = vmatpush1.msra.mxu0 %v1267
      %1307 = vmatprep.subr.mxu0 0.0
      %1308 = vmatpush1.msra.mxu0 %v1266
      %1309 = vmatprep.subr.mxu0 0.0
      %1310 = vmatpush1.msra.mxu0 %v1265
      %1311 = vmatprep.subr.mxu0 0.0
      %1312 = vmatpush1.msra.mxu0 %v1264
      %1313 = vmatprep.subr.mxu0 0.0
      %1314 = vmatpush1.msra.mxu0 %v1263
      %1315 = vmatprep.subr.mxu0 0.0
      %1316 = vmatpush1.msra.mxu0 %v1262
      %1317 = vmatprep.subr.mxu0 0.0
      %1318 = vmatpush2.msra.mxu0 0.0
      %1319 = vmatprep.subr.mxu0 0.0
      %1320 = vmatpush2.msra.mxu0 0.0
      %1321 = vmatprep.subr.mxu0 0.0
      %1322 = vmatpush2.msra.mxu0 0.0
      %1323 = vmatprep.subr.mxu0 0.0
      %1324 = vmatpush2.msra.mxu0 0.0
      %1325 = vmatprep.subr.mxu0 0.0
      %1326 = vmatpush2.msra.mxu0 0.0
      %1327 = vmatprep.subr.mxu0 0.0
      %1328 = vmatpush2.msra.mxu0 0.0
      %1329 = vmatprep.subr.mxu0 0.0
      %1330 = vmatpush2.msra.mxu0 0.0
      %1331 = vmatprep.subr.mxu0 0.0
      %1332 = vmatpush2.msra.mxu0 0.0
      %1333 = vmatprep.subr.mxu0 0.0
      %1334 = vmatpush2.msra.mxu0 0.0
      %1335 = vmatprep.subr.mxu0 0.0
      %1336 = vmatpush2.msra.mxu0 0.0
      %1337 = vmatprep.subr.mxu0 0.0
      %1338 = vmatpush2.msra.mxu0 0.0
      %1339 = vmatprep.subr.mxu0 0.0
      %1340 = vmatpush2.msra.mxu0 0.0
      %1341 = vmatprep.subr.mxu0 0.0
      %1342 = vmatpush2.msra.mxu0 0.0
      %1343 = vmatprep.subr.mxu0 0.0
      %1344 = vmatpush2.msra.mxu0 0.0
      %1345 = vmatprep.subr.mxu0 0.0
      %1346 = vmatpush2.msra.mxu0 0.0
      %1347 = vmatprep.subr.mxu0 0.0
      %1348 = vmatpush2.msra.mxu0 0.0
      %1349 = vmatprep.mubr.f32.mxu0 0.0
      %1350 = vmatmul.mubr.f32.gmra.mxu0 %v1261
      %v1351 = vpop.f32.mrf.mxu0
      %v1352 = vadd.f32 %v1283, %v1351
      %v1353 = vpop.f32.mrf.mxu0
      %1354 = vdwg.mxu0
      %v1355 = vxor.u32 %v1352, 2147483648
      %v1356 = vmul.f32 %v1355, 1.442695
      %v1357 = vpow.pop %v1356
      %v1358 = vadd.f32 %v1357, 1.0
      %v1359 = vrcp.pop %v1358
      %v1360 = vmul.f32 1.0, %v1359
      %v1361 = vtanh.pop %v1352
      %1363 = vrot.lane.b32.xlu0 %v1241, 32
      %v1364 = vpop.permute.xlu0 %1363
      %v1366 = vmul.f32 %v1360, %v1364
      %1368 = vrot.lane.b32.xlu0 %v1361, 64
      %v1369 = vpop.permute.xlu0 %1368
      %v1371 = vmul.f32 %v1360, %v1369
      %1373 = vrot.lane.b32.xlu0 %v1371, 32
      %v1374 = vpop.permute.xlu0 %1373
      %v1376 = vadd.f32 %v1366, %v1374
      %v1377 = vtanh.pop %v1376
      %1379 = vrot.lane.b32.xlu0 %v1377, 64
      %v1380 = vpop.permute.xlu0 %1379
      %v1382 = vmul.f32 %v1360, %v1380
      %v1383 = vld [vmem:[%s17] sm:$0xff]
      %v1384 = vld [vmem:[%s17 + $0x8] sm:$0xff]
      %v1385 = vld [vmem:[%s17 + $0x10] sm:$0xff]
      %v1386 = vld [vmem:[%s17 + $0x18] sm:$0xff]
      %v1387 = vld [vmem:[%s18] sm:$0x1]
      %v1389 = vlaneseq
      %v1390 = vshrl.u32 %v1389, 7
      %v1391 = vsub.s32 0, %v1390
      %v1392 = vrot.slane %v1387, %v1391
      %1395 = vrot.lane.b32.xlu0 %v1382, 32
      %v1396 = vpop.permute.xlu0 %1395
      %v1397 = vsel %vm679, %v1396, 0
      %1399 = vmatprep.subr.mxu0 0.0
      %1400 = vmatpush1.msra.mxu0 0.0
      %1401 = vmatprep.subr.mxu0 0.0
      %1402 = vmatpush1.msra.mxu0 0.0
      %1403 = vmatprep.subr.mxu0 0.0
      %1404 = vmatpush1.msra.mxu0 0.0
      %1405 = vmatprep.subr.mxu0 0.0
      %1406 = vmatpush1.msra.mxu0 0.0
      %1407 = vmatprep.subr.mxu0 0.0
      %1408 = vmatpush1.msra.mxu0 0.0
      %1409 = vmatprep.subr.mxu0 0.0
      %1410 = vmatpush1.msra.mxu0 0.0
      %1411 = vmatprep.subr.mxu0 0.0
      %1412 = vmatpush1.msra.mxu0 0.0
      %1413 = vmatprep.subr.mxu0 0.0
      %1414 = vmatpush1.msra.mxu0 0.0
      %1415 = vmatprep.subr.mxu0 0.0
      %1416 = vmatpush1.msra.mxu0 0.0
      %1417 = vmatprep.subr.mxu0 0.0
      %1418 = vmatpush1.msra.mxu0 0.0
      %1419 = vmatprep.subr.mxu0 0.0
      %1420 = vmatpush1.msra.mxu0 0.0
      %1421 = vmatprep.subr.mxu0 0.0
      %1422 = vmatpush1.msra.mxu0 0.0
      %1423 = vmatprep.subr.mxu0 0.0
      %1424 = vmatpush1.msra.mxu0 %v1386
      %1425 = vmatprep.subr.mxu0 0.0
      %1426 = vmatpush1.msra.mxu0 %v1385
      %1427 = vmatprep.subr.mxu0 0.0
      %1428 = vmatpush1.msra.mxu0 %v1384
      %1429 = vmatprep.subr.mxu0 0.0
      %1430 = vmatpush1.msra.mxu0 %v1383
      %1431 = vmatprep.subr.mxu0 0.0
      %1432 = vmatpush2.msra.mxu0 0.0
      %1433 = vmatprep.subr.mxu0 0.0
      %1434 = vmatpush2.msra.mxu0 0.0
      %1435 = vmatprep.subr.mxu0 0.0
      %1436 = vmatpush2.msra.mxu0 0.0
      %1437 = vmatprep.subr.mxu0 0.0
      %1438 = vmatpush2.msra.mxu0 0.0
      %1439 = vmatprep.subr.mxu0 0.0
      %1440 = vmatpush2.msra.mxu0 0.0
      %1441 = vmatprep.subr.mxu0 0.0
      %1442 = vmatpush2.msra.mxu0 0.0
      %1443 = vmatprep.subr.mxu0 0.0
      %1444 = vmatpush2.msra.mxu0 0.0
      %1445 = vmatprep.subr.mxu0 0.0
      %1446 = vmatpush2.msra.mxu0 0.0
      %1447 = vmatprep.subr.mxu0 0.0
      %1448 = vmatpush2.msra.mxu0 0.0
      %1449 = vmatprep.subr.mxu0 0.0
      %1450 = vmatpush2.msra.mxu0 0.0
      %1451 = vmatprep.subr.mxu0 0.0
      %1452 = vmatpush2.msra.mxu0 0.0
      %1453 = vmatprep.subr.mxu0 0.0
      %1454 = vmatpush2.msra.mxu0 0.0
      %1455 = vmatprep.subr.mxu0 0.0
      %1456 = vmatpush2.msra.mxu0 0.0
      %1457 = vmatprep.subr.mxu0 0.0
      %1458 = vmatpush2.msra.mxu0 0.0
      %1459 = vmatprep.subr.mxu0 0.0
      %1460 = vmatpush2.msra.mxu0 0.0
      %1461 = vmatprep.subr.mxu0 0.0
      %1462 = vmatpush2.msra.mxu0 0.0
      %1463 = vmatprep.mubr.f32.mxu0 0.0
      %1464 = vmatmul.mubr.f32.gmra.mxu0 %v1397
      %v1465 = vpop.f32.mrf.mxu0
      %v1466 = vadd.f32 %v1392, %v1465
      %v1467 = vpop.f32.mrf.mxu0
      %1468 = vdwg.mxu0
      %vm1469 = vcmask 164864
      %v1470 = vsel %vm1469, %v1466, -inf
      %1471 = vmax.xlane.f32.xlu0 %v1470
      %v1472 = vpop.xlane.xlu0 %1471
      %v1473 = vsub.f32 %v1466, %v1472
      %v1474 = vmul.f32 %v1473, 1.442695
      %v1475 = vpow.pop %v1474
      %v1476 = vsel %vm1469, %v1475, 0.0
      %1477 = vadd.xlane.f32.xlu0 %v1476
      %v1478 = vpop.xlane.xlu0 %1477
      %v1479 = vlog2.pop %v1478
      %v1480 = vmul.f32 %v1479, 0.6931472
      %v1481 = vsub.f32 %v1473, %v1480
      %1482 = vst.msk [vmem:[%s648] sm:$0x3] %vm1469, %v1481
      %1483 = vst.msk [vmem:[%s652] sm:$0x3] %vm1199, %v1198
      %vm1485 = vcmask 254976
      %1486 = vst.msk [vmem:[#allocation2] sm:$0x3] %vm1485, %v821
      %1488 = vrot.lane.b32.xlu0 %v799, 96
      %v1489 = vpop.permute.xlu0 %1488
      %1491 = vst.msk [vmem:[#allocation3] sm:$0x3] %vm1485, %v1489
      %1493 = vst.msk [vmem:[#allocation4] sm:$0x3] %vm1485, %v1396
      %1495 = vrot.lane.b32.xlu0 %v1376, 96
      %v1496 = vpop.permute.xlu0 %1495
      %1498 = vst.msk [vmem:[#allocation5] sm:$0x3] %vm1485, %v1496
      %p1499 = scmp.lt.s32.totalorder %s32, 7
      %s1500 = scalar_select %p1499, %s32, 7
      %s1501 = smul.addr %s1500, 2
      %s1502 = scalar_lea.vmem %s19, %s1501
      %p1503 = scmp.lt.s32.totalorder %s32, 7
      %s1504 = scalar_select %p1503, %s32, 7
      %s1505 = smul.addr %s1504, 2
      %s1506 = scalar_lea.vmem %s20, %s1505
      // Predicated region
      $region101: #{_forward_impl.3} parent=95 // pred_check
        %p1507 = pneg %p459
      $region102: #{_forward_impl.3} parent=95 // pred_check_branch
        %1509 = sbr.rel (%p1507) target = $region104
      $region103: #{_forward_impl.3} parent=95 // pred_region
        _
      $region104: #{_forward_impl.3} parent=95 // pred_fallthru
        _
      // Predicated region
      $region105: #{_forward_impl.3} parent=95 // pred_check
        %p1510 = pneg %p485
      $region106: #{_forward_impl.3} parent=95 // pred_check_branch
        %1512 = sbr.rel (%p1510) target = $region108
      $region107: #{_forward_impl.3} parent=95 // pred_region
        _
      $region108: #{_forward_impl.3} parent=95 // pred_fallthru
        _
    $region96: #{_forward_impl.3} parent=5 // pred_fallthru
      _
    %p1513 = scmp.le.s32.totalorder 2, %s27
    // Predicated region
    $region109: #{_forward_impl.3} parent=5 // pred_check
      %p1514 = pneg %p1513
    $region110: #{_forward_impl.3} parent=5 // pred_check_branch
      %1516 = sbr.rel (%p1514) target = $region112
    $region111: #{_forward_impl.3} parent=5 // pred_region
      %s1517 = ssub.s32 %s27, 2
      // Predicated region
      $region113: #{_forward_impl.3} parent=111 // pred_check
        %p1518 = pneg %p465
      $region114: #{_forward_impl.3} parent=111 // pred_check_branch
        %1520 = sbr.rel (%p1518) target = $region116
      $region115: #{_forward_impl.3} parent=111 // pred_region
        %p1521 = scmp.lt.s32.totalorder %s33, 7
        %s1522 = scalar_select %p1521, %s33, 7
        %s1523 = smul.addr %s1522, 2
        %s1524 = scalar_lea.vmem %s19, %s1523
      $region116: #{_forward_impl.3} parent=111 // pred_fallthru
        _
      // Predicated region
      $region117: #{_forward_impl.3} parent=111 // pred_check
        %p1525 = pneg %p491
      $region118: #{_forward_impl.3} parent=111 // pred_check_branch
        %1527 = sbr.rel (%p1525) target = $region120
      $region119: #{_forward_impl.3} parent=111 // pred_region
        %p1528 = scmp.lt.s32.totalorder %s33, 7
        %s1529 = scalar_select %p1528, %s33, 7
        %s1530 = smul.addr %s1529, 2
        %s1531 = scalar_lea.vmem %s20, %s1530
      $region120: #{_forward_impl.3} parent=111 // pred_fallthru
        _
    $region112: #{_forward_impl.3} parent=5 // pred_fallthru
      _
  $region6: #{_forward_impl.3} parent=0 // loop_footer
    %s31 = sadd.s32 1, %s27
  $region7: #{_forward_impl.3} parent=0 // loop_footer_branch
    %26 = sbr.rel target = $region3
  $region8: #{_forward_impl.3} parent=0 // loop_exit
    _

// kernel: _forward_impl.5
$region0: #{_forward_impl.5}
  #allocation0 [shape = 'u32[]', space=smem, size = 0x4, offset = 0x4, fixed_abs, tag = 'smem constant byte address 0x4 - core index']
  #allocation1 [shape = 'u32[144,128]{1,0:T(1,128)}', space=vmem, size = 0x12000, scoped, tag = 'internal scratch']
  #allocation2 [shape = 'f32[2,32]{1,0:T(2,128)}', space=vmem, size = 0x400, scoped, tag = 'scratch operand']
  #allocation3 [shape = 'f32[2,32]{1,0:T(2,128)}', space=vmem, size = 0x400, scoped, tag = 'scratch operand']
  #allocation4 [shape = 'f32[2,32]{1,0:T(2,128)}', space=vmem, size = 0x400, scoped, tag = 'scratch operand']
  #allocation5 [shape = 'f32[2,32]{1,0:T(2,128)}', space=vmem, size = 0x400, scoped, tag = 'scratch operand']
  %s0 = inlined_call_operand.vmem [shape: f32[8,2,32], index: 0, kind: input, shape index: {}]
  %s1 = inlined_call_operand.vmem [shape: f32[8,2,32], index: 1, kind: input, shape index: {}]
  %s2 = inlined_call_operand.vmem [shape: f32[8,2,8], index: 2, kind: input, shape index: {}]
  %s3 = inlined_call_operand.vmem [shape: f32[2,32], index: 3, kind: input, shape index: {}]
  %s4 = inlined_call_operand.vmem [shape: f32[2,6,32], index: 4, kind: input, shape index: {}]
  %s5 = inlined_call_operand.vmem [shape: f32[2,6,32], index: 5, kind: input, shape index: {}]
  %s6 = inlined_call_operand.vmem [shape: f32[2,8,32], index: 6, kind: input, shape index: {}]
  %s7 = inlined_call_operand.vmem [shape: f32[2,8,32], index: 7, kind: input, shape index: {}]
  %s8 = inlined_call_operand.vmem [shape: f32[32,32], index: 8, kind: input, shape index: {}]
  %s9 = inlined_call_operand.vmem [shape: f32[1,32], index: 9, kind: input, shape index: {}]
  %s10 = inlined_call_operand.vmem [shape: f32[32,32], index: 10, kind: input, shape index: {}]
  %s11 = inlined_call_operand.vmem [shape: f32[1,32], index: 11, kind: input, shape index: {}]
  %s12 = inlined_call_operand.vmem [shape: f32[1,32], index: 12, kind: input, shape index: {}]
  %s13 = inlined_call_operand.vmem [shape: f32[32,32], index: 13, kind: input, shape index: {}]
  %s14 = inlined_call_operand.vmem [shape: f32[1,32], index: 14, kind: input, shape index: {}]
  %s15 = inlined_call_operand.vmem [shape: f32[1,32], index: 15, kind: input, shape index: {}]
  %s16 = inlined_call_operand.vmem [shape: f32[128,128], index: 16, kind: input, shape index: {}]
  %s17 = inlined_call_operand.vmem [shape: f32[1,128], index: 17, kind: input, shape index: {}]
  %s18 = inlined_call_operand.vmem [shape: f32[128,128], index: 18, kind: input, shape index: {}]
  %s19 = inlined_call_operand.vmem [shape: f32[1,128], index: 19, kind: input, shape index: {}]
  %s20 = inlined_call_operand.vmem [shape: f32[32,21], index: 20, kind: input, shape index: {}]
  %s21 = inlined_call_operand.vmem [shape: f32[1,21], index: 21, kind: input, shape index: {}]
  %s22 = inlined_call_operand.vmem [shape: f32[8,2,21], index: 22, kind: output, shape index: {}]
  %s23 = sld [smem:[#allocation0]]
  $region125: #{_forward_impl.5} parent=0
    _
  %s25 = ssub.s32 1, %s23
  %s26 = scalar_select 0, %s25, %s23
  loop: start=0, step=1, limit=10
  $region2: #{_forward_impl.5} parent=0 // loop_pre_header
    _
  $region3: #{_forward_impl.5} parent=0 // loop_header
    %s28 = sphi 0, %s32
    %p29 = scmp.ge.s32.totalorder %s28, 10
    %s38 = sphi 0, %s40
    %s41 = sphi 0, %s38
    %s42 = sphi 0, %s41
    %s58 = sphi 0, %s42
    %s64 = sphi 0, %s66
    %s67 = sphi 0, %s64
    %s68 = sphi 0, %s67
    %s84 = sphi 0, %s68
    %s90 = sphi 0, %s92
    %s93 = sphi 0, %s90
    %s94 = sphi 0, %s93
    %s110 = sphi 0, %s94
    %s114 = sphi 0, %s114
    %s116 = sphi 0, %s114
    %s117 = sphi 0, %s116
    %s131 = sphi 0, %s117
    %s135 = sphi 0, %s135
    %s137 = sphi 0, %s135
    %s138 = sphi 0, %s137
    %s152 = sphi 0, %s138
    %s156 = sphi 0, %s156
    %s158 = sphi 0, %s156
    %s159 = sphi 0, %s158
    %s173 = sphi 0, %s159
    %s177 = sphi 0, %s177
    %s179 = sphi 0, %s177
    %s180 = sphi 0, %s179
    %s194 = sphi 0, %s180
    %s198 = sphi 0, %s198
    %s200 = sphi 0, %s198
    %s201 = sphi 0, %s200
    %s215 = sphi 0, %s201
    %s219 = sphi 0, %s219
    %s221 = sphi 0, %s219
    %s222 = sphi 0, %s221
    %s236 = sphi 0, %s222
    %s240 = sphi 0, %s240
    %s242 = sphi 0, %s240
    %s243 = sphi 0, %s242
    %s257 = sphi 0, %s243
    %s261 = sphi 0, %s261
    %s263 = sphi 0, %s261
    %s264 = sphi 0, %s263
    %s278 = sphi 0, %s264
    %s282 = sphi 0, %s282
    %s284 = sphi 0, %s282
    %s285 = sphi 0, %s284
    %s299 = sphi 0, %s285
    %s303 = sphi 0, %s303
    %s305 = sphi 0, %s303
    %s306 = sphi 0, %s305
    %s320 = sphi 0, %s306
    %s324 = sphi 0, %s324
    %s326 = sphi 0, %s324
    %s327 = sphi 0, %s326
    %s341 = sphi 0, %s327
    %s345 = sphi 0, %s345
    %s347 = sphi 0, %s345
    %s348 = sphi 0, %s347
    %s362 = sphi 0, %s348
    %s366 = sphi 0, %s366
    %s368 = sphi 0, %s366
    %s369 = sphi 0, %s368
    %s383 = sphi 0, %s369
    %s387 = sphi 0, %s387
    %s389 = sphi 0, %s387
    %s390 = sphi 0, %s389
    %s404 = sphi 0, %s390
    %s408 = sphi 0, %s408
    %s410 = sphi 0, %s408
    %s411 = sphi 0, %s410
    %s425 = sphi 0, %s411
    %s429 = sphi 0, %s429
    %s431 = sphi 0, %s429
    %s432 = sphi 0, %s431
    %s446 = sphi 0, %s432
    %s450 = sphi 0, %s450
    %s452 = sphi 0, %s450
    %s453 = sphi 0, %s452
    %s467 = sphi 0, %s453
    %s471 = sphi 0, %s471
    %s473 = sphi 0, %s471
    %s474 = sphi 0, %s473
    %s488 = sphi 0, %s474
    %s492 = sphi 0, %s492
    %s494 = sphi 0, %s492
    %s495 = sphi 0, %s494
    %s509 = sphi 0, %s495
    %s515 = sphi 0, %s517
    %s518 = sphi 0, %s515
    %s519 = sphi 0, %s518
    %s535 = sphi 0, %s519
  $region4: #{_forward_impl.5} parent=0 // loop_header_branch
    %31 = sbr.rel (%p29) target = $region8
  $region5: #{_forward_impl.5} parent=0 // loop_body
    %s33 = ssub.s32 %s28, 1
    %s34 = ssub.s32 %s28, 2
    %s35 = sadd.s32 %s28, 1
    %s36 = ssub.s32 %s28, %s35
    %p37 = scmp.eq.s32.totalorder %s36, 0
    %s39 = sadd.s32 %s38, 1
    %s40 = scalar_select %p37, %s38, %s39
    %p43 = pneg %p37
    %p44 = scmp.eq.s32.totalorder %s28, 7
    %p45 = por %p43, %p44
    %p46 = scmp.ne.s32.totalorder %s38, %s41
    %p47 = scmp.eq.s32.totalorder %s28, 0
    %p48 = por %p46, %p47
    %p49 = scmp.ne.s32.totalorder %s38, %s41
    %p50 = scmp.eq.s32.totalorder %s33, 7
    %p51 = por %p49, %p50
    %p52 = scmp.ne.s32.totalorder %s41, %s42
    %p53 = scmp.eq.s32.totalorder %s33, 0
    %p54 = por %p52, %p53
    %p55 = scmp.ne.s32.totalorder %s41, %s42
    %p56 = scmp.eq.s32.totalorder %s34, 7
    %p57 = por %p55, %p56
    %p59 = scmp.ne.s32.totalorder %s42, %s58
    %p60 = scmp.eq.s32.totalorder %s34, 0
    %p61 = por %p59, %p60
    %s62 = ssub.s32 %s28, %s35
    %p63 = scmp.eq.s32.totalorder %s62, 0
    %s65 = sadd.s32 %s64, 1
    %s66 = scalar_select %p63, %s64, %s65
    %p69 = pneg %p63
    %p70 = scmp.eq.s32.totalorder %s28, 7
    %p71 = por %p69, %p70
    %p72 = scmp.ne.s32.totalorder %s64, %s67
    %p73 = scmp.eq.s32.totalorder %s28, 0
    %p74 = por %p72, %p73
    %p75 = scmp.ne.s32.totalorder %s64, %s67
    %p76 = scmp.eq.s32.totalorder %s33, 7
    %p77 = por %p75, %p76
    %p78 = scmp.ne.s32.totalorder %s67, %s68
    %p79 = scmp.eq.s32.totalorder %s33, 0
    %p80 = por %p78, %p79
    %p81 = scmp.ne.s32.totalorder %s67, %s68
    %p82 = scmp.eq.s32.totalorder %s34, 7
    %p83 = por %p81, %p82
    %p85 = scmp.ne.s32.totalorder %s68, %s84
    %p86 = scmp.eq.s32.totalorder %s34, 0
    %p87 = por %p85, %p86
    %s88 = ssub.s32 %s28, %s35
    %p89 = scmp.eq.s32.totalorder %s88, 0
    %s91 = sadd.s32 %s90, 1
    %s92 = scalar_select %p89, %s90, %s91
    %p95 = pneg %p89
    %p96 = scmp.eq.s32.totalorder %s28, 7
    %p97 = por %p95, %p96
    %p98 = scmp.ne.s32.totalorder %s90, %s93
    %p99 = scmp.eq.s32.totalorder %s28, 0
    %p100 = por %p98, %p99
    %p101 = scmp.ne.s32.totalorder %s90, %s93
    %p102 = scmp.eq.s32.totalorder %s33, 7
    %p103 = por %p101, %p102
    %p104 = scmp.ne.s32.totalorder %s93, %s94
    %p105 = scmp.eq.s32.totalorder %s33, 0
    %p106 = por %p104, %p105
    %p107 = scmp.ne.s32.totalorder %s93, %s94
    %p108 = scmp.eq.s32.totalorder %s34, 7
    %p109 = por %p107, %p108
    %p111 = scmp.ne.s32.totalorder %s94, %s110
    %p112 = scmp.eq.s32.totalorder %s34, 0
    %p113 = por %p111, %p112
    %s115 = sadd.s32 %s114, 1
    %p118 = scmp.eq.s32.totalorder %s28, 7
    %p119 = scmp.ne.s32.totalorder %s114, %s116
    %p120 = scmp.eq.s32.totalorder %s28, 0
    %p121 = por %p119, %p120
    %p122 = scmp.ne.s32.totalorder %s114, %s116
    %p123 = scmp.eq.s32.totalorder %s33, 7
    %p124 = por %p122, %p123
    %p125 = scmp.ne.s32.totalorder %s116, %s117
    %p126 = scmp.eq.s32.totalorder %s33, 0
    %p127 = por %p125, %p126
    %p128 = scmp.ne.s32.totalorder %s116, %s117
    %p129 = scmp.eq.s32.totalorder %s34, 7
    %p130 = por %p128, %p129
    %p132 = scmp.ne.s32.totalorder %s117, %s131
    %p133 = scmp.eq.s32.totalorder %s34, 0
    %p134 = por %p132, %p133
    %s136 = sadd.s32 %s135, 1
    %p139 = scmp.eq.s32.totalorder %s28, 7
    %p140 = scmp.ne.s32.totalorder %s135, %s137
    %p141 = scmp.eq.s32.totalorder %s28, 0
    %p142 = por %p140, %p141
    %p143 = scmp.ne.s32.totalorder %s135, %s137
    %p144 = scmp.eq.s32.totalorder %s33, 7
    %p145 = por %p143, %p144
    %p146 = scmp.ne.s32.totalorder %s137, %s138
    %p147 = scmp.eq.s32.totalorder %s33, 0
    %p148 = por %p146, %p147
    %p149 = scmp.ne.s32.totalorder %s137, %s138
    %p150 = scmp.eq.s32.totalorder %s34, 7
    %p151 = por %p149, %p150
    %p153 = scmp.ne.s32.totalorder %s138, %s152
    %p154 = scmp.eq.s32.totalorder %s34, 0
    %p155 = por %p153, %p154
    %s157 = sadd.s32 %s156, 1
    %p160 = scmp.eq.s32.totalorder %s28, 7
    %p161 = scmp.ne.s32.totalorder %s156, %s158
    %p162 = scmp.eq.s32.totalorder %s28, 0
    %p163 = por %p161, %p162
    %p164 = scmp.ne.s32.totalorder %s156, %s158
    %p165 = scmp.eq.s32.totalorder %s33, 7
    %p166 = por %p164, %p165
    %p167 = scmp.ne.s32.totalorder %s158, %s159
    %p168 = scmp.eq.s32.totalorder %s33, 0
    %p169 = por %p167, %p168
    %p170 = scmp.ne.s32.totalorder %s158, %s159
    %p171 = scmp.eq.s32.totalorder %s34, 7
    %p172 = por %p170, %p171
    %p174 = scmp.ne.s32.totalorder %s159, %s173
    %p175 = scmp.eq.s32.totalorder %s34, 0
    %p176 = por %p174, %p175
    %s178 = sadd.s32 %s177, 1
    %p181 = scmp.eq.s32.totalorder %s28, 7
    %p182 = scmp.ne.s32.totalorder %s177, %s179
    %p183 = scmp.eq.s32.totalorder %s28, 0
    %p184 = por %p182, %p183
    %p185 = scmp.ne.s32.totalorder %s177, %s179
    %p186 = scmp.eq.s32.totalorder %s33, 7
    %p187 = por %p185, %p186
    %p188 = scmp.ne.s32.totalorder %s179, %s180
    %p189 = scmp.eq.s32.totalorder %s33, 0
    %p190 = por %p188, %p189
    %p191 = scmp.ne.s32.totalorder %s179, %s180
    %p192 = scmp.eq.s32.totalorder %s34, 7
    %p193 = por %p191, %p192
    %p195 = scmp.ne.s32.totalorder %s180, %s194
    %p196 = scmp.eq.s32.totalorder %s34, 0
    %p197 = por %p195, %p196
    %s199 = sadd.s32 %s198, 1
    %p202 = scmp.eq.s32.totalorder %s28, 7
    %p203 = scmp.ne.s32.totalorder %s198, %s200
    %p204 = scmp.eq.s32.totalorder %s28, 0
    %p205 = por %p203, %p204
    %p206 = scmp.ne.s32.totalorder %s198, %s200
    %p207 = scmp.eq.s32.totalorder %s33, 7
    %p208 = por %p206, %p207
    %p209 = scmp.ne.s32.totalorder %s200, %s201
    %p210 = scmp.eq.s32.totalorder %s33, 0
    %p211 = por %p209, %p210
    %p212 = scmp.ne.s32.totalorder %s200, %s201
    %p213 = scmp.eq.s32.totalorder %s34, 7
    %p214 = por %p212, %p213
    %p216 = scmp.ne.s32.totalorder %s201, %s215
    %p217 = scmp.eq.s32.totalorder %s34, 0
    %p218 = por %p216, %p217
    %s220 = sadd.s32 %s219, 1
    %p223 = scmp.eq.s32.totalorder %s28, 7
    %p224 = scmp.ne.s32.totalorder %s219, %s221
    %p225 = scmp.eq.s32.totalorder %s28, 0
    %p226 = por %p224, %p225
    %p227 = scmp.ne.s32.totalorder %s219, %s221
    %p228 = scmp.eq.s32.totalorder %s33, 7
    %p229 = por %p227, %p228
    %p230 = scmp.ne.s32.totalorder %s221, %s222
    %p231 = scmp.eq.s32.totalorder %s33, 0
    %p232 = por %p230, %p231
    %p233 = scmp.ne.s32.totalorder %s221, %s222
    %p234 = scmp.eq.s32.totalorder %s34, 7
    %p235 = por %p233, %p234
    %p237 = scmp.ne.s32.totalorder %s222, %s236
    %p238 = scmp.eq.s32.totalorder %s34, 0
    %p239 = por %p237, %p238
    %s241 = sadd.s32 %s240, 1
    %p244 = scmp.eq.s32.totalorder %s28, 7
    %p245 = scmp.ne.s32.totalorder %s240, %s242
    %p246 = scmp.eq.s32.totalorder %s28, 0
    %p247 = por %p245, %p246
    %p248 = scmp.ne.s32.totalorder %s240, %s242
    %p249 = scmp.eq.s32.totalorder %s33, 7
    %p250 = por %p248, %p249
    %p251 = scmp.ne.s32.totalorder %s242, %s243
    %p252 = scmp.eq.s32.totalorder %s33, 0
    %p253 = por %p251, %p252
    %p254 = scmp.ne.s32.totalorder %s242, %s243
    %p255 = scmp.eq.s32.totalorder %s34, 7
    %p256 = por %p254, %p255
    %p258 = scmp.ne.s32.totalorder %s243, %s257
    %p259 = scmp.eq.s32.totalorder %s34, 0
    %p260 = por %p258, %p259
    %s262 = sadd.s32 %s261, 1
    %p265 = scmp.eq.s32.totalorder %s28, 7
    %p266 = scmp.ne.s32.totalorder %s261, %s263
    %p267 = scmp.eq.s32.totalorder %s28, 0
    %p268 = por %p266, %p267
    %p269 = scmp.ne.s32.totalorder %s261, %s263
    %p270 = scmp.eq.s32.totalorder %s33, 7
    %p271 = por %p269, %p270
    %p272 = scmp.ne.s32.totalorder %s263, %s264
    %p273 = scmp.eq.s32.totalorder %s33, 0
    %p274 = por %p272, %p273
    %p275 = scmp.ne.s32.totalorder %s263, %s264
    %p276 = scmp.eq.s32.totalorder %s34, 7
    %p277 = por %p275, %p276
    %p279 = scmp.ne.s32.totalorder %s264, %s278
    %p280 = scmp.eq.s32.totalorder %s34, 0
    %p281 = por %p279, %p280
    %s283 = sadd.s32 %s282, 1
    %p286 = scmp.eq.s32.totalorder %s28, 7
    %p287 = scmp.ne.s32.totalorder %s282, %s284
    %p288 = scmp.eq.s32.totalorder %s28, 0
    %p289 = por %p287, %p288
    %p290 = scmp.ne.s32.totalorder %s282, %s284
    %p291 = scmp.eq.s32.totalorder %s33, 7
    %p292 = por %p290, %p291
    %p293 = scmp.ne.s32.totalorder %s284, %s285
    %p294 = scmp.eq.s32.totalorder %s33, 0
    %p295 = por %p293, %p294
    %p296 = scmp.ne.s32.totalorder %s284, %s285
    %p297 = scmp.eq.s32.totalorder %s34, 7
    %p298 = por %p296, %p297
    %p300 = scmp.ne.s32.totalorder %s285, %s299
    %p301 = scmp.eq.s32.totalorder %s34, 0
    %p302 = por %p300, %p301
    %s304 = sadd.s32 %s303, 1
    %p307 = scmp.eq.s32.totalorder %s28, 7
    %p308 = scmp.ne.s32.totalorder %s303, %s305
    %p309 = scmp.eq.s32.totalorder %s28, 0
    %p310 = por %p308, %p309
    %p311 = scmp.ne.s32.totalorder %s303, %s305
    %p312 = scmp.eq.s32.totalorder %s33, 7
    %p313 = por %p311, %p312
    %p314 = scmp.ne.s32.totalorder %s305, %s306
    %p315 = scmp.eq.s32.totalorder %s33, 0
    %p316 = por %p314, %p315
    %p317 = scmp.ne.s32.totalorder %s305, %s306
    %p318 = scmp.eq.s32.totalorder %s34, 7
    %p319 = por %p317, %p318
    %p321 = scmp.ne.s32.totalorder %s306, %s320
    %p322 = scmp.eq.s32.totalorder %s34, 0
    %p323 = por %p321, %p322
    %s325 = sadd.s32 %s324, 1
    %p328 = scmp.eq.s32.totalorder %s28, 7
    %p329 = scmp.ne.s32.totalorder %s324, %s326
    %p330 = scmp.eq.s32.totalorder %s28, 0
    %p331 = por %p329, %p330
    %p332 = scmp.ne.s32.totalorder %s324, %s326
    %p333 = scmp.eq.s32.totalorder %s33, 7
    %p334 = por %p332, %p333
    %p335 = scmp.ne.s32.totalorder %s326, %s327
    %p336 = scmp.eq.s32.totalorder %s33, 0
    %p337 = por %p335, %p336
    %p338 = scmp.ne.s32.totalorder %s326, %s327
    %p339 = scmp.eq.s32.totalorder %s34, 7
    %p340 = por %p338, %p339
    %p342 = scmp.ne.s32.totalorder %s327, %s341
    %p343 = scmp.eq.s32.totalorder %s34, 0
    %p344 = por %p342, %p343
    %s346 = sadd.s32 %s345, 1
    %p349 = scmp.eq.s32.totalorder %s28, 7
    %p350 = scmp.ne.s32.totalorder %s345, %s347
    %p351 = scmp.eq.s32.totalorder %s28, 0
    %p352 = por %p350, %p351
    %p353 = scmp.ne.s32.totalorder %s345, %s347
    %p354 = scmp.eq.s32.totalorder %s33, 7
    %p355 = por %p353, %p354
    %p356 = scmp.ne.s32.totalorder %s347, %s348
    %p357 = scmp.eq.s32.totalorder %s33, 0
    %p358 = por %p356, %p357
    %p359 = scmp.ne.s32.totalorder %s347, %s348
    %p360 = scmp.eq.s32.totalorder %s34, 7
    %p361 = por %p359, %p360
    %p363 = scmp.ne.s32.totalorder %s348, %s362
    %p364 = scmp.eq.s32.totalorder %s34, 0
    %p365 = por %p363, %p364
    %s367 = sadd.s32 %s366, 1
    %p370 = scmp.eq.s32.totalorder %s28, 7
    %p371 = scmp.ne.s32.totalorder %s366, %s368
    %p372 = scmp.eq.s32.totalorder %s28, 0
    %p373 = por %p371, %p372
    %p374 = scmp.ne.s32.totalorder %s366, %s368
    %p375 = scmp.eq.s32.totalorder %s33, 7
    %p376 = por %p374, %p375
    %p377 = scmp.ne.s32.totalorder %s368, %s369
    %p378 = scmp.eq.s32.totalorder %s33, 0
    %p379 = por %p377, %p378
    %p380 = scmp.ne.s32.totalorder %s368, %s369
    %p381 = scmp.eq.s32.totalorder %s34, 7
    %p382 = por %p380, %p381
    %p384 = scmp.ne.s32.totalorder %s369, %s383
    %p385 = scmp.eq.s32.totalorder %s34, 0
    %p386 = por %p384, %p385
    %s388 = sadd.s32 %s387, 1
    %p391 = scmp.eq.s32.totalorder %s28, 7
    %p392 = scmp.ne.s32.totalorder %s387, %s389
    %p393 = scmp.eq.s32.totalorder %s28, 0
    %p394 = por %p392, %p393
    %p395 = scmp.ne.s32.totalorder %s387, %s389
    %p396 = scmp.eq.s32.totalorder %s33, 7
    %p397 = por %p395, %p396
    %p398 = scmp.ne.s32.totalorder %s389, %s390
    %p399 = scmp.eq.s32.totalorder %s33, 0
    %p400 = por %p398, %p399
    %p401 = scmp.ne.s32.totalorder %s389, %s390
    %p402 = scmp.eq.s32.totalorder %s34, 7
    %p403 = por %p401, %p402
    %p405 = scmp.ne.s32.totalorder %s390, %s404
    %p406 = scmp.eq.s32.totalorder %s34, 0
    %p407 = por %p405, %p406
    %s409 = sadd.s32 %s408, 1
    %p412 = scmp.eq.s32.totalorder %s28, 7
    %p413 = scmp.ne.s32.totalorder %s408, %s410
    %p414 = scmp.eq.s32.totalorder %s28, 0
    %p415 = por %p413, %p414
    %p416 = scmp.ne.s32.totalorder %s408, %s410
    %p417 = scmp.eq.s32.totalorder %s33, 7
    %p418 = por %p416, %p417
    %p419 = scmp.ne.s32.totalorder %s410, %s411
    %p420 = scmp.eq.s32.totalorder %s33, 0
    %p421 = por %p419, %p420
    %p422 = scmp.ne.s32.totalorder %s410, %s411
    %p423 = scmp.eq.s32.totalorder %s34, 7
    %p424 = por %p422, %p423
    %p426 = scmp.ne.s32.totalorder %s411, %s425
    %p427 = scmp.eq.s32.totalorder %s34, 0
    %p428 = por %p426, %p427
    %s430 = sadd.s32 %s429, 1
    %p433 = scmp.eq.s32.totalorder %s28, 7
    %p434 = scmp.ne.s32.totalorder %s429, %s431
    %p435 = scmp.eq.s32.totalorder %s28, 0
    %p436 = por %p434, %p435
    %p437 = scmp.ne.s32.totalorder %s429, %s431
    %p438 = scmp.eq.s32.totalorder %s33, 7
    %p439 = por %p437, %p438
    %p440 = scmp.ne.s32.totalorder %s431, %s432
    %p441 = scmp.eq.s32.totalorder %s33, 0
    %p442 = por %p440, %p441
    %p443 = scmp.ne.s32.totalorder %s431, %s432
    %p444 = scmp.eq.s32.totalorder %s34, 7
    %p445 = por %p443, %p444
    %p447 = scmp.ne.s32.totalorder %s432, %s446
    %p448 = scmp.eq.s32.totalorder %s34, 0
    %p449 = por %p447, %p448
    %s451 = sadd.s32 %s450, 1
    %p454 = scmp.eq.s32.totalorder %s28, 7
    %p455 = scmp.ne.s32.totalorder %s450, %s452
    %p456 = scmp.eq.s32.totalorder %s28, 0
    %p457 = por %p455, %p456
    %p458 = scmp.ne.s32.totalorder %s450, %s452
    %p459 = scmp.eq.s32.totalorder %s33, 7
    %p460 = por %p458, %p459
    %p461 = scmp.ne.s32.totalorder %s452, %s453
    %p462 = scmp.eq.s32.totalorder %s33, 0
    %p463 = por %p461, %p462
    %p464 = scmp.ne.s32.totalorder %s452, %s453
    %p465 = scmp.eq.s32.totalorder %s34, 7
    %p466 = por %p464, %p465
    %p468 = scmp.ne.s32.totalorder %s453, %s467
    %p469 = scmp.eq.s32.totalorder %s34, 0
    %p470 = por %p468, %p469
    %s472 = sadd.s32 %s471, 1
    %p475 = scmp.eq.s32.totalorder %s28, 7
    %p476 = scmp.ne.s32.totalorder %s471, %s473
    %p477 = scmp.eq.s32.totalorder %s28, 0
    %p478 = por %p476, %p477
    %p479 = scmp.ne.s32.totalorder %s471, %s473
    %p480 = scmp.eq.s32.totalorder %s33, 7
    %p481 = por %p479, %p480
    %p482 = scmp.ne.s32.totalorder %s473, %s474
    %p483 = scmp.eq.s32.totalorder %s33, 0
    %p484 = por %p482, %p483
    %p485 = scmp.ne.s32.totalorder %s473, %s474
    %p486 = scmp.eq.s32.totalorder %s34, 7
    %p487 = por %p485, %p486
    %p489 = scmp.ne.s32.totalorder %s474, %s488
    %p490 = scmp.eq.s32.totalorder %s34, 0
    %p491 = por %p489, %p490
    %s493 = sadd.s32 %s492, 1
    %p496 = scmp.eq.s32.totalorder %s28, 7
    %p497 = scmp.ne.s32.totalorder %s492, %s494
    %p498 = scmp.eq.s32.totalorder %s28, 0
    %p499 = por %p497, %p498
    %p500 = scmp.ne.s32.totalorder %s492, %s494
    %p501 = scmp.eq.s32.totalorder %s33, 7
    %p502 = por %p500, %p501
    %p503 = scmp.ne.s32.totalorder %s494, %s495
    %p504 = scmp.eq.s32.totalorder %s33, 0
    %p505 = por %p503, %p504
    %p506 = scmp.ne.s32.totalorder %s494, %s495
    %p507 = scmp.eq.s32.totalorder %s34, 7
    %p508 = por %p506, %p507
    %p510 = scmp.ne.s32.totalorder %s495, %s509
    %p511 = scmp.eq.s32.totalorder %s34, 0
    %p512 = por %p510, %p511
    %s513 = ssub.s32 %s28, %s35
    %p514 = scmp.eq.s32.totalorder %s513, 0
    %s516 = sadd.s32 %s515, 1
    %s517 = scalar_select %p514, %s515, %s516
    %p520 = pneg %p514
    %p521 = scmp.eq.s32.totalorder %s28, 7
    %p522 = por %p520, %p521
    %p523 = scmp.ne.s32.totalorder %s515, %s518
    %p524 = scmp.eq.s32.totalorder %s28, 0
    %p525 = por %p523, %p524
    %p526 = scmp.ne.s32.totalorder %s515, %s518
    %p527 = scmp.eq.s32.totalorder %s33, 7
    %p528 = por %p526, %p527
    %p529 = scmp.ne.s32.totalorder %s518, %s519
    %p530 = scmp.eq.s32.totalorder %s33, 0
    %p531 = por %p529, %p530
    %p532 = scmp.ne.s32.totalorder %s518, %s519
    %p533 = scmp.eq.s32.totalorder %s34, 7
    %p534 = por %p532, %p533
    %p536 = scmp.ne.s32.totalorder %s519, %s535
    %p537 = scmp.eq.s32.totalorder %s34, 0
    %p538 = por %p536, %p537
    %p539 = scmp.le.s32.totalorder 1, %s28
    %p540 = scmp.lt.s32.totalorder %s28, 9
    %p541 = pnand %p539, %p540
    %p542 = pneg %p541
    // Predicated region
    $region9: #{_forward_impl.5} parent=5 // pred_check
      _
    $region10: #{_forward_impl.5} parent=5 // pred_check_branch
      %544 = sbr.rel (%p541) target = $region12
    $region11: #{_forward_impl.5} parent=5 // pred_region
      %s545 = ssub.s32 %s28, 1
      // Predicated region
      $region13: #{_forward_impl.5} parent=11 // pred_check
        %p546 = pneg %p127
      $region14: #{_forward_impl.5} parent=11 // pred_check_branch
        %548 = sbr.rel (%p546) target = $region16
      $region15: #{_forward_impl.5} parent=11 // pred_region
        _
      $region16: #{_forward_impl.5} parent=11 // pred_fallthru
        _
      // Predicated region
      $region17: #{_forward_impl.5} parent=11 // pred_check
        %p549 = pneg %p148
      $region18: #{_forward_impl.5} parent=11 // pred_check_branch
        %551 = sbr.rel (%p549) target = $region20
      $region19: #{_forward_impl.5} parent=11 // pred_region
        _
      $region20: #{_forward_impl.5} parent=11 // pred_fallthru
        _
      // Predicated region
      $region21: #{_forward_impl.5} parent=11 // pred_check
        %p552 = pneg %p169
      $region22: #{_forward_impl.5} parent=11 // pred_check_branch
        %554 = sbr.rel (%p552) target = $region24
      $region23: #{_forward_impl.5} parent=11 // pred_region
        _
      $region24: #{_forward_impl.5} parent=11 // pred_fallthru
        _
      // Predicated region
      $region25: #{_forward_impl.5} parent=11 // pred_check
        %p555 = pneg %p190
      $region26: #{_forward_impl.5} parent=11 // pred_check_branch
        %557 = sbr.rel (%p555) target = $region28
      $region27: #{_forward_impl.5} parent=11 // pred_region
        _
      $region28: #{_forward_impl.5} parent=11 // pred_fallthru
        _
      // Predicated region
      $region29: #{_forward_impl.5} parent=11 // pred_check
        %p558 = pneg %p211
      $region30: #{_forward_impl.5} parent=11 // pred_check_branch
        %560 = sbr.rel (%p558) target = $region32
      $region31: #{_forward_impl.5} parent=11 // pred_region
        _
      $region32: #{_forward_impl.5} parent=11 // pred_fallthru
        _
      // Predicated region
      $region33: #{_forward_impl.5} parent=11 // pred_check
        %p561 = pneg %p232
      $region34: #{_forward_impl.5} parent=11 // pred_check_branch
        %563 = sbr.rel (%p561) target = $region36
      $region35: #{_forward_impl.5} parent=11 // pred_region
        _
      $region36: #{_forward_impl.5} parent=11 // pred_fallthru
        _
      // Predicated region
      $region37: #{_forward_impl.5} parent=11 // pred_check
        %p564 = pneg %p253
      $region38: #{_forward_impl.5} parent=11 // pred_check_branch
        %566 = sbr.rel (%p564) target = $region40
      $region39: #{_forward_impl.5} parent=11 // pred_region
        _
      $region40: #{_forward_impl.5} parent=11 // pred_fallthru
        _
      // Predicated region
      $region41: #{_forward_impl.5} parent=11 // pred_check
        %p567 = pneg %p274
      $region42: #{_forward_impl.5} parent=11 // pred_check_branch
        %569 = sbr.rel (%p567) target = $region44
      $region43: #{_forward_impl.5} parent=11 // pred_region
        _
      $region44: #{_forward_impl.5} parent=11 // pred_fallthru
        _
      // Predicated region
      $region45: #{_forward_impl.5} parent=11 // pred_check
        %p570 = pneg %p295
      $region46: #{_forward_impl.5} parent=11 // pred_check_branch
        %572 = sbr.rel (%p570) target = $region48
      $region47: #{_forward_impl.5} parent=11 // pred_region
        _
      $region48: #{_forward_impl.5} parent=11 // pred_fallthru
        _
      // Predicated region
      $region49: #{_forward_impl.5} parent=11 // pred_check
        %p573 = pneg %p316
      $region50: #{_forward_impl.5} parent=11 // pred_check_branch
        %575 = sbr.rel (%p573) target = $region52
      $region51: #{_forward_impl.5} parent=11 // pred_region
        _
      $region52: #{_forward_impl.5} parent=11 // pred_fallthru
        _
      // Predicated region
      $region53: #{_forward_impl.5} parent=11 // pred_check
        %p576 = pneg %p337
      $region54: #{_forward_impl.5} parent=11 // pred_check_branch
        %578 = sbr.rel (%p576) target = $region56
      $region55: #{_forward_impl.5} parent=11 // pred_region
        _
      $region56: #{_forward_impl.5} parent=11 // pred_fallthru
        _
      // Predicated region
      $region57: #{_forward_impl.5} parent=11 // pred_check
        %p579 = pneg %p358
      $region58: #{_forward_impl.5} parent=11 // pred_check_branch
        %581 = sbr.rel (%p579) target = $region60
      $region59: #{_forward_impl.5} parent=11 // pred_region
        _
      $region60: #{_forward_impl.5} parent=11 // pred_fallthru
        _
      // Predicated region
      $region61: #{_forward_impl.5} parent=11 // pred_check
        %p582 = pneg %p379
      $region62: #{_forward_impl.5} parent=11 // pred_check_branch
        %584 = sbr.rel (%p582) target = $region64
      $region63: #{_forward_impl.5} parent=11 // pred_region
        _
      $region64: #{_forward_impl.5} parent=11 // pred_fallthru
        _
      // Predicated region
      $region65: #{_forward_impl.5} parent=11 // pred_check
        %p585 = pneg %p400
      $region66: #{_forward_impl.5} parent=11 // pred_check_branch
        %587 = sbr.rel (%p585) target = $region68
      $region67: #{_forward_impl.5} parent=11 // pred_region
        _
      $region68: #{_forward_impl.5} parent=11 // pred_fallthru
        _
      // Predicated region
      $region69: #{_forward_impl.5} parent=11 // pred_check
        %p588 = pneg %p421
      $region70: #{_forward_impl.5} parent=11 // pred_check_branch
        %590 = sbr.rel (%p588) target = $region72
      $region71: #{_forward_impl.5} parent=11 // pred_region
        _
      $region72: #{_forward_impl.5} parent=11 // pred_fallthru
        _
      // Predicated region
      $region73: #{_forward_impl.5} parent=11 // pred_check
        %p591 = pneg %p442
      $region74: #{_forward_impl.5} parent=11 // pred_check_branch
        %593 = sbr.rel (%p591) target = $region76
      $region75: #{_forward_impl.5} parent=11 // pred_region
        _
      $region76: #{_forward_impl.5} parent=11 // pred_fallthru
        _
      // Predicated region
      $region77: #{_forward_impl.5} parent=11 // pred_check
        %p594 = pneg %p463
      $region78: #{_forward_impl.5} parent=11 // pred_check_branch
        %596 = sbr.rel (%p594) target = $region80
      $region79: #{_forward_impl.5} parent=11 // pred_region
        _
      $region80: #{_forward_impl.5} parent=11 // pred_fallthru
        _
      // Predicated region
      $region81: #{_forward_impl.5} parent=11 // pred_check
        %p597 = pneg %p484
      $region82: #{_forward_impl.5} parent=11 // pred_check_branch
        %599 = sbr.rel (%p597) target = $region84
      $region83: #{_forward_impl.5} parent=11 // pred_region
        _
      $region84: #{_forward_impl.5} parent=11 // pred_fallthru
        _
      // Predicated region
      $region85: #{_forward_impl.5} parent=11 // pred_check
        %p600 = pneg %p505
      $region86: #{_forward_impl.5} parent=11 // pred_check_branch
        %602 = sbr.rel (%p600) target = $region88
      $region87: #{_forward_impl.5} parent=11 // pred_region
        _
      $region88: #{_forward_impl.5} parent=11 // pred_fallthru
        _
    $region12: #{_forward_impl.5} parent=5 // pred_fallthru
      _
    %p603 = scmp.lt.s32.totalorder %s28, 8
    // Predicated region
    $region89: #{_forward_impl.5} parent=5 // pred_check
      %p604 = pneg %p603
    $region90: #{_forward_impl.5} parent=5 // pred_check_branch
      %606 = sbr.rel (%p604) target = $region92
    $region91: #{_forward_impl.5} parent=5 // pred_region
      // Predicated region
      $region93: #{_forward_impl.5} parent=91 // pred_check
        %p607 = pneg %p48
      $region94: #{_forward_impl.5} parent=91 // pred_check_branch
        %609 = sbr.rel (%p607) target = $region96
      $region95: #{_forward_impl.5} parent=91 // pred_region
        %p610 = scmp.lt.s32.totalorder %s28, 7
        %s611 = scalar_select %p610, %s28, 7
        %s612 = smul.addr %s611, 2
        %s613 = scalar_lea.vmem %s0, %s612
      $region96: #{_forward_impl.5} parent=91 // pred_fallthru
        _
      // Predicated region
      $region97: #{_forward_impl.5} parent=91 // pred_check
        %p614 = pneg %p74
      $region98: #{_forward_impl.5} parent=91 // pred_check_branch
        %616 = sbr.rel (%p614) target = $region100
      $region99: #{_forward_impl.5} parent=91 // pred_region
        %p617 = scmp.lt.s32.totalorder %s28, 7
        %s618 = scalar_select %p617, %s28, 7
        %s619 = smul.addr %s618, 2
        %s620 = scalar_lea.vmem %s1, %s619
      $region100: #{_forward_impl.5} parent=91 // pred_fallthru
        _
      // Predicated region
      $region101: #{_forward_impl.5} parent=91 // pred_check
        %p621 = pneg %p100
      $region102: #{_forward_impl.5} parent=91 // pred_check_branch
        %623 = sbr.rel (%p621) target = $region104
      $region103: #{_forward_impl.5} parent=91 // pred_region
        %p624 = scmp.lt.s32.totalorder %s28, 7
        %s625 = scalar_select %p624, %s28, 7
        %s626 = smul.addr %s625, 2
        %s627 = scalar_lea.vmem %s2, %s626
      $region104: #{_forward_impl.5} parent=91 // pred_fallthru
        _
    $region92: #{_forward_impl.5} parent=5 // pred_fallthru
      _
    %p628 = scmp.le.s32.totalorder 1, %s28
    %p629 = scmp.lt.s32.totalorder %s28, 9
    %p630 = pnand %p628, %p629
    %p631 = pneg %p630
    // Predicated region
    $region105: #{_forward_impl.5} parent=5 // pred_check
      _
    $region106: #{_forward_impl.5} parent=5 // pred_check_branch
      %633 = sbr.rel (%p630) target = $region108
    $region107: #{_forward_impl.5} parent=5 // pred_region
      %s634 = ssub.s32 %s28, 1
      %p635 = scmp.lt.s32.totalorder %s33, 7
      %s636 = scalar_select %p635, %s33, 7
      %s637 = smul.addr %s636, 2
      %s638 = scalar_lea.vmem %s0, %s637
      %p639 = pneg %p54
      %p640 = pneg %p51
      %p641 = scmp.lt.s32.totalorder %s33, 7
      %s642 = scalar_select %p641, %s33, 7
      %s643 = smul.addr %s642, 2
      %s644 = scalar_lea.vmem %s1, %s643
      %p645 = pneg %p80
      %p646 = pneg %p77
      %p647 = scmp.lt.s32.totalorder %s33, 7
      %s648 = scalar_select %p647, %s33, 7
      %s649 = smul.addr %s648, 2
      %s650 = scalar_lea.vmem %s2, %s649
      %p651 = pneg %p106
      %p652 = pneg %p103
      %p653 = pneg %p127
      %p654 = pneg %p124
      %p655 = pneg %p148
      %p656 = pneg %p145
      %p657 = pneg %p169
      %p658 = pneg %p166
      %p659 = pneg %p190
      %p660 = pneg %p187
      %p661 = pneg %p211
      %p662 = pneg %p208
      %p663 = pneg %p232
      %p664 = pneg %p229
      %p665 = pneg %p253
      %p666 = pneg %p250
      %p667 = pneg %p274
      %p668 = pneg %p271
      %p669 = pneg %p295
      %p670 = pneg %p292
      %p671 = pneg %p316
      %p672 = pneg %p313
      %p673 = pneg %p337
      %p674 = pneg %p334
      %p675 = pneg %p358
      %p676 = pneg %p355
      %p677 = pneg %p379
      %p678 = pneg %p376
      %p679 = pneg %p400
      %p680 = pneg %p397
      %p681 = pneg %p421
      %p682 = pneg %p418
      %p683 = pneg %p442
      %p684 = pneg %p439
      %p685 = pneg %p463
      %p686 = pneg %p460
      %p687 = pneg %p484
      %p688 = pneg %p481
      %p689 = pneg %p505
      %p690 = pneg %p502
      %p691 = pneg %p531
      %p692 = pneg %p528
      %p693 = scmp.lt.s32.totalorder %s33, 7
      %s694 = scalar_select %p693, %s33, 7
      %s695 = smul.addr %s694, 2
      %s696 = scalar_lea.vmem %s22, %s695
      %p697 = scmp.lt.s32.totalorder %s33, 7
      %s698 = scalar_select %p697, %s33, 7
      %s699 = smul.addr %s698, 2
      %s700 = scalar_lea.vmem %s0, %s699
      %p701 = scmp.lt.s32.totalorder %s33, 7
      %s702 = scalar_select %p701, %s33, 7
      %s703 = smul.addr %s702, 2
      %s704 = scalar_lea.vmem %s1, %s703
      %p705 = scmp.lt.s32.totalorder %s33, 7
      %s706 = scalar_select %p705, %s33, 7
      %s707 = smul.addr %s706, 2
      %s708 = scalar_lea.vmem %s2, %s707
      %p709 = scmp.lt.s32.totalorder %s33, 7
      %s710 = scalar_select %p709, %s33, 7
      %s711 = smul.addr %s710, 2
      %s712 = scalar_lea.vmem %s22, %s711
      %p713 = scmp.eq.s32.totalorder %s33, 0
      // Predicated region
      $region109: #{_forward_impl.5} parent=107 // pred_check
        %p714 = pneg %p713
      $region110: #{_forward_impl.5} parent=107 // pred_check_branch
        %716 = sbr.rel (%p714) target = $region112
      $region111: #{_forward_impl.5} parent=107 // pred_region
        %vm717 = vcmask 254976
        %718 = vst.msk [vmem:[#allocation2] sm:$0x3] %vm717, 0.0
        %719 = vst.msk [vmem:[#allocation3] sm:$0x3] %vm717, 0.0
        %720 = vst.msk [vmem:[#allocation4] sm:$0x3] %vm717, 0.0
        %721 = vst.msk [vmem:[#allocation5] sm:$0x3] %vm717, 0.0
      $region112: #{_forward_impl.5} parent=107 // pred_fallthru
        _
      %v722 = vld [vmem:[%s700] sm:$0x3]
      %v723 = vld [vmem:[%s8] sm:$0xff]
      %v724 = vld [vmem:[%s8 + $0x8] sm:$0xff]
      %v725 = vld [vmem:[%s8 + $0x10] sm:$0xff]
      %v726 = vld [vmem:[%s8 + $0x18] sm:$0xff]
      %v727 = vld [vmem:[%s9] sm:$0x1]
      %v729 = vlaneseq
      %v730 = vshrl.u32 %v729, 7
      %v731 = vsub.s32 0, %v730
      %v732 = vrot.slane %v727, %v731
      %vm734 = vcmask 261120
      %v736 = vsel %vm734, %v722, 0
      %738 = vmatprep.subr.mxu0 0.0
      %739 = vmatpush1.msra.mxu0 0.0
      %740 = vmatprep.subr.mxu0 0.0
      %741 = vmatpush1.msra.mxu0 0.0
      %742 = vmatprep.subr.mxu0 0.0
      %743 = vmatpush1.msra.mxu0 0.0
      %744 = vmatprep.subr.mxu0 0.0
      %745 = vmatpush1.msra.mxu0 0.0
      %746 = vmatprep.subr.mxu0 0.0
      %747 = vmatpush1.msra.mxu0 0.0
      %748 = vmatprep.subr.mxu0 0.0
      %749 = vmatpush1.msra.mxu0 0.0
      %750 = vmatprep.subr.mxu0 0.0
      %751 = vmatpush1.msra.mxu0 0.0
      %752 = vmatprep.subr.mxu0 0.0
      %753 = vmatpush1.msra.mxu0 0.0
      %754 = vmatprep.subr.mxu0 0.0
      %755 = vmatpush1.msra.mxu0 0.0
      %756 = vmatprep.subr.mxu0 0.0
      %757 = vmatpush1.msra.mxu0 0.0
      %758 = vmatprep.subr.mxu0 0.0
      %759 = vmatpush1.msra.mxu0 0.0
      %760 = vmatprep.subr.mxu0 0.0
      %761 = vmatpush1.msra.mxu0 0.0
      %762 = vmatprep.subr.mxu0 0.0
      %763 = vmatpush1.msra.mxu0 %v726
      %764 = vmatprep.subr.mxu0 0.0
      %765 = vmatpush1.msra.mxu0 %v725
      %766 = vmatprep.subr.mxu0 0.0
      %767 = vmatpush1.msra.mxu0 %v724
      %768 = vmatprep.subr.mxu0 0.0
      %769 = vmatpush1.msra.mxu0 %v723
      %770 = vmatprep.subr.mxu0 0.0
      %771 = vmatpush2.msra.mxu0 0.0
      %772 = vmatprep.subr.mxu0 0.0
      %773 = vmatpush2.msra.mxu0 0.0
      %774 = vmatprep.subr.mxu0 0.0
      %775 = vmatpush2.msra.mxu0 0.0
      %776 = vmatprep.subr.mxu0 0.0
      %777 = vmatpush2.msra.mxu0 0.0
      %778 = vmatprep.subr.mxu0 0.0
      %779 = vmatpush2.msra.mxu0 0.0
      %780 = vmatprep.subr.mxu0 0.0
      %781 = vmatpush2.msra.mxu0 0.0
      %782 = vmatprep.subr.mxu0 0.0
      %783 = vmatpush2.msra.mxu0 0.0
      %784 = vmatprep.subr.mxu0 0.0
      %785 = vmatpush2.msra.mxu0 0.0
      %786 = vmatprep.subr.mxu0 0.0
      %787 = vmatpush2.msra.mxu0 0.0
      %788 = vmatprep.subr.mxu0 0.0
      %789 = vmatpush2.msra.mxu0 0.0
      %790 = vmatprep.subr.mxu0 0.0
      %791 = vmatpush2.msra.mxu0 0.0
      %792 = vmatprep.subr.mxu0 0.0
      %793 = vmatpush2.msra.mxu0 0.0
      %794 = vmatprep.subr.mxu0 0.0
      %795 = vmatpush2.msra.mxu0 0.0
      %796 = vmatprep.subr.mxu0 0.0
      %797 = vmatpush2.msra.mxu0 0.0
      %798 = vmatprep.subr.mxu0 0.0
      %799 = vmatpush2.msra.mxu0 0.0
      %800 = vmatprep.subr.mxu0 0.0
      %801 = vmatpush2.msra.mxu0 0.0
      %802 = vmatprep.mubr.f32.mxu0 0.0
      %803 = vmatmul.mubr.f32.gmra.mxu0 %v736
      %v804 = vpop.f32.mrf.mxu0
      %v805 = vadd.f32 %v732, %v804
      %v806 = vpop.f32.mrf.mxu0
      %807 = vdwg.mxu0
      %v808 = vmax.f32 %v805, 0.0
      %v809 = vld [vmem:[%s5] sm:$0x3f]
      %v810 = vld [vmem:[%s5 + $0x8] sm:$0x3f]
      %v811 = vld [vmem:[%s10] sm:$0xff]
      %v812 = vld [vmem:[%s10 + $0x8] sm:$0xff]
      %v813 = vld [vmem:[%s10 + $0x10] sm:$0xff]
      %v814 = vld [vmem:[%s10 + $0x18] sm:$0xff]
      %v815 = vld [vmem:[%s11] sm:$0x1]
      %v817 = vlaneseq
      %v818 = vshrl.u32 %v817, 7
      %v819 = vsub.s32 0, %v818
      %v820 = vrot.slane %v815, %v819
      %v823 = vsel %vm734, %v808, 0
      %825 = vmatprep.subr.mxu0 0.0
      %826 = vmatpush1.msra.mxu0 0.0
      %827 = vmatprep.subr.mxu0 0.0
      %828 = vmatpush1.msra.mxu0 0.0
      %829 = vmatprep.subr.mxu0 0.0
      %830 = vmatpush1.msra.mxu0 0.0
      %831 = vmatprep.subr.mxu0 0.0
      %832 = vmatpush1.msra.mxu0 0.0
      %833 = vmatprep.subr.mxu0 0.0
      %834 = vmatpush1.msra.mxu0 0.0
      %835 = vmatprep.subr.mxu0 0.0
      %836 = vmatpush1.msra.mxu0 0.0
      %837 = vmatprep.subr.mxu0 0.0
      %838 = vmatpush1.msra.mxu0 0.0
      %839 = vmatprep.subr.mxu0 0.0
      %840 = vmatpush1.msra.mxu0 0.0
      %841 = vmatprep.subr.mxu0 0.0
      %842 = vmatpush1.msra.mxu0 0.0
      %843 = vmatprep.subr.mxu0 0.0
      %844 = vmatpush1.msra.mxu0 0.0
      %845 = vmatprep.subr.mxu0 0.0
      %846 = vmatpush1.msra.mxu0 0.0
      %847 = vmatprep.subr.mxu0 0.0
      %848 = vmatpush1.msra.mxu0 0.0
      %849 = vmatprep.subr.mxu0 0.0
      %850 = vmatpush1.msra.mxu0 %v814
      %851 = vmatprep.subr.mxu0 0.0
      %852 = vmatpush1.msra.mxu0 %v813
      %853 = vmatprep.subr.mxu0 0.0
      %854 = vmatpush1.msra.mxu0 %v812
      %855 = vmatprep.subr.mxu0 0.0
      %856 = vmatpush1.msra.mxu0 %v811
      %857 = vmatprep.subr.mxu0 0.0
      %858 = vmatpush2.msra.mxu0 0.0
      %859 = vmatprep.subr.mxu0 0.0
      %860 = vmatpush2.msra.mxu0 0.0
      %861 = vmatprep.subr.mxu0 0.0
      %862 = vmatpush2.msra.mxu0 0.0
      %863 = vmatprep.subr.mxu0 0.0
      %864 = vmatpush2.msra.mxu0 0.0
      %865 = vmatprep.subr.mxu0 0.0
      %866 = vmatpush2.msra.mxu0 0.0
      %867 = vmatprep.subr.mxu0 0.0
      %868 = vmatpush2.msra.mxu0 0.0
      %869 = vmatprep.subr.mxu0 0.0
      %870 = vmatpush2.msra.mxu0 0.0
      %871 = vmatprep.subr.mxu0 0.0
      %872 = vmatpush2.msra.mxu0 0.0
      %873 = vmatprep.subr.mxu0 0.0
      %874 = vmatpush2.msra.mxu0 0.0
      %875 = vmatprep.subr.mxu0 0.0
      %876 = vmatpush2.msra.mxu0 0.0
      %877 = vmatprep.subr.mxu0 0.0
      %878 = vmatpush2.msra.mxu0 0.0
      %879 = vmatprep.subr.mxu0 0.0
      %880 = vmatpush2.msra.mxu0 0.0
      %881 = vmatprep.subr.mxu0 0.0
      %882 = vmatpush2.msra.mxu0 0.0
      %883 = vmatprep.subr.mxu0 0.0
      %884 = vmatpush2.msra.mxu0 0.0
      %885 = vmatprep.subr.mxu0 0.0
      %886 = vmatpush2.msra.mxu0 0.0
      %887 = vmatprep.subr.mxu0 0.0
      %888 = vmatpush2.msra.mxu0 0.0
      %889 = vmatprep.mubr.f32.mxu0 0.0
      %890 = vmatmul.mubr.f32.gmra.mxu0 %v823
      %v891 = vpop.f32.mrf.mxu0
      %v892 = vadd.f32 %v820, %v891
      %v893 = vpop.f32.mrf.mxu0
      %894 = vdwg.mxu0
      %v897 = vunpack.c.l.s4 1966171168
      %v898 = vunpack.c.0.s8 %v897
      %v899 = vlaneseq
      %v900 = vshrl.u32 %v899, 7
      %v901 = vsub.s32 %v898, %v900
      %v902 = vrot.slane %v892, %v901
      %v903 = vcombine.high %v902, %v902
      %v905 = vunpack.c.l.s4 1966171168
      %v906 = vunpack.c.0.s8 %v905
      %v907 = vlaneseq
      %v908 = vshrl.u32 %v907, 7
      %v909 = vsub.s32 %v906, %v908
      %v910 = vrot.slane %v902, %v909
      %v912 = vunpack.c.l.s4 1966171168
      %v913 = vunpack.c.0.s8 %v912
      %v914 = vlaneseq
      %v915 = vshrl.u32 %v914, 7
      %v916 = vsub.s32 %v913, %v915
      %v917 = vrot.slane %v903, %v916
      %v918 = vlaneseq
      %v919 = vshrl.u32 %v918, 7
      %v920 = vsub.s32 0, %v919
      %v921 = vrot.slane %v910, %v920
      %v922 = vlaneseq
      %v923 = vshrl.u32 %v922, 7
      %v924 = vsub.s32 0, %v923
      %v925 = vrot.slane %v917, %v924
      %v928 = vadd.f32 %v809, %v921
      %v929 = vadd.f32 %v810, %v925
      %v930 = vtanh.pop %v928
      %v931 = vtanh.pop %v929
      %v932 = vld [vmem:[%s12] sm:$0x1]
      %v934 = vlaneseq
      %v935 = vshrl.u32 %v934, 7
      %v936 = vsub.s32 0, %v935
      %v937 = vrot.slane %v932, %v936
      %v939 = vmul.f32 %v930, %v937
      %v940 = vmul.f32 %v931, %v937
      %vm941 = vcmask 259072
      %v942 = vsel %vm941, %v939, 0.0
      %943 = vadd.xlane.f32.xlu0 %v942
      %v944 = vpop.xlane.xlu0 %943
      %v945 = vsel %vm941, %v940, 0.0
      %946 = vadd.xlane.f32.xlu0 %v945
      %v947 = vpop.xlane.xlu0 %946
      %v948 = vld [vmem:[%s4] sm:$0x3f]
      %v949 = vld [vmem:[%s4 + $0x8] sm:$0x3f]
      %v952 = vlaneseq
      %v953 = vand.u32 %v952, 127
      %v954 = vlaneseq
      %v955 = vshrl.u32 %v954, 7
      %v956 = vsub.s32 %v953, %v955
      %v957 = vrot.slane %v944, %v956
      %v958 = vlaneseq
      %v959 = vshrl.u32 %v958, 7
      %v960 = vsub.s32 %v953, %v959
      %v961 = vrot.slane %v947, %v960
      %vm962 = vcmask 1041409
      %v963 = vsel %vm962, %v961, %v957
      %vm965 = vcmask 41984
      %v966 = vsel %vm965, %v963, -inf
      %967 = vmax.xlane.f32.xlu0 %v966
      %v968 = vpop.xlane.xlu0 %967
      %v970 = vlaneseq
      %v971 = vshrl.u32 %v970, 7
      %v972 = vsub.s32 0, %v971
      %v973 = vrot.slane %v968, %v972
      %v974 = vlaneseq
      %v975 = vshrl.u32 %v974, 7
      %v976 = vsub.s32 1, %v975
      %v977 = vrot.slane %v968, %v976
      %v980 = vsub.f32 %v944, %v973
      %v981 = vsub.f32 %v947, %v977
      %v982 = vmul.f32 %v980, 1.442695
      %v983 = vpow.pop %v982
      %v984 = vmul.f32 %v981, 1.442695
      %v985 = vpow.pop %v984
      %988 = vset.pattern.permute.xlu0 0
      %989 = vperm.xlu0 %988, %v983
      %v990 = vpop.permute.xlu0 %989
      %991 = vset.pattern.permute.xlu0 0
      %992 = vperm.xlu0 %991, %v985
      %v993 = vpop.permute.xlu0 %992
      %v994 = vlaneseq
      %v995 = vshrl.u32 %v994, 7
      %v996 = vsub.s32 %v953, %v995
      %v997 = vrot.slane %v990, %v996
      %v998 = vlaneseq
      %v999 = vshrl.u32 %v998, 7
      %v1000 = vsub.s32 %v953, %v999
      %v1001 = vrot.slane %v993, %v1000
      %v1002 = vsel %vm962, %v1001, %v997
      %v1004 = vsel %vm965, %v1002, 0.0
      %1005 = vadd.xlane.f32.xlu0 %v1004
      %v1006 = vpop.xlane.xlu0 %1005
      %v1008 = vlaneseq
      %v1009 = vshrl.u32 %v1008, 7
      %v1010 = vsub.s32 0, %v1009
      %v1011 = vrot.slane %v1006, %v1010
      %v1012 = vlaneseq
      %v1013 = vshrl.u32 %v1012, 7
      %v1014 = vsub.s32 1, %v1013
      %v1015 = vrot.slane %v1006, %v1014
      %v1018 = vrcp.pop %v1011
      %v1019 = vmul.f32 %v983, %v1018
      %v1020 = vrcp.pop %v1015
      %v1021 = vmul.f32 %v985, %v1020
      %1023 = vset.pattern.permute.xlu0 0
      %1024 = vperm.xlu0 %1023, %v1019
      %v1025 = vpop.permute.xlu0 %1024
      %1028 = vset.pattern.permute.xlu0 0
      %1029 = vperm.xlu0 %1028, %v1021
      %v1030 = vpop.permute.xlu0 %1029
      %v1032 = vmul.f32 %v1025, %v948
      %v1033 = vmul.f32 %v1030, %v949
      %v1034 = vsel %vm941, %v1032, 0.0
      %v1035 = vrot.slane %v1034, 4
      %v1036 = vadd.f32 %v1034, %v1035
      %v1037 = vrot.slane %v1036, 2
      %v1038 = vadd.f32 %v1036, %v1037
      %v1039 = vrot.slane %v1038, 1
      %v1040 = vadd.f32 %v1038, %v1039
      %v1041 = vsel %vm941, %v1033, 0.0
      %v1042 = vrot.slane %v1041, 4
      %v1043 = vadd.f32 %v1041, %v1042
      %v1044 = vrot.slane %v1043, 2
      %v1045 = vadd.f32 %v1043, %v1044
      %v1046 = vrot.slane %v1045, 1
      %v1047 = vadd.f32 %v1045, %v1046
      %v1048 = vld [vmem:[%s7] sm:$0xff]
      %v1049 = vld [vmem:[%s7 + $0x8] sm:$0xff]
      %v1050 = vld [vmem:[%s13] sm:$0xff]
      %v1051 = vld [vmem:[%s13 + $0x8] sm:$0xff]
      %v1052 = vld [vmem:[%s13 + $0x10] sm:$0xff]
      %v1053 = vld [vmem:[%s13 + $0x18] sm:$0xff]
      %v1054 = vld [vmem:[%s14] sm:$0x1]
      %v1056 = vlaneseq
      %v1057 = vshrl.u32 %v1056, 7
      %v1058 = vsub.s32 0, %v1057
      %v1059 = vrot.slane %v1054, %v1058
      %1061 = vmatprep.subr.mxu0 0.0
      %1062 = vmatpush1.msra.mxu0 0.0
      %1063 = vmatprep.subr.mxu0 0.0
      %1064 = vmatpush1.msra.mxu0 0.0
      %1065 = vmatprep.subr.mxu0 0.0
      %1066 = vmatpush1.msra.mxu0 0.0
      %1067 = vmatprep.subr.mxu0 0.0
      %1068 = vmatpush1.msra.mxu0 0.0
      %1069 = vmatprep.subr.mxu0 0.0
      %1070 = vmatpush1.msra.mxu0 0.0
      %1071 = vmatprep.subr.mxu0 0.0
      %1072 = vmatpush1.msra.mxu0 0.0
      %1073 = vmatprep.subr.mxu0 0.0
      %1074 = vmatpush1.msra.mxu0 0.0
      %1075 = vmatprep.subr.mxu0 0.0
      %1076 = vmatpush1.msra.mxu0 0.0
      %1077 = vmatprep.subr.mxu0 0.0
      %1078 = vmatpush1.msra.mxu0 0.0
      %1079 = vmatprep.subr.mxu0 0.0
      %1080 = vmatpush1.msra.mxu0 0.0
      %1081 = vmatprep.subr.mxu0 0.0
      %1082 = vmatpush1.msra.mxu0 0.0
      %1083 = vmatprep.subr.mxu0 0.0
      %1084 = vmatpush1.msra.mxu0 0.0
      %1085 = vmatprep.subr.mxu0 0.0
      %1086 = vmatpush1.msra.mxu0 %v1053
      %1087 = vmatprep.subr.mxu0 0.0
      %1088 = vmatpush1.msra.mxu0 %v1052
      %1089 = vmatprep.subr.mxu0 0.0
      %1090 = vmatpush1.msra.mxu0 %v1051
      %1091 = vmatprep.subr.mxu0 0.0
      %1092 = vmatpush1.msra.mxu0 %v1050
      %1093 = vmatprep.subr.mxu0 0.0
      %1094 = vmatpush2.msra.mxu0 0.0
      %1095 = vmatprep.subr.mxu0 0.0
      %1096 = vmatpush2.msra.mxu0 0.0
      %1097 = vmatprep.subr.mxu0 0.0
      %1098 = vmatpush2.msra.mxu0 0.0
      %1099 = vmatprep.subr.mxu0 0.0
      %1100 = vmatpush2.msra.mxu0 0.0
      %1101 = vmatprep.subr.mxu0 0.0
      %1102 = vmatpush2.msra.mxu0 0.0
      %1103 = vmatprep.subr.mxu0 0.0
      %1104 = vmatpush2.msra.mxu0 0.0
      %1105 = vmatprep.subr.mxu0 0.0
      %1106 = vmatpush2.msra.mxu0 0.0
      %1107 = vmatprep.subr.mxu0 0.0
      %1108 = vmatpush2.msra.mxu0 0.0
      %1109 = vmatprep.subr.mxu0 0.0
      %1110 = vmatpush2.msra.mxu0 0.0
      %1111 = vmatprep.subr.mxu0 0.0
      %1112 = vmatpush2.msra.mxu0 0.0
      %1113 = vmatprep.subr.mxu0 0.0
      %1114 = vmatpush2.msra.mxu0 0.0
      %1115 = vmatprep.subr.mxu0 0.0
      %1116 = vmatpush2.msra.mxu0 0.0
      %1117 = vmatprep.subr.mxu0 0.0
      %1118 = vmatpush2.msra.mxu0 0.0
      %1119 = vmatprep.subr.mxu0 0.0
      %1120 = vmatpush2.msra.mxu0 0.0
      %1121 = vmatprep.subr.mxu0 0.0
      %1122 = vmatpush2.msra.mxu0 0.0
      %1123 = vmatprep.subr.mxu0 0.0
      %1124 = vmatpush2.msra.mxu0 0.0
      %1125 = vmatprep.mubr.f32.mxu0 0.0
      %1126 = vmatmul.mubr.f32.gmra.mxu0 %v823
      %v1127 = vpop.f32.mrf.mxu0
      %v1128 = vadd.f32 %v1059, %v1127
      %v1129 = vpop.f32.mrf.mxu0
      %1130 = vdwg.mxu0
      %v1133 = vunpack.c.l.s4 1966171168
      %v1134 = vunpack.c.0.s8 %v1133
      %v1135 = vlaneseq
      %v1136 = vshrl.u32 %v1135, 7
      %v1137 = vsub.s32 %v1134, %v1136
      %v1138 = vrot.slane %v1128, %v1137
      %v1139 = vcombine.high %v1138, %v1138
      %v1141 = vunpack.c.l.s4 1966171168
      %v1142 = vunpack.c.0.s8 %v1141
      %v1143 = vlaneseq
      %v1144 = vshrl.u32 %v1143, 7
      %v1145 = vsub.s32 %v1142, %v1144
      %v1146 = vrot.slane %v1138, %v1145
      %v1148 = vunpack.c.l.s4 1966171168
      %v1149 = vunpack.c.0.s8 %v1148
      %v1150 = vlaneseq
      %v1151 = vshrl.u32 %v1150, 7
      %v1152 = vsub.s32 %v1149, %v1151
      %v1153 = vrot.slane %v1139, %v1152
      %v1154 = vlaneseq
      %v1155 = vshrl.u32 %v1154, 7
      %v1156 = vsub.s32 0, %v1155
      %v1157 = vrot.slane %v1146, %v1156
      %v1158 = vlaneseq
      %v1159 = vshrl.u32 %v1158, 7
      %v1160 = vsub.s32 0, %v1159
      %v1161 = vrot.slane %v1153, %v1160
      %v1164 = vadd.f32 %v1048, %v1157
      %v1165 = vadd.f32 %v1049, %v1161
      %v1166 = vtanh.pop %v1164
      %v1167 = vtanh.pop %v1165
      %v1168 = vld [vmem:[%s15] sm:$0x1]
      %v1170 = vlaneseq
      %v1171 = vshrl.u32 %v1170, 7
      %v1172 = vsub.s32 0, %v1171
      %v1173 = vrot.slane %v1168, %v1172
      %v1175 = vmul.f32 %v1166, %v1173
      %v1176 = vmul.f32 %v1167, %v1173
      %v1177 = vsel %vm734, %v1175, 0.0
      %1178 = vadd.xlane.f32.xlu0 %v1177
      %v1179 = vpop.xlane.xlu0 %1178
      %v1180 = vsel %vm734, %v1176, 0.0
      %1181 = vadd.xlane.f32.xlu0 %v1180
      %v1182 = vpop.xlane.xlu0 %1181
      %v1183 = vld [vmem:[%s708] sm:$0x3]
      %v1184 = vld [vmem:[%s6] sm:$0xff]
      %v1185 = vld [vmem:[%s6 + $0x8] sm:$0xff]
      %vm1186 = vcmp.gt.f32.partialorder %v1183, 0.5
      %v1189 = vlaneseq
      %v1190 = vshrl.u32 %v1189, 7
      %v1191 = vsub.s32 %v953, %v1190
      %v1192 = vrot.slane %v1179, %v1191
      %v1193 = vlaneseq
      %v1194 = vshrl.u32 %v1193, 7
      %v1195 = vsub.s32 %v953, %v1194
      %v1196 = vrot.slane %v1182, %v1195
      %v1197 = vsel %vm962, %v1196, %v1192
      %v1199 = vsel %vm1186, -1e+08, %v1197
      %vm1200 = vcmask 58368
      %v1201 = vsel %vm1200, %v1199, -inf
      %1202 = vmax.xlane.f32.xlu0 %v1201
      %v1203 = vpop.xlane.xlu0 %1202
      %v1204 = vsub.f32 %v1199, %v1203
      %v1205 = vmul.f32 %v1204, 1.442695
      %v1206 = vpow.pop %v1205
      %v1207 = vsel %vm1200, %v1206, 0.0
      %1208 = vadd.xlane.f32.xlu0 %v1207
      %v1209 = vpop.xlane.xlu0 %1208
      %v1210 = vrcp.pop %v1209
      %v1211 = vmul.f32 %v1206, %v1210
      %v1212 = vlaneseq
      %v1213 = vshrl.u32 %v1212, 7
      %v1214 = vsub.s32 0, %v1213
      %v1215 = vrot.slane %v1211, %v1214
      %1217 = vbcast.lane.b32.xlu0 %v1215, 256
      %v1218 = vpop.permute.xlu0 %1217
      %v1219 = vlaneseq
      %v1220 = vshrl.u32 %v1219, 7
      %v1221 = vsub.s32 1, %v1220
      %v1222 = vrot.slane %v1211, %v1221
      %1224 = vbcast.lane.b32.xlu0 %v1222, 256
      %v1225 = vpop.permute.xlu0 %1224
      %v1226 = vmul.f32 %v1218, %v1184
      %v1227 = vmul.f32 %v1225, %v1185
      %v1228 = vsel %vm734, %v1226, 0.0
      %v1229 = vrot.slane %v1228, 4
      %v1230 = vadd.f32 %v1228, %v1229
      %v1231 = vrot.slane %v1230, 2
      %v1232 = vadd.f32 %v1230, %v1231
      %v1233 = vrot.slane %v1232, 1
      %v1234 = vadd.f32 %v1232, %v1233
      %v1235 = vsel %vm734, %v1227, 0.0
      %v1236 = vrot.slane %v1235, 4
      %v1237 = vadd.f32 %v1235, %v1236
      %v1238 = vrot.slane %v1237, 2
      %v1239 = vadd.f32 %v1237, %v1238
      %v1240 = vrot.slane %v1239, 1
      %v1241 = vadd.f32 %v1239, %v1240
      %v1242 = vld [vmem:[%s704] sm:$0x3]
      %v1243 = vld [vmem:[#allocation4] sm:$0x3]
      %v1244 = vld [vmem:[%s3] sm:$0x3]
      %v1245 = vld [vmem:[#allocation2] sm:$0x3]
      %v1246 = vld [vmem:[#allocation3] sm:$0x3]
      %1248 = vrot.lane.b32.xlu0 %v1244, 32
      %v1249 = vpop.permute.xlu0 %1248
      %1252 = vrot.lane.b32.xlu0 %v1242, 64
      %v1253 = vpop.permute.xlu0 %1252
      %1256 = vrot.lane.b32.xlu0 %v1245, 96
      %v1257 = vpop.permute.xlu0 %1256
      %v1259 = vsel %vm734, %v1243, %v1249
      %vm1260 = vcmask 523264
      %v1261 = vsel %vm1260, %v1259, %v1253
      %vm1262 = vcmask 785408
      %v1263 = vsel %vm1262, %v1261, %v1257
      %v1264 = vld [vmem:[%s16] sm:$0xff]
      %v1265 = vld [vmem:[%s16 + $0x8] sm:$0xff]
      %v1266 = vld [vmem:[%s16 + $0x10] sm:$0xff]
      %v1267 = vld [vmem:[%s16 + $0x18] sm:$0xff]
      %v1268 = vld [vmem:[%s16 + $0x20] sm:$0xff]
      %v1269 = vld [vmem:[%s16 + $0x28] sm:$0xff]
      %v1270 = vld [vmem:[%s16 + $0x30] sm:$0xff]
      %v1271 = vld [vmem:[%s16 + $0x38] sm:$0xff]
      %v1272 = vld [vmem:[%s16 + $0x40] sm:$0xff]
      %v1273 = vld [vmem:[%s16 + $0x48] sm:$0xff]
      %v1274 = vld [vmem:[%s16 + $0x50] sm:$0xff]
      %v1275 = vld [vmem:[%s16 + $0x58] sm:$0xff]
      %v1276 = vld [vmem:[%s16 + $0x60] sm:$0xff]
      %v1277 = vld [vmem:[%s16 + $0x68] sm:$0xff]
      %v1278 = vld [vmem:[%s16 + $0x70] sm:$0xff]
      %v1279 = vld [vmem:[%s16 + $0x78] sm:$0xff]
      %v1280 = vld [vmem:[%s17] sm:$0x1]
      %v1282 = vlaneseq
      %v1283 = vshrl.u32 %v1282, 7
      %v1284 = vsub.s32 0, %v1283
      %v1285 = vrot.slane %v1280, %v1284
      %1287 = vmatprep.subr.mxu0 0.0
      %1288 = vmatpush1.msra.mxu0 %v1279
      %1289 = vmatprep.subr.mxu0 0.0
      %1290 = vmatpush1.msra.mxu0 %v1278
      %1291 = vmatprep.subr.mxu0 0.0
      %1292 = vmatpush1.msra.mxu0 %v1277
      %1293 = vmatprep.subr.mxu0 0.0
      %1294 = vmatpush1.msra.mxu0 %v1276
      %1295 = vmatprep.subr.mxu0 0.0
      %1296 = vmatpush1.msra.mxu0 %v1275
      %1297 = vmatprep.subr.mxu0 0.0
      %1298 = vmatpush1.msra.mxu0 %v1274
      %1299 = vmatprep.subr.mxu0 0.0
      %1300 = vmatpush1.msra.mxu0 %v1273
      %1301 = vmatprep.subr.mxu0 0.0
      %1302 = vmatpush1.msra.mxu0 %v1272
      %1303 = vmatprep.subr.mxu0 0.0
      %1304 = vmatpush1.msra.mxu0 %v1271
      %1305 = vmatprep.subr.mxu0 0.0
      %1306 = vmatpush1.msra.mxu0 %v1270
      %1307 = vmatprep.subr.mxu0 0.0
      %1308 = vmatpush1.msra.mxu0 %v1269
      %1309 = vmatprep.subr.mxu0 0.0
      %1310 = vmatpush1.msra.mxu0 %v1268
      %1311 = vmatprep.subr.mxu0 0.0
      %1312 = vmatpush1.msra.mxu0 %v1267
      %1313 = vmatprep.subr.mxu0 0.0
      %1314 = vmatpush1.msra.mxu0 %v1266
      %1315 = vmatprep.subr.mxu0 0.0
      %1316 = vmatpush1.msra.mxu0 %v1265
      %1317 = vmatprep.subr.mxu0 0.0
      %1318 = vmatpush1.msra.mxu0 %v1264
      %1319 = vmatprep.subr.mxu0 0.0
      %1320 = vmatpush2.msra.mxu0 0.0
      %1321 = vmatprep.subr.mxu0 0.0
      %1322 = vmatpush2.msra.mxu0 0.0
      %1323 = vmatprep.subr.mxu0 0.0
      %1324 = vmatpush2.msra.mxu0 0.0
      %1325 = vmatprep.subr.mxu0 0.0
      %1326 = vmatpush2.msra.mxu0 0.0
      %1327 = vmatprep.subr.mxu0 0.0
      %1328 = vmatpush2.msra.mxu0 0.0
      %1329 = vmatprep.subr.mxu0 0.0
      %1330 = vmatpush2.msra.mxu0 0.0
      %1331 = vmatprep.subr.mxu0 0.0
      %1332 = vmatpush2.msra.mxu0 0.0
      %1333 = vmatprep.subr.mxu0 0.0
      %1334 = vmatpush2.msra.mxu0 0.0
      %1335 = vmatprep.subr.mxu0 0.0
      %1336 = vmatpush2.msra.mxu0 0.0
      %1337 = vmatprep.subr.mxu0 0.0
      %1338 = vmatpush2.msra.mxu0 0.0
      %1339 = vmatprep.subr.mxu0 0.0
      %1340 = vmatpush2.msra.mxu0 0.0
      %1341 = vmatprep.subr.mxu0 0.0
      %1342 = vmatpush2.msra.mxu0 0.0
      %1343 = vmatprep.subr.mxu0 0.0
      %1344 = vmatpush2.msra.mxu0 0.0
      %1345 = vmatprep.subr.mxu0 0.0
      %1346 = vmatpush2.msra.mxu0 0.0
      %1347 = vmatprep.subr.mxu0 0.0
      %1348 = vmatpush2.msra.mxu0 0.0
      %1349 = vmatprep.subr.mxu0 0.0
      %1350 = vmatpush2.msra.mxu0 0.0
      %1351 = vmatprep.mubr.f32.mxu0 0.0
      %1352 = vmatmul.mubr.f32.gmra.mxu0 %v1263
      %v1353 = vpop.f32.mrf.mxu0
      %v1354 = vadd.f32 %v1285, %v1353
      %v1355 = vpop.f32.mrf.mxu0
      %1356 = vdwg.mxu0
      %v1357 = vxor.u32 %v1354, 2147483648
      %v1358 = vmul.f32 %v1357, 1.442695
      %v1359 = vpow.pop %v1358
      %v1360 = vadd.f32 %v1359, 1.0
      %v1361 = vrcp.pop %v1360
      %v1362 = vmul.f32 1.0, %v1361
      %v1363 = vtanh.pop %v1354
      %1365 = vrot.lane.b32.xlu0 %v1246, 32
      %v1366 = vpop.permute.xlu0 %1365
      %v1368 = vmul.f32 %v1362, %v1366
      %1370 = vrot.lane.b32.xlu0 %v1363, 64
      %v1371 = vpop.permute.xlu0 %1370
      %v1373 = vmul.f32 %v1362, %v1371
      %1375 = vrot.lane.b32.xlu0 %v1373, 32
      %v1376 = vpop.permute.xlu0 %1375
      %v1378 = vadd.f32 %v1368, %v1376
      %v1379 = vtanh.pop %v1378
      %1381 = vrot.lane.b32.xlu0 %v1379, 64
      %v1382 = vpop.permute.xlu0 %1381
      %v1384 = vmul.f32 %v1362, %v1382
      %v1385 = vld [vmem:[#allocation5] sm:$0x3]
      %v1388 = vsel %vm962, %v1047, %v1040
      %v1392 = vsel %vm962, %v1241, %v1234
      %1393 = vrot.lane.b32.xlu0 %v1392, 32
      %v1394 = vpop.permute.xlu0 %1393
      %1397 = vrot.lane.b32.xlu0 %v1384, 96
      %v1398 = vpop.permute.xlu0 %1397
      %1401 = vrot.lane.b32.xlu0 %v1243, 96
      %v1402 = vpop.permute.xlu0 %1401
      %v1404 = vsel %vm734, %v1388, %v1394
      %v1405 = vsel %vm1260, %v1404, %v1398
      %v1406 = vsel %vm1262, %v1405, %v1402
      %v1407 = vld [vmem:[%s18] sm:$0xff]
      %v1408 = vld [vmem:[%s18 + $0x8] sm:$0xff]
      %v1409 = vld [vmem:[%s18 + $0x10] sm:$0xff]
      %v1410 = vld [vmem:[%s18 + $0x18] sm:$0xff]
      %v1411 = vld [vmem:[%s18 + $0x20] sm:$0xff]
      %v1412 = vld [vmem:[%s18 + $0x28] sm:$0xff]
      %v1413 = vld [vmem:[%s18 + $0x30] sm:$0xff]
      %v1414 = vld [vmem:[%s18 + $0x38] sm:$0xff]
      %v1415 = vld [vmem:[%s18 + $0x40] sm:$0xff]
      %v1416 = vld [vmem:[%s18 + $0x48] sm:$0xff]
      %v1417 = vld [vmem:[%s18 + $0x50] sm:$0xff]
      %v1418 = vld [vmem:[%s18 + $0x58] sm:$0xff]
      %v1419 = vld [vmem:[%s18 + $0x60] sm:$0xff]
      %v1420 = vld [vmem:[%s18 + $0x68] sm:$0xff]
      %v1421 = vld [vmem:[%s18 + $0x70] sm:$0xff]
      %v1422 = vld [vmem:[%s18 + $0x78] sm:$0xff]
      %v1423 = vld [vmem:[%s19] sm:$0x1]
      %v1425 = vlaneseq
      %v1426 = vshrl.u32 %v1425, 7
      %v1427 = vsub.s32 0, %v1426
      %v1428 = vrot.slane %v1423, %v1427
      %1430 = vmatprep.subr.mxu0 0.0
      %1431 = vmatpush1.msra.mxu0 %v1422
      %1432 = vmatprep.subr.mxu0 0.0
      %1433 = vmatpush1.msra.mxu0 %v1421
      %1434 = vmatprep.subr.mxu0 0.0
      %1435 = vmatpush1.msra.mxu0 %v1420
      %1436 = vmatprep.subr.mxu0 0.0
      %1437 = vmatpush1.msra.mxu0 %v1419
      %1438 = vmatprep.subr.mxu0 0.0
      %1439 = vmatpush1.msra.mxu0 %v1418
      %1440 = vmatprep.subr.mxu0 0.0
      %1441 = vmatpush1.msra.mxu0 %v1417
      %1442 = vmatprep.subr.mxu0 0.0
      %1443 = vmatpush1.msra.mxu0 %v1416
      %1444 = vmatprep.subr.mxu0 0.0
      %1445 = vmatpush1.msra.mxu0 %v1415
      %1446 = vmatprep.subr.mxu0 0.0
      %1447 = vmatpush1.msra.mxu0 %v1414
      %1448 = vmatprep.subr.mxu0 0.0
      %1449 = vmatpush1.msra.mxu0 %v1413
      %1450 = vmatprep.subr.mxu0 0.0
      %1451 = vmatpush1.msra.mxu0 %v1412
      %1452 = vmatprep.subr.mxu0 0.0
      %1453 = vmatpush1.msra.mxu0 %v1411
      %1454 = vmatprep.subr.mxu0 0.0
      %1455 = vmatpush1.msra.mxu0 %v1410
      %1456 = vmatprep.subr.mxu0 0.0
      %1457 = vmatpush1.msra.mxu0 %v1409
      %1458 = vmatprep.subr.mxu0 0.0
      %1459 = vmatpush1.msra.mxu0 %v1408
      %1460 = vmatprep.subr.mxu0 0.0
      %1461 = vmatpush1.msra.mxu0 %v1407
      %1462 = vmatprep.subr.mxu0 0.0
      %1463 = vmatpush2.msra.mxu0 0.0
      %1464 = vmatprep.subr.mxu0 0.0
      %1465 = vmatpush2.msra.mxu0 0.0
      %1466 = vmatprep.subr.mxu0 0.0
      %1467 = vmatpush2.msra.mxu0 0.0
      %1468 = vmatprep.subr.mxu0 0.0
      %1469 = vmatpush2.msra.mxu0 0.0
      %1470 = vmatprep.subr.mxu0 0.0
      %1471 = vmatpush2.msra.mxu0 0.0
      %1472 = vmatprep.subr.mxu0 0.0
      %1473 = vmatpush2.msra.mxu0 0.0
      %1474 = vmatprep.subr.mxu0 0.0
      %1475 = vmatpush2.msra.mxu0 0.0
      %1476 = vmatprep.subr.mxu0 0.0
      %1477 = vmatpush2.msra.mxu0 0.0
      %1478 = vmatprep.subr.mxu0 0.0
      %1479 = vmatpush2.msra.mxu0 0.0
      %1480 = vmatprep.subr.mxu0 0.0
      %1481 = vmatpush2.msra.mxu0 0.0
      %1482 = vmatprep.subr.mxu0 0.0
      %1483 = vmatpush2.msra.mxu0 0.0
      %1484 = vmatprep.subr.mxu0 0.0
      %1485 = vmatpush2.msra.mxu0 0.0
      %1486 = vmatprep.subr.mxu0 0.0
      %1487 = vmatpush2.msra.mxu0 0.0
      %1488 = vmatprep.subr.mxu0 0.0
      %1489 = vmatpush2.msra.mxu0 0.0
      %1490 = vmatprep.subr.mxu0 0.0
      %1491 = vmatpush2.msra.mxu0 0.0
      %1492 = vmatprep.subr.mxu0 0.0
      %1493 = vmatpush2.msra.mxu0 0.0
      %1494 = vmatprep.mubr.f32.mxu0 0.0
      %1495 = vmatmul.mubr.f32.gmra.mxu0 %v1406
      %v1496 = vpop.f32.mrf.mxu0
      %v1497 = vadd.f32 %v1428, %v1496
      %v1498 = vpop.f32.mrf.mxu0
      %1499 = vdwg.mxu0
      %v1500 = vxor.u32 %v1497, 2147483648
      %v1501 = vmul.f32 %v1500, 1.442695
      %v1502 = vpow.pop %v1501
      %v1503 = vadd.f32 %v1502, 1.0
      %v1504 = vrcp.pop %v1503
      %v1505 = vmul.f32 1.0, %v1504
      %v1506 = vtanh.pop %v1497
      %1508 = vrot.lane.b32.xlu0 %v1385, 32
      %v1509 = vpop.permute.xlu0 %1508
      %v1511 = vmul.f32 %v1505, %v1509
      %1513 = vrot.lane.b32.xlu0 %v1506, 64
      %v1514 = vpop.permute.xlu0 %1513
      %v1516 = vmul.f32 %v1505, %v1514
      %1518 = vrot.lane.b32.xlu0 %v1516, 32
      %v1519 = vpop.permute.xlu0 %1518
      %v1521 = vadd.f32 %v1511, %v1519
      %v1522 = vtanh.pop %v1521
      %1524 = vrot.lane.b32.xlu0 %v1522, 64
      %v1525 = vpop.permute.xlu0 %1524
      %v1527 = vmul.f32 %v1505, %v1525
      %v1528 = vld [vmem:[%s20] sm:$0xff]
      %v1529 = vld [vmem:[%s20 + $0x8] sm:$0xff]
      %v1530 = vld [vmem:[%s20 + $0x10] sm:$0xff]
      %v1531 = vld [vmem:[%s20 + $0x18] sm:$0xff]
      %v1532 = vld [vmem:[%s21] sm:$0x1]
      %v1534 = vlaneseq
      %v1535 = vshrl.u32 %v1534, 7
      %v1536 = vsub.s32 0, %v1535
      %v1537 = vrot.slane %v1532, %v1536
      %1540 = vrot.lane.b32.xlu0 %v1527, 32
      %v1541 = vpop.permute.xlu0 %1540
      %v1542 = vsel %vm734, %v1541, 0
      %1544 = vmatprep.subr.mxu0 0.0
      %1545 = vmatpush1.msra.mxu0 0.0
      %1546 = vmatprep.subr.mxu0 0.0
      %1547 = vmatpush1.msra.mxu0 0.0
      %1548 = vmatprep.subr.mxu0 0.0
      %1549 = vmatpush1.msra.mxu0 0.0
      %1550 = vmatprep.subr.mxu0 0.0
      %1551 = vmatpush1.msra.mxu0 0.0
      %1552 = vmatprep.subr.mxu0 0.0
      %1553 = vmatpush1.msra.mxu0 0.0
      %1554 = vmatprep.subr.mxu0 0.0
      %1555 = vmatpush1.msra.mxu0 0.0
      %1556 = vmatprep.subr.mxu0 0.0
      %1557 = vmatpush1.msra.mxu0 0.0
      %1558 = vmatprep.subr.mxu0 0.0
      %1559 = vmatpush1.msra.mxu0 0.0
      %1560 = vmatprep.subr.mxu0 0.0
      %1561 = vmatpush1.msra.mxu0 0.0
      %1562 = vmatprep.subr.mxu0 0.0
      %1563 = vmatpush1.msra.mxu0 0.0
      %1564 = vmatprep.subr.mxu0 0.0
      %1565 = vmatpush1.msra.mxu0 0.0
      %1566 = vmatprep.subr.mxu0 0.0
      %1567 = vmatpush1.msra.mxu0 0.0
      %1568 = vmatprep.subr.mxu0 0.0
      %1569 = vmatpush1.msra.mxu0 %v1531
      %1570 = vmatprep.subr.mxu0 0.0
      %1571 = vmatpush1.msra.mxu0 %v1530
      %1572 = vmatprep.subr.mxu0 0.0
      %1573 = vmatpush1.msra.mxu0 %v1529
      %1574 = vmatprep.subr.mxu0 0.0
      %1575 = vmatpush1.msra.mxu0 %v1528
      %1576 = vmatprep.subr.mxu0 0.0
      %1577 = vmatpush2.msra.mxu0 0.0
      %1578 = vmatprep.subr.mxu0 0.0
      %1579 = vmatpush2.msra.mxu0 0.0
      %1580 = vmatprep.subr.mxu0 0.0
      %1581 = vmatpush2.msra.mxu0 0.0
      %1582 = vmatprep.subr.mxu0 0.0
      %1583 = vmatpush2.msra.mxu0 0.0
      %1584 = vmatprep.subr.mxu0 0.0
      %1585 = vmatpush2.msra.mxu0 0.0
      %1586 = vmatprep.subr.mxu0 0.0
      %1587 = vmatpush2.msra.mxu0 0.0
      %1588 = vmatprep.subr.mxu0 0.0
      %1589 = vmatpush2.msra.mxu0 0.0
      %1590 = vmatprep.subr.mxu0 0.0
      %1591 = vmatpush2.msra.mxu0 0.0
      %1592 = vmatprep.subr.mxu0 0.0
      %1593 = vmatpush2.msra.mxu0 0.0
      %1594 = vmatprep.subr.mxu0 0.0
      %1595 = vmatpush2.msra.mxu0 0.0
      %1596 = vmatprep.subr.mxu0 0.0
      %1597 = vmatpush2.msra.mxu0 0.0
      %1598 = vmatprep.subr.mxu0 0.0
      %1599 = vmatpush2.msra.mxu0 0.0
      %1600 = vmatprep.subr.mxu0 0.0
      %1601 = vmatpush2.msra.mxu0 0.0
      %1602 = vmatprep.subr.mxu0 0.0
      %1603 = vmatpush2.msra.mxu0 0.0
      %1604 = vmatprep.subr.mxu0 0.0
      %1605 = vmatpush2.msra.mxu0 0.0
      %1606 = vmatprep.subr.mxu0 0.0
      %1607 = vmatpush2.msra.mxu0 0.0
      %1608 = vmatprep.mubr.f32.mxu0 0.0
      %1609 = vmatmul.mubr.f32.gmra.mxu0 %v1542
      %v1610 = vpop.f32.mrf.mxu0
      %v1611 = vadd.f32 %v1537, %v1610
      %v1612 = vpop.f32.mrf.mxu0
      %1613 = vdwg.mxu0
      %vm1614 = vcmask 164864
      %v1615 = vsel %vm1614, %v1611, -inf
      %1616 = vmax.xlane.f32.xlu0 %v1615
      %v1617 = vpop.xlane.xlu0 %1616
      %v1618 = vsub.f32 %v1611, %v1617
      %v1619 = vmul.f32 %v1618, 1.442695
      %v1620 = vpow.pop %v1619
      %v1621 = vsel %vm1614, %v1620, 0.0
      %1622 = vadd.xlane.f32.xlu0 %v1621
      %v1623 = vpop.xlane.xlu0 %1622
      %v1624 = vlog2.pop %v1623
      %v1625 = vmul.f32 %v1624, 0.6931472
      %v1626 = vsub.f32 %v1618, %v1625
      %1627 = vst.msk [vmem:[%s712] sm:$0x3] %vm1614, %v1626
      %1628 = vrot.lane.b32.xlu0 %v1384, 32
      %v1629 = vpop.permute.xlu0 %1628
      %vm1631 = vcmask 254976
      %1632 = vst.msk [vmem:[#allocation2] sm:$0x3] %vm1631, %v1629
      %1634 = vrot.lane.b32.xlu0 %v1378, 96
      %v1635 = vpop.permute.xlu0 %1634
      %1637 = vst.msk [vmem:[#allocation3] sm:$0x3] %vm1631, %v1635
      %1639 = vst.msk [vmem:[#allocation4] sm:$0x3] %vm1631, %v1541
      %1641 = vrot.lane.b32.xlu0 %v1521, 96
      %v1642 = vpop.permute.xlu0 %1641
      %1644 = vst.msk [vmem:[#allocation5] sm:$0x3] %vm1631, %v1642
      %p1645 = scmp.lt.s32.totalorder %s33, 7
      %s1646 = scalar_select %p1645, %s33, 7
      %s1647 = smul.addr %s1646, 2
      %s1648 = scalar_lea.vmem %s22, %s1647
      // Predicated region
      $region113: #{_forward_impl.5} parent=107 // pred_check
        %p1649 = pneg %p528
      $region114: #{_forward_impl.5} parent=107 // pred_check_branch
        %1651 = sbr.rel (%p1649) target = $region116
      $region115: #{_forward_impl.5} parent=107 // pred_region
        _
      $region116: #{_forward_impl.5} parent=107 // pred_fallthru
        _
    $region108: #{_forward_impl.5} parent=5 // pred_fallthru
      _
    %p1652 = scmp.le.s32.totalorder 2, %s28
    // Predicated region
    $region117: #{_forward_impl.5} parent=5 // pred_check
      %p1653 = pneg %p1652
    $region118: #{_forward_impl.5} parent=5 // pred_check_branch
      %1655 = sbr.rel (%p1653) target = $region120
    $region119: #{_forward_impl.5} parent=5 // pred_region
      %s1656 = ssub.s32 %s28, 2
      // Predicated region
      $region121: #{_forward_impl.5} parent=119 // pred_check
        %p1657 = pneg %p534
      $region122: #{_forward_impl.5} parent=119 // pred_check_branch
        %1659 = sbr.rel (%p1657) target = $region124
      $region123: #{_forward_impl.5} parent=119 // pred_region
        %p1660 = scmp.lt.s32.totalorder %s34, 7
        %s1661 = scalar_select %p1660, %s34, 7
        %s1662 = smul.addr %s1661, 2
        %s1663 = scalar_lea.vmem %s22, %s1662
      $region124: #{_forward_impl.5} parent=119 // pred_fallthru
        _
    $region120: #{_forward_impl.5} parent=5 // pred_fallthru
      _
  $region6: #{_forward_impl.5} parent=0 // loop_footer
    %s32 = sadd.s32 1, %s28
  $region7: #{_forward_impl.5} parent=0 // loop_footer_branch
    %27 = sbr.rel target = $region3
  $region8: #{_forward_impl.5} parent=0 // loop_exit
    _

// kernel: _forward_impl.4
$region0: #{_forward_impl.4}
  #allocation0 [shape = 'u32[]', space=smem, size = 0x4, offset = 0x4, fixed_abs, tag = 'smem constant byte address 0x4 - core index']
  #allocation1 [shape = 'u32[144,128]{1,0:T(1,128)}', space=vmem, size = 0x12000, scoped, tag = 'internal scratch']
  %s0 = inlined_call_operand.vmem [shape: f32[2,8,32], index: 0, kind: input, shape index: {}]
  %s1 = inlined_call_operand.vmem [shape: f32[2,8,32], index: 1, kind: input, shape index: {}]
  %s2 = inlined_call_operand.vmem [shape: f32[2,8,8], index: 2, kind: input, shape index: {}]
  %s3 = inlined_call_operand.vmem [shape: f32[2,8,8], index: 3, kind: input, shape index: {}]
  %s4 = inlined_call_operand.vmem [shape: f32[2,8,8], index: 4, kind: output, shape index: {}]
  %s5 = sld [smem:[#allocation0]]
  $region26: #{_forward_impl.4} parent=0
    _
  %s7 = ssub.s32 1, %s5
  %s8 = scalar_select 0, %s7, %s5
  // Predicated region
  $region2: #{_forward_impl.4} parent=0 // pred_check
    _
  $region3: #{_forward_impl.4} parent=0 // pred_check_branch
    %10 = sbr.rel (0) target = $region5
  $region4: #{_forward_impl.4} parent=0 // pred_region
    _
  $region5: #{_forward_impl.4} parent=0 // pred_fallthru
    _
  // Predicated region
  $region6: #{_forward_impl.4} parent=0 // pred_check
    _
  $region7: #{_forward_impl.4} parent=0 // pred_check_branch
    %12 = sbr.rel (0) target = $region9
  $region8: #{_forward_impl.4} parent=0 // pred_region
    _
  $region9: #{_forward_impl.4} parent=0 // pred_fallthru
    _
  // Predicated region
  $region10: #{_forward_impl.4} parent=0 // pred_check
    _
  $region11: #{_forward_impl.4} parent=0 // pred_check_branch
    %14 = sbr.rel (0) target = $region13
  $region12: #{_forward_impl.4} parent=0 // pred_region
    _
  $region13: #{_forward_impl.4} parent=0 // pred_fallthru
    _
  // Predicated region
  $region14: #{_forward_impl.4} parent=0 // pred_check
    _
  $region15: #{_forward_impl.4} parent=0 // pred_check_branch
    %16 = sbr.rel (0) target = $region17
  $region16: #{_forward_impl.4} parent=0 // pred_region
    _
  $region17: #{_forward_impl.4} parent=0 // pred_fallthru
    _
  %v17 = vld [vmem:[%s0] sm:$0xff]
  %v18 = vld [vmem:[%s0 + $0x8] sm:$0xff]
  %v19 = vld [vmem:[%s1] sm:$0xff]
  %v20 = vld [vmem:[%s1 + $0x8] sm:$0xff]
  %v21 = vld [vmem:[%s2] sm:$0xff]
  %v22 = vld [vmem:[%s2 + $0x8] sm:$0xff]
  %vm23 = vcmask 261120
  %v25 = vsel %vm23, %v17, 0
  %v28 = vsel %vm23, %v19, 0
  %30 = vmatprep.subr.mxu0 0.0
  %31 = vmatpush1.xpose.msra.mxu0 0.0
  %32 = vmatprep.subr.mxu0 0.0
  %33 = vmatpush1.xpose.msra.mxu0 0.0
  %34 = vmatprep.subr.mxu0 0.0
  %35 = vmatpush1.xpose.msra.mxu0 0.0
  %36 = vmatprep.subr.mxu0 0.0
  %37 = vmatpush1.xpose.msra.mxu0 0.0
  %38 = vmatprep.subr.mxu0 0.0
  %39 = vmatpush1.xpose.msra.mxu0 0.0
  %40 = vmatprep.subr.mxu0 0.0
  %41 = vmatpush1.xpose.msra.mxu0 0.0
  %42 = vmatprep.subr.mxu0 0.0
  %43 = vmatpush1.xpose.msra.mxu0 0.0
  %44 = vmatprep.subr.mxu0 0.0
  %45 = vmatpush1.xpose.msra.mxu0 0.0
  %46 = vmatprep.subr.mxu0 0.0
  %47 = vmatpush1.xpose.msra.mxu0 0.0
  %48 = vmatprep.subr.mxu0 0.0
  %49 = vmatpush1.xpose.msra.mxu0 0.0
  %50 = vmatprep.subr.mxu0 0.0
  %51 = vmatpush1.xpose.msra.mxu0 0.0
  %52 = vmatprep.subr.mxu0 0.0
  %53 = vmatpush1.xpose.msra.mxu0 0.0
  %54 = vmatprep.subr.mxu0 0.0
  %55 = vmatpush1.xpose.msra.mxu0 0.0
  %56 = vmatprep.subr.mxu0 0.0
  %57 = vmatpush1.xpose.msra.mxu0 0.0
  %58 = vmatprep.subr.mxu0 0.0
  %59 = vmatpush1.xpose.msra.mxu0 0.0
  %60 = vmatprep.subr.mxu0 0.0
  %61 = vmatpush1.xpose.msra.mxu0 %v28
  %62 = vmatprep.subr.mxu0 0.0
  %63 = vmatpush2.xpose.msra.mxu0 0.0
  %64 = vmatprep.subr.mxu0 0.0
  %65 = vmatpush2.xpose.msra.mxu0 0.0
  %66 = vmatprep.subr.mxu0 0.0
  %67 = vmatpush2.xpose.msra.mxu0 0.0
  %68 = vmatprep.subr.mxu0 0.0
  %69 = vmatpush2.xpose.msra.mxu0 0.0
  %70 = vmatprep.subr.mxu0 0.0
  %71 = vmatpush2.xpose.msra.mxu0 0.0
  %72 = vmatprep.subr.mxu0 0.0
  %73 = vmatpush2.xpose.msra.mxu0 0.0
  %74 = vmatprep.subr.mxu0 0.0
  %75 = vmatpush2.xpose.msra.mxu0 0.0
  %76 = vmatprep.subr.mxu0 0.0
  %77 = vmatpush2.xpose.msra.mxu0 0.0
  %78 = vmatprep.subr.mxu0 0.0
  %79 = vmatpush2.xpose.msra.mxu0 0.0
  %80 = vmatprep.subr.mxu0 0.0
  %81 = vmatpush2.xpose.msra.mxu0 0.0
  %82 = vmatprep.subr.mxu0 0.0
  %83 = vmatpush2.xpose.msra.mxu0 0.0
  %84 = vmatprep.subr.mxu0 0.0
  %85 = vmatpush2.xpose.msra.mxu0 0.0
  %86 = vmatprep.subr.mxu0 0.0
  %87 = vmatpush2.xpose.msra.mxu0 0.0
  %88 = vmatprep.subr.mxu0 0.0
  %89 = vmatpush2.xpose.msra.mxu0 0.0
  %90 = vmatprep.subr.mxu0 0.0
  %91 = vmatpush2.xpose.msra.mxu0 0.0
  %92 = vmatprep.subr.mxu0 0.0
  %93 = vmatpush2.xpose.msra.mxu0 0.0
  %94 = vmatprep.mubr.f32.mxu0 0.0
  %95 = vmatmul.mubr.f32.gmra.mxu0 %v25
  %v96 = vpop.f32.mrf.mxu0
  %v97 = vadd.f32 %v21, %v96
  %v98 = vpop.f32.mrf.mxu0
  %99 = vdwg.mxu0
  %v101 = vsel %vm23, %v18, 0
  %v104 = vsel %vm23, %v20, 0
  %106 = vmatprep.subr.mxu0 0.0
  %107 = vmatpush1.xpose.msra.mxu0 0.0
  %108 = vmatprep.subr.mxu0 0.0
  %109 = vmatpush1.xpose.msra.mxu0 0.0
  %110 = vmatprep.subr.mxu0 0.0
  %111 = vmatpush1.xpose.msra.mxu0 0.0
  %112 = vmatprep.subr.mxu0 0.0
  %113 = vmatpush1.xpose.msra.mxu0 0.0
  %114 = vmatprep.subr.mxu0 0.0
  %115 = vmatpush1.xpose.msra.mxu0 0.0
  %116 = vmatprep.subr.mxu0 0.0
  %117 = vmatpush1.xpose.msra.mxu0 0.0
  %118 = vmatprep.subr.mxu0 0.0
  %119 = vmatpush1.xpose.msra.mxu0 0.0
  %120 = vmatprep.subr.mxu0 0.0
  %121 = vmatpush1.xpose.msra.mxu0 0.0
  %122 = vmatprep.subr.mxu0 0.0
  %123 = vmatpush1.xpose.msra.mxu0 0.0
  %124 = vmatprep.subr.mxu0 0.0
  %125 = vmatpush1.xpose.msra.mxu0 0.0
  %126 = vmatprep.subr.mxu0 0.0
  %127 = vmatpush1.xpose.msra.mxu0 0.0
  %128 = vmatprep.subr.mxu0 0.0
  %129 = vmatpush1.xpose.msra.mxu0 0.0
  %130 = vmatprep.subr.mxu0 0.0
  %131 = vmatpush1.xpose.msra.mxu0 0.0
  %132 = vmatprep.subr.mxu0 0.0
  %133 = vmatpush1.xpose.msra.mxu0 0.0
  %134 = vmatprep.subr.mxu0 0.0
  %135 = vmatpush1.xpose.msra.mxu0 0.0
  %136 = vmatprep.subr.mxu0 0.0
  %137 = vmatpush1.xpose.msra.mxu0 %v104
  %138 = vmatprep.subr.mxu0 0.0
  %139 = vmatpush2.xpose.msra.mxu0 0.0
  %140 = vmatprep.subr.mxu0 0.0
  %141 = vmatpush2.xpose.msra.mxu0 0.0
  %142 = vmatprep.subr.mxu0 0.0
  %143 = vmatpush2.xpose.msra.mxu0 0.0
  %144 = vmatprep.subr.mxu0 0.0
  %145 = vmatpush2.xpose.msra.mxu0 0.0
  %146 = vmatprep.subr.mxu0 0.0
  %147 = vmatpush2.xpose.msra.mxu0 0.0
  %148 = vmatprep.subr.mxu0 0.0
  %149 = vmatpush2.xpose.msra.mxu0 0.0
  %150 = vmatprep.subr.mxu0 0.0
  %151 = vmatpush2.xpose.msra.mxu0 0.0
  %152 = vmatprep.subr.mxu0 0.0
  %153 = vmatpush2.xpose.msra.mxu0 0.0
  %154 = vmatprep.subr.mxu0 0.0
  %155 = vmatpush2.xpose.msra.mxu0 0.0
  %156 = vmatprep.subr.mxu0 0.0
  %157 = vmatpush2.xpose.msra.mxu0 0.0
  %158 = vmatprep.subr.mxu0 0.0
  %159 = vmatpush2.xpose.msra.mxu0 0.0
  %160 = vmatprep.subr.mxu0 0.0
  %161 = vmatpush2.xpose.msra.mxu0 0.0
  %162 = vmatprep.subr.mxu0 0.0
  %163 = vmatpush2.xpose.msra.mxu0 0.0
  %164 = vmatprep.subr.mxu0 0.0
  %165 = vmatpush2.xpose.msra.mxu0 0.0
  %166 = vmatprep.subr.mxu0 0.0
  %167 = vmatpush2.xpose.msra.mxu0 0.0
  %168 = vmatprep.subr.mxu0 0.0
  %169 = vmatpush2.xpose.msra.mxu0 0.0
  %170 = vmatprep.mubr.f32.mxu0 0.0
  %171 = vmatmul.mubr.f32.gmra.mxu0 %v101
  %v172 = vpop.f32.mrf.mxu0
  %v173 = vadd.f32 %v22, %v172
  %v174 = vpop.f32.mrf.mxu0
  %175 = vdwg.mxu0
  %v176 = vld [vmem:[%s3] sm:$0xff]
  %v177 = vld [vmem:[%s3 + $0x8] sm:$0xff]
  %vm178 = vcmp.gt.f32.partialorder %v176, 0.5
  %vm179 = vcmp.gt.f32.partialorder %v177, 0.5
  %v180 = vsel %vm178, -1e+08, %v97
  %v181 = vsel %vm179, -1e+08, %v173
  %vm182 = vcmask 64512
  %183 = vst.msk [vmem:[%s4] sm:$0xff] %vm182, %v180
  %184 = vst.msk [vmem:[%s4 + $0x8] sm:$0xff] %vm182, %v181
  // Predicated region
  $region18: #{_forward_impl.4} parent=0 // pred_check
    _
  $region19: #{_forward_impl.4} parent=0 // pred_check_branch
    %186 = sbr.rel (0) target = $region21
  $region20: #{_forward_impl.4} parent=0 // pred_region
    _
  $region21: #{_forward_impl.4} parent=0 // pred_fallthru
    _
  // Predicated region
  $region22: #{_forward_impl.4} parent=0 // pred_check
    _
  $region23: #{_forward_impl.4} parent=0 // pred_check_branch
    %188 = sbr.rel (0) target = $region25
  $region24: #{_forward_impl.4} parent=0 // pred_region
    _
  $region25: #{_forward_impl.4} parent=0 // pred_fallthru
    _

</llo_original>
